<compile_context>
chip_gen: v5e
topology: v5e:2x2
jax: 0.10.0
libtpu: 0.0.40
codegen_flags: <defaults>
</compile_context>

<pallas_src>
import math

import jax
import jax.numpy as jnp
from jax.experimental import pallas as pl
from jax.experimental.pallas import tpu as pltpu

LANES = 128
VMEM_LIMIT = 40 * 1024 * 1024   # resident budget; safe on v7x (64 MiB VMEM)


def _round_up(n, m):
    return ((n + m - 1) // m) * m


def _pad_last(x, target):
    return jnp.pad(x, [(0, 0)] * (x.ndim - 1) + [(0, target - x.shape[-1])])


def _pad_mat(w, cin_pad, cout_pad):
    """Zero-pad a (Cin, Cout) matrix to padded channel counts; cast to bf16."""
    return jnp.pad(w, ((0, cin_pad - w.shape[0]),
                       (0, cout_pad - w.shape[1]))).astype(jnp.bfloat16)


def _pad_conv(w, cin_pad, cout_pad):
    """(K, Cin, Cout) conv weight -> im2col layout (K*Cin_pad, Cout_pad) bf16."""
    K = w.shape[0]
    w = jnp.pad(w, ((0, 0), (0, cin_pad - w.shape[1]),
                    (0, cout_pad - w.shape[2])))
    return w.reshape(K * cin_pad, cout_pad).astype(jnp.bfloat16)


# --------------------------------------------------------------------------- #
# Fully-fused TCN kernel (all TemporalBlocks + decoder)                        #
# --------------------------------------------------------------------------- #
def _make_fused_kernel(meta, K, L, pad_align, out_size):
    """meta: per-block dicts {dil, pad, cin, cmid, cout, has_down} (padded C)."""

    def kernel(*refs):
        it = iter(refs)
        x_ref = next(it)
        blk_refs = []
        for m in meta:
            n = 6 if m["has_down"] else 4
            blk_refs.append(tuple(next(it) for _ in range(n)))
        dec_w_ref = next(it)
        dec_b_ref = next(it)
        o_ref = next(it)
        buf_x = next(it)
        buf_h = next(it)

        c_max = buf_x.shape[1]
        zeros_top = jnp.zeros((pad_align, c_max), buf_x.dtype)
        # Causal left-padding rows shared by every block (rows above a block's
        # own pad are simply never read). Implements padding + Chomp1d.
        buf_x[0:pad_align, :] = zeros_top
        buf_h[0:pad_align, :] = zeros_top

        # Stage the embedded input (emb-dropout is identity in eval mode).
        c0 = x_ref.shape[-1]
        buf_x[pad_align:, :c0] = x_ref[...]

        for m, wr in zip(meta, blk_refs):
            dil, pad = m["dil"], m["pad"]
            cin, cmid, cout = m["cin"], m["cmid"], m["cout"]
            if m["has_down"]:
                w1, b1, w2, b2, wd, bd = wr
            else:
                w1, b1, w2, b2 = wr
                wd = bd = None
            start = pad_align - pad          # static, >= 0 by construction

            # ---- conv1 (causal, dilated) as ONE im2col matmul, then ReLU
            cols = jnp.concatenate(
                [buf_x[start + k * dil: start + k * dil + L, :cin]
                 for k in range(K)], axis=1)                  # (L, K*cin) bf16
            h = jnp.dot(cols, w1[...], preferred_element_type=jnp.float32)
            h = jnp.maximum(h + b1[...], 0.0)
            # TODO(synk): dropout1/dropout2 are identity (eval-mode forward).
            buf_h[pad_align:, :cmid] = h.astype(buf_h.dtype)

            # ---- conv2 (causal, dilated) as ONE im2col matmul, then ReLU
            cols = jnp.concatenate(
                [buf_h[start + k * dil: start + k * dil + L, :cmid]
                 for k in range(K)], axis=1)                  # (L, K*cmid) bf16
            out = jnp.dot(cols, w2[...], preferred_element_type=jnp.float32)
            out = jnp.maximum(out + b2[...], 0.0)

            # ---- residual (identity or 1x1 downsample conv) + final ReLU
            x_cur = buf_x[pad_align:, :cin]
            if m["has_down"]:
                res = jnp.dot(x_cur, wd[...],
                              preferred_element_type=jnp.float32) + bd[...]
            else:
                res = x_cur.astype(jnp.float32)
            y = jnp.maximum(out + res, 0.0)
            buf_x[pad_align:, :cout] = y.astype(buf_x.dtype)

        # ---- decoder (Linear), fused; emit exactly out_size lanes so no
        #      post-hoc HBM slice/copy is needed.
        y = buf_x[pad_align:, :meta[-1]["cout"]]
        logits = jnp.dot(y, dec_w_ref[...],
                         preferred_element_type=jnp.float32) + dec_b_ref[...]
        o_ref[...] = logits[:, :out_size].astype(o_ref.dtype)

    return kernel


def tcn_forward(tokens, params, output_size, *, kernel_size):
    """TCN.forward: token ids (B, L) int32 -> logits (B, L, output_size) f32."""
    # TODO(synk): the token-id embedding gather is data-dependent -> plain JAX.
    x = jnp.take(params["emb"], tokens, axis=0)          # (B, L, C0_pad) bf16
    B, L, c0 = x.shape
    assert L % 8 == 0, L
    K = kernel_size

    blocks = params["blocks"]
    meta, c_in, pad_max = [], c0, 0
    for i, blk in enumerate(blocks):
        dil = 2 ** i
        pad = (K - 1) * dil
        pad_max = max(pad_max, pad)
        cmid = blk["w1"].shape[1]
        cout = blk["w2"].shape[1]
        meta.append(dict(dil=dil, pad=pad, cin=c_in, cmid=cmid, cout=cout,
                         has_down="wd" in blk))
        c_in = cout
    pad_align = max(8, _round_up(pad_max, 8))     # 8-row aligned zero prefix
    c_max = max([c0] + [m["cmid"] for m in meta] + [m["cout"] for m in meta])
    c_last = meta[-1]["cout"]
    v_pad = params["dec_w"].shape[1]

    in_specs = [pl.BlockSpec((None, L, c0), lambda b: (b, 0, 0))]
    operands = [x]
    for blk, m in zip(blocks, meta):
        in_specs += [
            pl.BlockSpec((K * m["cin"], m["cmid"]), lambda b: (0, 0)),
            pl.BlockSpec((1, m["cmid"]), lambda b: (0, 0)),
            pl.BlockSpec((K * m["cmid"], m["cout"]), lambda b: (0, 0)),
            pl.BlockSpec((1, m["cout"]), lambda b: (0, 0)),
        ]
        operands += [blk["w1"], blk["b1"], blk["w2"], blk["b2"]]
        if m["has_down"]:
            in_specs += [pl.BlockSpec((m["cin"], m["cout"]), lambda b: (0, 0)),
                         pl.BlockSpec((1, m["cout"]), lambda b: (0, 0))]
            operands += [blk["wd"], blk["bd"]]
    in_specs += [pl.BlockSpec((c_last, v_pad), lambda b: (0, 0)),
                 pl.BlockSpec((1, v_pad), lambda b: (0, 0))]
    operands += [params["dec_w"], params["dec_b"]]

    kernel = _make_fused_kernel(meta, K, L, pad_align, output_size)

    return pl.pallas_call(
        kernel,
        out_shape=jax.ShapeDtypeStruct((B, L, output_size), jnp.float32),
        grid=(B,),
        in_specs=in_specs,
        out_specs=pl.BlockSpec((None, L, output_size), lambda b: (b, 0, 0)),
        scratch_shapes=[pltpu.VMEM((pad_align + L, c_max), x.dtype),
                        pltpu.VMEM((pad_align + L, c_max), x.dtype)],
        compiler_params=pltpu.CompilerParams(
            dimension_semantics=("parallel",),
            vmem_limit_bytes=VMEM_LIMIT),
    )(*operands)


# --------------------------------------------------------------------------- #
# Parameter init (weight_norm folded into effective weights)                   #
# --------------------------------------------------------------------------- #
def init_params(key, input_size, output_size, num_channels, kernel_size):
    K = kernel_size
    keys = iter(jax.random.split(key, 6 * len(num_channels) + 4))

    def nrm(shape, std):
        return std * jax.random.normal(next(keys), shape, jnp.float32)

    c_in, c_in_pad = input_size, _round_up(input_size, LANES)

    # nn.Embedding(output_size, input_size): weight ~ N(0, 0.01); pad emb dim.
    emb = _pad_last(nrm((output_size, c_in), 0.01), c_in_pad).astype(jnp.bfloat16)

    blocks = []
    for c_out in num_channels:
        c_out_pad = _round_up(c_out, LANES)
        std = math.sqrt(2.0 / (c_out * K))   # kaiming_normal_(fan_out, relu)
        blk = {
            "w1": _pad_conv(nrm((K, c_in, c_out), std), c_in_pad, c_out_pad),
            "b1": _pad_last(nrm((1, c_out), 0.01), c_out_pad),
            "w2": _pad_conv(nrm((K, c_out, c_out), std), c_out_pad, c_out_pad),
            "b2": _pad_last(nrm((1, c_out), 0.01), c_out_pad),
        }
        if c_in != c_out:                    # 1x1 downsample conv
            blk["wd"] = _pad_mat(nrm((c_in, c_out), math.sqrt(2.0 / c_out)),
                                 c_in_pad, c_out_pad)
            blk["bd"] = _pad_last(nrm((1, c_out), 0.01), c_out_pad)
        blocks.append(blk)
        c_in, c_in_pad = c_out, c_out_pad

    v_pad = _round_up(output_size, LANES)
    dec_w = _pad_mat(nrm((c_in, output_size), 0.01), c_in_pad, v_pad)
    dec_b = jnp.zeros((1, v_pad), jnp.float32)

    return {"emb": emb, "blocks": blocks, "dec_w": dec_w, "dec_b": dec_b}


if __name__ == "__main__":
    key = jax.random.PRNGKey(0)
    k_tok, k_par = jax.random.split(key)

    B, L = 2, 128
    input_size = 32          # embedding dim (emsize)
    output_size = 32         # vocab size
    num_channels = [16, 16]  # block0: 32->16 (1x1 downsample), block1: identity
    kernel_size = 3

    tokens = jax.random.randint(k_tok, (B, L), 0, output_size, dtype=jnp.int32)
    params = init_params(k_par, input_size, output_size, num_channels,
                         kernel_size)

    logits = tcn_forward(tokens, params, output_size, kernel_size=kernel_size)
    jax.block_until_ready(logits)
    assert logits.shape == (B, L, output_size), logits.shape
    assert bool(jnp.all(jnp.isfinite(logits)))
    print("KERNEL_OK")
</pallas_src>

<mosaic_0001>
module attributes {stable_mosaic.version = 11 : i64} {
  func.func @kernel(%arg0: i32, %arg1: memref<1x128x128xbf16, #tpu.memory_space<vmem>>, %arg2: memref<384x128xbf16, #tpu.memory_space<vmem>>, %arg3: memref<1x128xf32, #tpu.memory_space<vmem>>, %arg4: memref<384x128xbf16, #tpu.memory_space<vmem>>, %arg5: memref<1x128xf32, #tpu.memory_space<vmem>>, %arg6: memref<128x128xbf16, #tpu.memory_space<vmem>>, %arg7: memref<1x128xf32, #tpu.memory_space<vmem>>, %arg8: memref<384x128xbf16, #tpu.memory_space<vmem>>, %arg9: memref<1x128xf32, #tpu.memory_space<vmem>>, %arg10: memref<384x128xbf16, #tpu.memory_space<vmem>>, %arg11: memref<1x128xf32, #tpu.memory_space<vmem>>, %arg12: memref<128x128xbf16, #tpu.memory_space<vmem>>, %arg13: memref<1x128xf32, #tpu.memory_space<vmem>>, %arg14: memref<1x128x32xf32, #tpu.memory_space<vmem>>, %arg15: memref<136x128xbf16, #tpu.memory_space<vmem>>, %arg16: memref<136x128xbf16, #tpu.memory_space<vmem>>) attributes {dimension_semantics = [#tpu.dimension_semantics<parallel>], iteration_bounds = array<i64: 2>, scalar_prefetch = 0 : i64, scratch_operands = 2 : i64, tpu.core_type = #tpu.core_type<tc>, window_params = [{transform_indices = @transform_0, window_bounds = array<i64: 1, 128, 128>}, {pipeline_mode = #tpu.pipeline_mode<synchronous>, transform_indices = @transform_1, window_bounds = array<i64: 384, 128>}, {pipeline_mode = #tpu.pipeline_mode<synchronous>, transform_indices = @transform_2, window_bounds = array<i64: 1, 128>}, {pipeline_mode = #tpu.pipeline_mode<synchronous>, transform_indices = @transform_3, window_bounds = array<i64: 384, 128>}, {pipeline_mode = #tpu.pipeline_mode<synchronous>, transform_indices = @transform_4, window_bounds = array<i64: 1, 128>}, {pipeline_mode = #tpu.pipeline_mode<synchronous>, transform_indices = @transform_5, window_bounds = array<i64: 128, 128>}, {pipeline_mode = #tpu.pipeline_mode<synchronous>, transform_indices = @transform_6, window_bounds = array<i64: 1, 128>}, {pipeline_mode = #tpu.pipeline_mode<synchronous>, transform_indices = @transform_7, window_bounds = array<i64: 384, 128>}, {pipeline_mode = #tpu.pipeline_mode<synchronous>, transform_indices = @transform_8, window_bounds = array<i64: 1, 128>}, {pipeline_mode = #tpu.pipeline_mode<synchronous>, transform_indices = @transform_9, window_bounds = array<i64: 384, 128>}, {pipeline_mode = #tpu.pipeline_mode<synchronous>, transform_indices = @transform_10, window_bounds = array<i64: 1, 128>}, {pipeline_mode = #tpu.pipeline_mode<synchronous>, transform_indices = @transform_11, window_bounds = array<i64: 128, 128>}, {pipeline_mode = #tpu.pipeline_mode<synchronous>, transform_indices = @transform_12, window_bounds = array<i64: 1, 128>}, {transform_indices = @transform_13, window_bounds = array<i64: 1, 128, 32>}]} {
    %cst = arith.constant 0.000000e+00 : bf16
    %0 = vector.broadcast %cst : bf16 to vector<8x128xbf16>
    %c0 = arith.constant 0 : index
    %c0_0 = arith.constant 0 : index
    %1 = vector.load %arg15[%c0, %c0_0] : memref<136x128xbf16, #tpu.memory_space<vmem>>, vector<8x128xbf16>
    tpu.vector_store %arg15[%c0, %c0_0], %0 {strides = array<i32>} : memref<136x128xbf16, #tpu.memory_space<vmem>>, vector<8x128xbf16>,
    %c0_1 = arith.constant 0 : index
    %c0_2 = arith.constant 0 : index
    %2 = vector.load %arg16[%c0_1, %c0_2] : memref<136x128xbf16, #tpu.memory_space<vmem>>, vector<8x128xbf16>
    tpu.vector_store %arg16[%c0_1, %c0_2], %0 {strides = array<i32>} : memref<136x128xbf16, #tpu.memory_space<vmem>>, vector<8x128xbf16>,
    %c0_3 = arith.constant 0 : index
    %c0_4 = arith.constant 0 : index
    %c0_5 = arith.constant 0 : index
    %3 = vector.load %arg1[%c0_3, %c0_4, %c0_5] : memref<1x128x128xbf16, #tpu.memory_space<vmem>>, vector<1x128x128xbf16>
    %4 = vector.shape_cast %3 : vector<1x128x128xbf16> to vector<128x128xbf16>
    %c8 = arith.constant 8 : index
    %c0_6 = arith.constant 0 : index
    %5 = vector.load %arg15[%c8, %c0_6] : memref<136x128xbf16, #tpu.memory_space<vmem>>, vector<128x128xbf16>
    tpu.vector_store %arg15[%c8, %c0_6], %4 {strides = array<i32>} : memref<136x128xbf16, #tpu.memory_space<vmem>>, vector<128x128xbf16>,
    %c6 = arith.constant 6 : index
    %c0_7 = arith.constant 0 : index
    %6 = vector.load %arg15[%c6, %c0_7] : memref<136x128xbf16, #tpu.memory_space<vmem>>, vector<128x128xbf16>
    %c7 = arith.constant 7 : index
    %c0_8 = arith.constant 0 : index
    %7 = vector.load %arg15[%c7, %c0_8] : memref<136x128xbf16, #tpu.memory_space<vmem>>, vector<128x128xbf16>
    %c8_9 = arith.constant 8 : index
    %c0_10 = arith.constant 0 : index
    %8 = vector.load %arg15[%c8_9, %c0_10] : memref<136x128xbf16, #tpu.memory_space<vmem>>, vector<128x128xbf16>
    %9 = tpu.concatenate %6, %7, %8 in 1 : vector<128x128xbf16>, vector<128x128xbf16>, vector<128x128xbf16> -> vector<128x384xbf16>
    %c0_11 = arith.constant 0 : index
    %c0_12 = arith.constant 0 : index
    %10 = vector.load %arg2[%c0_11, %c0_12] : memref<384x128xbf16, #tpu.memory_space<vmem>>, vector<384x128xbf16>
    %cst_13 = arith.constant dense<0.000000e+00> : vector<128x128xf32>
    %11 = tpu.matmul %9, %10, %cst_13 {dimension_numbers = #tpu.dot_dimension_numbers<[1], [0], [0], [1], [0, 0, 1, 1], [], []>} : vector<128x384xbf16>, vector<384x128xbf16>, vector<128x128xf32> -> vector<128x128xf32>
    %c0_14 = arith.constant 0 : index
    %c0_15 = arith.constant 0 : index
    %12 = vector.load %arg3[%c0_14, %c0_15] : memref<1x128xf32, #tpu.memory_space<vmem>>, vector<1x128xf32>
    %13 = vector.broadcast %12 : vector<1x128xf32> to vector<128x128xf32>
    %14 = arith.addf %11, %13 : vector<128x128xf32>
    %cst_16 = arith.constant 0.000000e+00 : f32
    %15 = vector.broadcast %cst_16 : f32 to vector<128x128xf32>
    %16 = arith.maximumf %14, %15 : vector<128x128xf32>
    %17 = arith.truncf %16 : vector<128x128xf32> to vector<128x128xbf16>
    %c8_17 = arith.constant 8 : index
    %c0_18 = arith.constant 0 : index
    %18 = vector.load %arg16[%c8_17, %c0_18] : memref<136x128xbf16, #tpu.memory_space<vmem>>, vector<128x128xbf16>
    tpu.vector_store %arg16[%c8_17, %c0_18], %17 {strides = array<i32>} : memref<136x128xbf16, #tpu.memory_space<vmem>>, vector<128x128xbf16>,
    %c6_19 = arith.constant 6 : index
    %c0_20 = arith.constant 0 : index
    %19 = vector.load %arg16[%c6_19, %c0_20] : memref<136x128xbf16, #tpu.memory_space<vmem>>, vector<128x128xbf16>
    %c7_21 = arith.constant 7 : index
    %c0_22 = arith.constant 0 : index
    %20 = vector.load %arg16[%c7_21, %c0_22] : memref<136x128xbf16, #tpu.memory_space<vmem>>, vector<128x128xbf16>
    %c8_23 = arith.constant 8 : index
    %c0_24 = arith.constant 0 : index
    %21 = vector.load %arg16[%c8_23, %c0_24] : memref<136x128xbf16, #tpu.memory_space<vmem>>, vector<128x128xbf16>
    %22 = tpu.concatenate %19, %20, %21 in 1 : vector<128x128xbf16>, vector<128x128xbf16>, vector<128x128xbf16> -> vector<128x384xbf16>
    %c0_25 = arith.constant 0 : index
    %c0_26 = arith.constant 0 : index
    %23 = vector.load %arg4[%c0_25, %c0_26] : memref<384x128xbf16, #tpu.memory_space<vmem>>, vector<384x128xbf16>
    %cst_27 = arith.constant dense<0.000000e+00> : vector<128x128xf32>
    %24 = tpu.matmul %22, %23, %cst_27 {dimension_numbers = #tpu.dot_dimension_numbers<[1], [0], [0], [1], [0, 0, 1, 1], [], []>} : vector<128x384xbf16>, vector<384x128xbf16>, vector<128x128xf32> -> vector<128x128xf32>
    %c0_28 = arith.constant 0 : index
    %c0_29 = arith.constant 0 : index
    %25 = vector.load %arg5[%c0_28, %c0_29] : memref<1x128xf32, #tpu.memory_space<vmem>>, vector<1x128xf32>
    %26 = vector.broadcast %25 : vector<1x128xf32> to vector<128x128xf32>
    %27 = arith.addf %24, %26 : vector<128x128xf32>
    %cst_30 = arith.constant 0.000000e+00 : f32
    %28 = vector.broadcast %cst_30 : f32 to vector<128x128xf32>
    %29 = arith.maximumf %27, %28 : vector<128x128xf32>
    %c8_31 = arith.constant 8 : index
    %c0_32 = arith.constant 0 : index
    %30 = vector.load %arg15[%c8_31, %c0_32] : memref<136x128xbf16, #tpu.memory_space<vmem>>, vector<128x128xbf16>
    %c0_33 = arith.constant 0 : index
    %c0_34 = arith.constant 0 : index
    %31 = vector.load %arg6[%c0_33, %c0_34] : memref<128x128xbf16, #tpu.memory_space<vmem>>, vector<128x128xbf16>
    %cst_35 = arith.constant dense<0.000000e+00> : vector<128x128xf32>
    %32 = tpu.matmul %30, %31, %cst_35 {dimension_numbers = #tpu.dot_dimension_numbers<[1], [0], [0], [1], [0, 0, 1, 1], [], []>} : vector<128x128xbf16>, vector<128x128xbf16>, vector<128x128xf32> -> vector<128x128xf32>
    %c0_36 = arith.constant 0 : index
    %c0_37 = arith.constant 0 : index
    %33 = vector.load %arg7[%c0_36, %c0_37] : memref<1x128xf32, #tpu.memory_space<vmem>>, vector<1x128xf32>
    %34 = vector.broadcast %33 : vector<1x128xf32> to vector<128x128xf32>
    %35 = arith.addf %32, %34 : vector<128x128xf32>
    %36 = arith.addf %29, %35 : vector<128x128xf32>
    %cst_38 = arith.constant 0.000000e+00 : f32
    %37 = vector.broadcast %cst_38 : f32 to vector<128x128xf32>
    %38 = arith.maximumf %36, %37 : vector<128x128xf32>
    %39 = arith.truncf %38 : vector<128x128xf32> to vector<128x128xbf16>
    %c8_39 = arith.constant 8 : index
    %c0_40 = arith.constant 0 : index
    %40 = vector.load %arg15[%c8_39, %c0_40] : memref<136x128xbf16, #tpu.memory_space<vmem>>, vector<128x128xbf16>
    tpu.vector_store %arg15[%c8_39, %c0_40], %39 {strides = array<i32>} : memref<136x128xbf16, #tpu.memory_space<vmem>>, vector<128x128xbf16>,
    %c4 = arith.constant 4 : index
    %c0_41 = arith.constant 0 : index
    %41 = vector.load %arg15[%c4, %c0_41] : memref<136x128xbf16, #tpu.memory_space<vmem>>, vector<128x128xbf16>
    %c6_42 = arith.constant 6 : index
    %c0_43 = arith.constant 0 : index
    %42 = vector.load %arg15[%c6_42, %c0_43] : memref<136x128xbf16, #tpu.memory_space<vmem>>, vector<128x128xbf16>
    %c8_44 = arith.constant 8 : index
    %c0_45 = arith.constant 0 : index
    %43 = vector.load %arg15[%c8_44, %c0_45] : memref<136x128xbf16, #tpu.memory_space<vmem>>, vector<128x128xbf16>
    %44 = tpu.concatenate %41, %42, %43 in 1 : vector<128x128xbf16>, vector<128x128xbf16>, vector<128x128xbf16> -> vector<128x384xbf16>
    %c0_46 = arith.constant 0 : index
    %c0_47 = arith.constant 0 : index
    %45 = vector.load %arg8[%c0_46, %c0_47] : memref<384x128xbf16, #tpu.memory_space<vmem>>, vector<384x128xbf16>
    %cst_48 = arith.constant dense<0.000000e+00> : vector<128x128xf32>
    %46 = tpu.matmul %44, %45, %cst_48 {dimension_numbers = #tpu.dot_dimension_numbers<[1], [0], [0], [1], [0, 0, 1, 1], [], []>} : vector<128x384xbf16>, vector<384x128xbf16>, vector<128x128xf32> -> vector<128x128xf32>
    %c0_49 = arith.constant 0 : index
    %c0_50 = arith.constant 0 : index
    %47 = vector.load %arg9[%c0_49, %c0_50] : memref<1x128xf32, #tpu.memory_space<vmem>>, vector<1x128xf32>
    %48 = vector.broadcast %47 : vector<1x128xf32> to vector<128x128xf32>
    %49 = arith.addf %46, %48 : vector<128x128xf32>
    %cst_51 = arith.constant 0.000000e+00 : f32
    %50 = vector.broadcast %cst_51 : f32 to vector<128x128xf32>
    %51 = arith.maximumf %49, %50 : vector<128x128xf32>
    %52 = arith.truncf %51 : vector<128x128xf32> to vector<128x128xbf16>
    %c8_52 = arith.constant 8 : index
    %c0_53 = arith.constant 0 : index
    %53 = vector.load %arg16[%c8_52, %c0_53] : memref<136x128xbf16, #tpu.memory_space<vmem>>, vector<128x128xbf16>
    tpu.vector_store %arg16[%c8_52, %c0_53], %52 {strides = array<i32>} : memref<136x128xbf16, #tpu.memory_space<vmem>>, vector<128x128xbf16>,
    %c4_54 = arith.constant 4 : index
    %c0_55 = arith.constant 0 : index
    %54 = vector.load %arg16[%c4_54, %c0_55] : memref<136x128xbf16, #tpu.memory_space<vmem>>, vector<128x128xbf16>
    %c6_56 = arith.constant 6 : index
    %c0_57 = arith.constant 0 : index
    %55 = vector.load %arg16[%c6_56, %c0_57] : memref<136x128xbf16, #tpu.memory_space<vmem>>, vector<128x128xbf16>
    %c8_58 = arith.constant 8 : index
    %c0_59 = arith.constant 0 : index
    %56 = vector.load %arg16[%c8_58, %c0_59] : memref<136x128xbf16, #tpu.memory_space<vmem>>, vector<128x128xbf16>
    %57 = tpu.concatenate %54, %55, %56 in 1 : vector<128x128xbf16>, vector<128x128xbf16>, vector<128x128xbf16> -> vector<128x384xbf16>
    %c0_60 = arith.constant 0 : index
    %c0_61 = arith.constant 0 : index
    %58 = vector.load %arg10[%c0_60, %c0_61] : memref<384x128xbf16, #tpu.memory_space<vmem>>, vector<384x128xbf16>
    %cst_62 = arith.constant dense<0.000000e+00> : vector<128x128xf32>
    %59 = tpu.matmul %57, %58, %cst_62 {dimension_numbers = #tpu.dot_dimension_numbers<[1], [0], [0], [1], [0, 0, 1, 1], [], []>} : vector<128x384xbf16>, vector<384x128xbf16>, vector<128x128xf32> -> vector<128x128xf32>
    %c0_63 = arith.constant 0 : index
    %c0_64 = arith.constant 0 : index
    %60 = vector.load %arg11[%c0_63, %c0_64] : memref<1x128xf32, #tpu.memory_space<vmem>>, vector<1x128xf32>
    %61 = vector.broadcast %60 : vector<1x128xf32> to vector<128x128xf32>
    %62 = arith.addf %59, %61 : vector<128x128xf32>
    %cst_65 = arith.constant 0.000000e+00 : f32
    %63 = vector.broadcast %cst_65 : f32 to vector<128x128xf32>
    %64 = arith.maximumf %62, %63 : vector<128x128xf32>
    %c8_66 = arith.constant 8 : index
    %c0_67 = arith.constant 0 : index
    %65 = vector.load %arg15[%c8_66, %c0_67] : memref<136x128xbf16, #tpu.memory_space<vmem>>, vector<128x128xbf16>
    %66 = arith.extf %65 : vector<128x128xbf16> to vector<128x128xf32>
    %67 = arith.addf %64, %66 : vector<128x128xf32>
    %cst_68 = arith.constant 0.000000e+00 : f32
    %68 = vector.broadcast %cst_68 : f32 to vector<128x128xf32>
    %69 = arith.maximumf %67, %68 : vector<128x128xf32>
    %70 = arith.truncf %69 : vector<128x128xf32> to vector<128x128xbf16>
    %c8_69 = arith.constant 8 : index
    %c0_70 = arith.constant 0 : index
    %71 = vector.load %arg15[%c8_69, %c0_70] : memref<136x128xbf16, #tpu.memory_space<vmem>>, vector<128x128xbf16>
    tpu.vector_store %arg15[%c8_69, %c0_70], %70 {strides = array<i32>} : memref<136x128xbf16, #tpu.memory_space<vmem>>, vector<128x128xbf16>,
    %c8_71 = arith.constant 8 : index
    %c0_72 = arith.constant 0 : index
    %72 = vector.load %arg15[%c8_71, %c0_72] : memref<136x128xbf16, #tpu.memory_space<vmem>>, vector<128x128xbf16>
    %c0_73 = arith.constant 0 : index
    %c0_74 = arith.constant 0 : index
    %73 = vector.load %arg12[%c0_73, %c0_74] : memref<128x128xbf16, #tpu.memory_space<vmem>>, vector<128x128xbf16>
    %cst_75 = arith.constant dense<0.000000e+00> : vector<128x128xf32>
    %74 = tpu.matmul %72, %73, %cst_75 {dimension_numbers = #tpu.dot_dimension_numbers<[1], [0], [0], [1], [0, 0, 1, 1], [], []>} : vector<128x128xbf16>, vector<128x128xbf16>, vector<128x128xf32> -> vector<128x128xf32>
    %c0_76 = arith.constant 0 : index
    %c0_77 = arith.constant 0 : index
    %75 = vector.load %arg13[%c0_76, %c0_77] : memref<1x128xf32, #tpu.memory_space<vmem>>, vector<1x128xf32>
    %76 = vector.broadcast %75 : vector<1x128xf32> to vector<128x128xf32>
    %77 = arith.addf %74, %76 : vector<128x128xf32>
    %78 = vector.extract_strided_slice %77 {offsets = [0, 0], sizes = [128, 32], strides = [1, 1]} : vector<128x128xf32> to vector<128x32xf32>
    %c0_78 = arith.constant 0 : index
    %c0_79 = arith.constant 0 : index
    %c0_80 = arith.constant 0 : index
    %79 = vector.load %arg14[%c0_78, %c0_79, %c0_80] : memref<1x128x32xf32, #tpu.memory_space<vmem>>, vector<1x128x32xf32>
    %80 = vector.shape_cast %79 : vector<1x128x32xf32> to vector<128x32xf32>
    %81 = vector.shape_cast %78 : vector<128x32xf32> to vector<1x128x32xf32>
    tpu.vector_store %arg14[%c0_78, %c0_79, %c0_80], %81 {strides = array<i32>} : memref<1x128x32xf32, #tpu.memory_space<vmem>>, vector<1x128x32xf32>,
    return
  }
  func.func @transform_0(%arg0: i32) -> (i32, i32, i32) {
    %c0_i32 = arith.constant 0 : i32
    %c0_i32_0 = arith.constant 0 : i32
    %c0_i32_1 = arith.constant 0 : i32
    return %arg0, %c0_i32, %c0_i32_0 : i32, i32, i32
  }
  func.func @transform_1(%arg0: i32) -> (i32, i32) {
    %c0_i32 = arith.constant 0 : i32
    %c0_i32_0 = arith.constant 0 : i32
    %c0_i32_1 = arith.constant 0 : i32
    return %c0_i32, %c0_i32_0 : i32, i32
  }
  func.func @transform_2(%arg0: i32) -> (i32, i32) {
    %c0_i32 = arith.constant 0 : i32
    %c0_i32_0 = arith.constant 0 : i32
    %c0_i32_1 = arith.constant 0 : i32
    return %c0_i32, %c0_i32_0 : i32, i32
  }
  func.func @transform_3(%arg0: i32) -> (i32, i32) {
    %c0_i32 = arith.constant 0 : i32
    %c0_i32_0 = arith.constant 0 : i32
    %c0_i32_1 = arith.constant 0 : i32
    return %c0_i32, %c0_i32_0 : i32, i32
  }
  func.func @transform_4(%arg0: i32) -> (i32, i32) {
    %c0_i32 = arith.constant 0 : i32
    %c0_i32_0 = arith.constant 0 : i32
    %c0_i32_1 = arith.constant 0 : i32
    return %c0_i32, %c0_i32_0 : i32, i32
  }
  func.func @transform_5(%arg0: i32) -> (i32, i32) {
    %c0_i32 = arith.constant 0 : i32
    %c0_i32_0 = arith.constant 0 : i32
    %c0_i32_1 = arith.constant 0 : i32
    return %c0_i32, %c0_i32_0 : i32, i32
  }
  func.func @transform_6(%arg0: i32) -> (i32, i32) {
    %c0_i32 = arith.constant 0 : i32
    %c0_i32_0 = arith.constant 0 : i32
    %c0_i32_1 = arith.constant 0 : i32
    return %c0_i32, %c0_i32_0 : i32, i32
  }
  func.func @transform_7(%arg0: i32) -> (i32, i32) {
    %c0_i32 = arith.constant 0 : i32
    %c0_i32_0 = arith.constant 0 : i32
    %c0_i32_1 = arith.constant 0 : i32
    return %c0_i32, %c0_i32_0 : i32, i32
  }
  func.func @transform_8(%arg0: i32) -> (i32, i32) {
    %c0_i32 = arith.constant 0 : i32
    %c0_i32_0 = arith.constant 0 : i32
    %c0_i32_1 = arith.constant 0 : i32
    return %c0_i32, %c0_i32_0 : i32, i32
  }
  func.func @transform_9(%arg0: i32) -> (i32, i32) {
    %c0_i32 = arith.constant 0 : i32
    %c0_i32_0 = arith.constant 0 : i32
    %c0_i32_1 = arith.constant 0 : i32
    return %c0_i32, %c0_i32_0 : i32, i32
  }
  func.func @transform_10(%arg0: i32) -> (i32, i32) {
    %c0_i32 = arith.constant 0 : i32
    %c0_i32_0 = arith.constant 0 : i32
    %c0_i32_1 = arith.constant 0 : i32
    return %c0_i32, %c0_i32_0 : i32, i32
  }
  func.func @transform_11(%arg0: i32) -> (i32, i32) {
    %c0_i32 = arith.constant 0 : i32
    %c0_i32_0 = arith.constant 0 : i32
    %c0_i32_1 = arith.constant 0 : i32
    return %c0_i32, %c0_i32_0 : i32, i32
  }
  func.func @transform_12(%arg0: i32) -> (i32, i32) {
    %c0_i32 = arith.constant 0 : i32
    %c0_i32_0 = arith.constant 0 : i32
    %c0_i32_1 = arith.constant 0 : i32
    return %c0_i32, %c0_i32_0 : i32, i32
  }
  func.func @transform_13(%arg0: i32) -> (i32, i32, i32) {
    %c0_i32 = arith.constant 0 : i32
    %c0_i32_0 = arith.constant 0 : i32
    %c0_i32_1 = arith.constant 0 : i32
    return %arg0, %c0_i32, %c0_i32_0 : i32, i32, i32
  }
}

</mosaic_0001>

<llo_original>
// kernel: tpu_custom_call.1
$region0: #{tpu_custom_call.1}
  #allocation0 [shape = 'u32[]', space=smem, size = 0x4, offset = 0x4, fixed_abs, tag = 'smem constant byte address 0x4 - core index']
  #allocation1 [shape = 'u32[72,128]{1,0:T(1,128)}', space=vmem, size = 0x9000, scoped, tag = 'internal scratch']
  #allocation2 [shape = 'bf16[136,128]{1,0:T(8,128)(2,1)}', space=vmem, size = 0x8800, scoped, tag = 'scratch operand']
  #allocation3 [shape = 'bf16[136,128]{1,0:T(8,128)(2,1)}', space=vmem, size = 0x8800, scoped, tag = 'scratch operand']
  %s0 = inlined_call_operand.hbm [shape: bf16[2,128,128], index: 0, kind: input, shape index: {}]
  %s1 = inlined_call_operand.hbm [shape: bf16[384,128], index: 1, kind: input, shape index: {}]
  %s2 = inlined_call_operand.vmem [shape: f32[1,128], index: 2, kind: input, shape index: {}]
  %s3 = inlined_call_operand.hbm [shape: bf16[384,128], index: 3, kind: input, shape index: {}]
  %s4 = inlined_call_operand.vmem [shape: f32[1,128], index: 4, kind: input, shape index: {}]
  %s5 = inlined_call_operand.hbm [shape: bf16[128,128], index: 5, kind: input, shape index: {}]
  %s6 = inlined_call_operand.vmem [shape: f32[1,128], index: 6, kind: input, shape index: {}]
  %s7 = inlined_call_operand.hbm [shape: bf16[384,128], index: 7, kind: input, shape index: {}]
  %s8 = inlined_call_operand.vmem [shape: f32[1,128], index: 8, kind: input, shape index: {}]
  %s9 = inlined_call_operand.hbm [shape: bf16[384,128], index: 9, kind: input, shape index: {}]
  %s10 = inlined_call_operand.vmem [shape: f32[1,128], index: 10, kind: input, shape index: {}]
  %s11 = inlined_call_operand.hbm [shape: bf16[128,128], index: 11, kind: input, shape index: {}]
  %s12 = inlined_call_operand.vmem [shape: f32[1,128], index: 12, kind: input, shape index: {}]
  %s13 = inlined_call_operand.vmem [shape: f32[2,128,32], index: 13, kind: output, shape index: {}]
  %s14 = sld [smem:[#allocation0]]
  $region113: #{tpu_custom_call.1} parent=0
    _
  %s16 = ssub.s32 1, %s14
  %s17 = scalar_select 0, %s16, %s14
  $region1: #{tpu_custom_call.1} parent=0
    #allocation4 [shape = 'u8[65536]{0}', space=vmem, size = 0x10000, scoped, tag = 'input window, operand 0']
    #allocation5 [shape = 's32[2]{0}', space=sflag, size = 0x8, scoped, tag = 'scoped memory for tpu_custom_call.1']
    #allocation6 [shape = 'u8[98304]{0}', space=vmem, size = 0x18000, scoped, tag = 'input window, operand 1, single buffered']
    #allocation7 [shape = 's32[1]{0}', space=sflag, size = 0x4, scoped, tag = 'scoped memory for tpu_custom_call.1']
    #allocation8 [shape = 'u8[98304]{0}', space=vmem, size = 0x18000, scoped, tag = 'input window, operand 3, single buffered']
    #allocation9 [shape = 'u8[32768]{0}', space=vmem, size = 0x8000, scoped, tag = 'input window, operand 5, single buffered']
    #allocation10 [shape = 's32[1]{0}', space=sflag, size = 0x4, scoped, tag = 'scoped memory for tpu_custom_call.1']
    #allocation11 [shape = 'u8[98304]{0}', space=vmem, size = 0x18000, scoped, tag = 'input window, operand 7, single buffered']
    #allocation12 [shape = 'u8[98304]{0}', space=vmem, size = 0x18000, scoped, tag = 'input window, operand 9, single buffered']
    #allocation13 [shape = 's32[1]{0}', space=sflag, size = 0x4, scoped, tag = 'scoped memory for tpu_custom_call.1']
    #allocation14 [shape = 'u8[32768]{0}', space=vmem, size = 0x8000, scoped, tag = 'input window, operand 11, single buffered']
    %18 = vsyncpa [#allocation5], 0
    %s19 = scalar_lea.sflag [#allocation5], 1
    %20 = vsyncpa %s19, 0
    %21 = vsyncpa [#allocation7], 0
    %22 = vsyncpa [#allocation10], 0
    %23 = vsyncpa [#allocation13], 0
    loop: start=0, step=1, limit=4
    $region2: #{tpu_custom_call.1} parent=1 // loop_pre_header
      _
    $region3: #{tpu_custom_call.1} parent=1 // loop_header
      %s25 = sphi 0, %s29
      %p26 = scmp.ge.s32.totalorder %s25, 4
      %s35 = sphi 0, %s37
      %s38 = sphi 0, %s35
      %s39 = sphi 0, %s38
      %s55 = sphi 0, %s39
      %s59 = sphi 0, %s59
      %s61 = sphi 0, %s59
      %s62 = sphi 0, %s61
      %s76 = sphi 0, %s62
      %s80 = sphi 0, %s80
      %s82 = sphi 0, %s80
      %s83 = sphi 0, %s82
      %s97 = sphi 0, %s83
      %s101 = sphi 0, %s101
      %s103 = sphi 0, %s101
      %s104 = sphi 0, %s103
      %s118 = sphi 0, %s104
      %s122 = sphi 0, %s122
      %s124 = sphi 0, %s122
      %s125 = sphi 0, %s124
      %s139 = sphi 0, %s125
      %s143 = sphi 0, %s143
      %s145 = sphi 0, %s143
      %s146 = sphi 0, %s145
      %s160 = sphi 0, %s146
      %s164 = sphi 0, %s164
      %s166 = sphi 0, %s164
      %s167 = sphi 0, %s166
      %s181 = sphi 0, %s167
      %s185 = sphi 0, %s185
      %s187 = sphi 0, %s185
      %s188 = sphi 0, %s187
      %s202 = sphi 0, %s188
      %s206 = sphi 0, %s206
      %s208 = sphi 0, %s206
      %s209 = sphi 0, %s208
      %s223 = sphi 0, %s209
      %s227 = sphi 0, %s227
      %s229 = sphi 0, %s227
      %s230 = sphi 0, %s229
      %s244 = sphi 0, %s230
      %s248 = sphi 0, %s248
      %s250 = sphi 0, %s248
      %s251 = sphi 0, %s250
      %s265 = sphi 0, %s251
      %s269 = sphi 0, %s269
      %s271 = sphi 0, %s269
      %s272 = sphi 0, %s271
      %s286 = sphi 0, %s272
      %s290 = sphi 0, %s290
      %s292 = sphi 0, %s290
      %s293 = sphi 0, %s292
      %s307 = sphi 0, %s293
      %s313 = sphi 0, %s315
      %s316 = sphi 0, %s313
      %s317 = sphi 0, %s316
      %s333 = sphi 0, %s317
    $region4: #{tpu_custom_call.1} parent=1 // loop_header_branch
      %28 = sbr.rel (%p26) target = $region8
    $region5: #{tpu_custom_call.1} parent=1 // loop_body
      %s30 = ssub.s32 %s25, 1
      %s31 = ssub.s32 %s25, 2
      %s32 = sadd.s32 %s25, 1
      %s33 = ssub.s32 %s25, %s32
      %p34 = scmp.eq.s32.totalorder %s33, 0
      %s36 = sadd.s32 %s35, 1
      %s37 = scalar_select %p34, %s35, %s36
      %p40 = pneg %p34
      %p41 = scmp.eq.s32.totalorder %s25, 1
      %p42 = por %p40, %p41
      %p43 = scmp.ne.s32.totalorder %s35, %s38
      %p44 = scmp.eq.s32.totalorder %s25, 0
      %p45 = por %p43, %p44
      %p46 = scmp.ne.s32.totalorder %s35, %s38
      %p47 = scmp.eq.s32.totalorder %s30, 1
      %p48 = por %p46, %p47
      %p49 = scmp.ne.s32.totalorder %s38, %s39
      %p50 = scmp.eq.s32.totalorder %s30, 0
      %p51 = por %p49, %p50
      %p52 = scmp.ne.s32.totalorder %s38, %s39
      %p53 = scmp.eq.s32.totalorder %s31, 1
      %p54 = por %p52, %p53
      %p56 = scmp.ne.s32.totalorder %s39, %s55
      %p57 = scmp.eq.s32.totalorder %s31, 0
      %p58 = por %p56, %p57
      %s60 = sadd.s32 %s59, 1
      %p63 = scmp.eq.s32.totalorder %s25, 1
      %p64 = scmp.ne.s32.totalorder %s59, %s61
      %p65 = scmp.eq.s32.totalorder %s25, 0
      %p66 = por %p64, %p65
      %p67 = scmp.ne.s32.totalorder %s59, %s61
      %p68 = scmp.eq.s32.totalorder %s30, 1
      %p69 = por %p67, %p68
      %p70 = scmp.ne.s32.totalorder %s61, %s62
      %p71 = scmp.eq.s32.totalorder %s30, 0
      %p72 = por %p70, %p71
      %p73 = scmp.ne.s32.totalorder %s61, %s62
      %p74 = scmp.eq.s32.totalorder %s31, 1
      %p75 = por %p73, %p74
      %p77 = scmp.ne.s32.totalorder %s62, %s76
      %p78 = scmp.eq.s32.totalorder %s31, 0
      %p79 = por %p77, %p78
      %s81 = sadd.s32 %s80, 1
      %p84 = scmp.eq.s32.totalorder %s25, 1
      %p85 = scmp.ne.s32.totalorder %s80, %s82
      %p86 = scmp.eq.s32.totalorder %s25, 0
      %p87 = por %p85, %p86
      %p88 = scmp.ne.s32.totalorder %s80, %s82
      %p89 = scmp.eq.s32.totalorder %s30, 1
      %p90 = por %p88, %p89
      %p91 = scmp.ne.s32.totalorder %s82, %s83
      %p92 = scmp.eq.s32.totalorder %s30, 0
      %p93 = por %p91, %p92
      %p94 = scmp.ne.s32.totalorder %s82, %s83
      %p95 = scmp.eq.s32.totalorder %s31, 1
      %p96 = por %p94, %p95
      %p98 = scmp.ne.s32.totalorder %s83, %s97
      %p99 = scmp.eq.s32.totalorder %s31, 0
      %p100 = por %p98, %p99
      %s102 = sadd.s32 %s101, 1
      %p105 = scmp.eq.s32.totalorder %s25, 1
      %p106 = scmp.ne.s32.totalorder %s101, %s103
      %p107 = scmp.eq.s32.totalorder %s25, 0
      %p108 = por %p106, %p107
      %p109 = scmp.ne.s32.totalorder %s101, %s103
      %p110 = scmp.eq.s32.totalorder %s30, 1
      %p111 = por %p109, %p110
      %p112 = scmp.ne.s32.totalorder %s103, %s104
      %p113 = scmp.eq.s32.totalorder %s30, 0
      %p114 = por %p112, %p113
      %p115 = scmp.ne.s32.totalorder %s103, %s104
      %p116 = scmp.eq.s32.totalorder %s31, 1
      %p117 = por %p115, %p116
      %p119 = scmp.ne.s32.totalorder %s104, %s118
      %p120 = scmp.eq.s32.totalorder %s31, 0
      %p121 = por %p119, %p120
      %s123 = sadd.s32 %s122, 1
      %p126 = scmp.eq.s32.totalorder %s25, 1
      %p127 = scmp.ne.s32.totalorder %s122, %s124
      %p128 = scmp.eq.s32.totalorder %s25, 0
      %p129 = por %p127, %p128
      %p130 = scmp.ne.s32.totalorder %s122, %s124
      %p131 = scmp.eq.s32.totalorder %s30, 1
      %p132 = por %p130, %p131
      %p133 = scmp.ne.s32.totalorder %s124, %s125
      %p134 = scmp.eq.s32.totalorder %s30, 0
      %p135 = por %p133, %p134
      %p136 = scmp.ne.s32.totalorder %s124, %s125
      %p137 = scmp.eq.s32.totalorder %s31, 1
      %p138 = por %p136, %p137
      %p140 = scmp.ne.s32.totalorder %s125, %s139
      %p141 = scmp.eq.s32.totalorder %s31, 0
      %p142 = por %p140, %p141
      %s144 = sadd.s32 %s143, 1
      %p147 = scmp.eq.s32.totalorder %s25, 1
      %p148 = scmp.ne.s32.totalorder %s143, %s145
      %p149 = scmp.eq.s32.totalorder %s25, 0
      %p150 = por %p148, %p149
      %p151 = scmp.ne.s32.totalorder %s143, %s145
      %p152 = scmp.eq.s32.totalorder %s30, 1
      %p153 = por %p151, %p152
      %p154 = scmp.ne.s32.totalorder %s145, %s146
      %p155 = scmp.eq.s32.totalorder %s30, 0
      %p156 = por %p154, %p155
      %p157 = scmp.ne.s32.totalorder %s145, %s146
      %p158 = scmp.eq.s32.totalorder %s31, 1
      %p159 = por %p157, %p158
      %p161 = scmp.ne.s32.totalorder %s146, %s160
      %p162 = scmp.eq.s32.totalorder %s31, 0
      %p163 = por %p161, %p162
      %s165 = sadd.s32 %s164, 1
      %p168 = scmp.eq.s32.totalorder %s25, 1
      %p169 = scmp.ne.s32.totalorder %s164, %s166
      %p170 = scmp.eq.s32.totalorder %s25, 0
      %p171 = por %p169, %p170
      %p172 = scmp.ne.s32.totalorder %s164, %s166
      %p173 = scmp.eq.s32.totalorder %s30, 1
      %p174 = por %p172, %p173
      %p175 = scmp.ne.s32.totalorder %s166, %s167
      %p176 = scmp.eq.s32.totalorder %s30, 0
      %p177 = por %p175, %p176
      %p178 = scmp.ne.s32.totalorder %s166, %s167
      %p179 = scmp.eq.s32.totalorder %s31, 1
      %p180 = por %p178, %p179
      %p182 = scmp.ne.s32.totalorder %s167, %s181
      %p183 = scmp.eq.s32.totalorder %s31, 0
      %p184 = por %p182, %p183
      %s186 = sadd.s32 %s185, 1
      %p189 = scmp.eq.s32.totalorder %s25, 1
      %p190 = scmp.ne.s32.totalorder %s185, %s187
      %p191 = scmp.eq.s32.totalorder %s25, 0
      %p192 = por %p190, %p191
      %p193 = scmp.ne.s32.totalorder %s185, %s187
      %p194 = scmp.eq.s32.totalorder %s30, 1
      %p195 = por %p193, %p194
      %p196 = scmp.ne.s32.totalorder %s187, %s188
      %p197 = scmp.eq.s32.totalorder %s30, 0
      %p198 = por %p196, %p197
      %p199 = scmp.ne.s32.totalorder %s187, %s188
      %p200 = scmp.eq.s32.totalorder %s31, 1
      %p201 = por %p199, %p200
      %p203 = scmp.ne.s32.totalorder %s188, %s202
      %p204 = scmp.eq.s32.totalorder %s31, 0
      %p205 = por %p203, %p204
      %s207 = sadd.s32 %s206, 1
      %p210 = scmp.eq.s32.totalorder %s25, 1
      %p211 = scmp.ne.s32.totalorder %s206, %s208
      %p212 = scmp.eq.s32.totalorder %s25, 0
      %p213 = por %p211, %p212
      %p214 = scmp.ne.s32.totalorder %s206, %s208
      %p215 = scmp.eq.s32.totalorder %s30, 1
      %p216 = por %p214, %p215
      %p217 = scmp.ne.s32.totalorder %s208, %s209
      %p218 = scmp.eq.s32.totalorder %s30, 0
      %p219 = por %p217, %p218
      %p220 = scmp.ne.s32.totalorder %s208, %s209
      %p221 = scmp.eq.s32.totalorder %s31, 1
      %p222 = por %p220, %p221
      %p224 = scmp.ne.s32.totalorder %s209, %s223
      %p225 = scmp.eq.s32.totalorder %s31, 0
      %p226 = por %p224, %p225
      %s228 = sadd.s32 %s227, 1
      %p231 = scmp.eq.s32.totalorder %s25, 1
      %p232 = scmp.ne.s32.totalorder %s227, %s229
      %p233 = scmp.eq.s32.totalorder %s25, 0
      %p234 = por %p232, %p233
      %p235 = scmp.ne.s32.totalorder %s227, %s229
      %p236 = scmp.eq.s32.totalorder %s30, 1
      %p237 = por %p235, %p236
      %p238 = scmp.ne.s32.totalorder %s229, %s230
      %p239 = scmp.eq.s32.totalorder %s30, 0
      %p240 = por %p238, %p239
      %p241 = scmp.ne.s32.totalorder %s229, %s230
      %p242 = scmp.eq.s32.totalorder %s31, 1
      %p243 = por %p241, %p242
      %p245 = scmp.ne.s32.totalorder %s230, %s244
      %p246 = scmp.eq.s32.totalorder %s31, 0
      %p247 = por %p245, %p246
      %s249 = sadd.s32 %s248, 1
      %p252 = scmp.eq.s32.totalorder %s25, 1
      %p253 = scmp.ne.s32.totalorder %s248, %s250
      %p254 = scmp.eq.s32.totalorder %s25, 0
      %p255 = por %p253, %p254
      %p256 = scmp.ne.s32.totalorder %s248, %s250
      %p257 = scmp.eq.s32.totalorder %s30, 1
      %p258 = por %p256, %p257
      %p259 = scmp.ne.s32.totalorder %s250, %s251
      %p260 = scmp.eq.s32.totalorder %s30, 0
      %p261 = por %p259, %p260
      %p262 = scmp.ne.s32.totalorder %s250, %s251
      %p263 = scmp.eq.s32.totalorder %s31, 1
      %p264 = por %p262, %p263
      %p266 = scmp.ne.s32.totalorder %s251, %s265
      %p267 = scmp.eq.s32.totalorder %s31, 0
      %p268 = por %p266, %p267
      %s270 = sadd.s32 %s269, 1
      %p273 = scmp.eq.s32.totalorder %s25, 1
      %p274 = scmp.ne.s32.totalorder %s269, %s271
      %p275 = scmp.eq.s32.totalorder %s25, 0
      %p276 = por %p274, %p275
      %p277 = scmp.ne.s32.totalorder %s269, %s271
      %p278 = scmp.eq.s32.totalorder %s30, 1
      %p279 = por %p277, %p278
      %p280 = scmp.ne.s32.totalorder %s271, %s272
      %p281 = scmp.eq.s32.totalorder %s30, 0
      %p282 = por %p280, %p281
      %p283 = scmp.ne.s32.totalorder %s271, %s272
      %p284 = scmp.eq.s32.totalorder %s31, 1
      %p285 = por %p283, %p284
      %p287 = scmp.ne.s32.totalorder %s272, %s286
      %p288 = scmp.eq.s32.totalorder %s31, 0
      %p289 = por %p287, %p288
      %s291 = sadd.s32 %s290, 1
      %p294 = scmp.eq.s32.totalorder %s25, 1
      %p295 = scmp.ne.s32.totalorder %s290, %s292
      %p296 = scmp.eq.s32.totalorder %s25, 0
      %p297 = por %p295, %p296
      %p298 = scmp.ne.s32.totalorder %s290, %s292
      %p299 = scmp.eq.s32.totalorder %s30, 1
      %p300 = por %p298, %p299
      %p301 = scmp.ne.s32.totalorder %s292, %s293
      %p302 = scmp.eq.s32.totalorder %s30, 0
      %p303 = por %p301, %p302
      %p304 = scmp.ne.s32.totalorder %s292, %s293
      %p305 = scmp.eq.s32.totalorder %s31, 1
      %p306 = por %p304, %p305
      %p308 = scmp.ne.s32.totalorder %s293, %s307
      %p309 = scmp.eq.s32.totalorder %s31, 0
      %p310 = por %p308, %p309
      %s311 = ssub.s32 %s25, %s32
      %p312 = scmp.eq.s32.totalorder %s311, 0
      %s314 = sadd.s32 %s313, 1
      %s315 = scalar_select %p312, %s313, %s314
      %p318 = pneg %p312
      %p319 = scmp.eq.s32.totalorder %s25, 1
      %p320 = por %p318, %p319
      %p321 = scmp.ne.s32.totalorder %s313, %s316
      %p322 = scmp.eq.s32.totalorder %s25, 0
      %p323 = por %p321, %p322
      %p324 = scmp.ne.s32.totalorder %s313, %s316
      %p325 = scmp.eq.s32.totalorder %s30, 1
      %p326 = por %p324, %p325
      %p327 = scmp.ne.s32.totalorder %s316, %s317
      %p328 = scmp.eq.s32.totalorder %s30, 0
      %p329 = por %p327, %p328
      %p330 = scmp.ne.s32.totalorder %s316, %s317
      %p331 = scmp.eq.s32.totalorder %s31, 1
      %p332 = por %p330, %p331
      %p334 = scmp.ne.s32.totalorder %s317, %s333
      %p335 = scmp.eq.s32.totalorder %s31, 0
      %p336 = por %p334, %p335
      %p337 = scmp.le.s32.totalorder 1, %s25
      %p338 = scmp.lt.s32.totalorder %s25, 3
      %p339 = pnand %p337, %p338
      %p340 = pneg %p339
      // Predicated region
      $region9: #{tpu_custom_call.1} parent=5 // pred_check
        _
      $region10: #{tpu_custom_call.1} parent=5 // pred_check_branch
        %342 = sbr.rel (%p339) target = $region12
      $region11: #{tpu_custom_call.1} parent=5 // pred_region
        %s343 = ssub.s32 %s25, 1
        // Predicated region
        $region13: #{tpu_custom_call.1} parent=11 // pred_check
          %p344 = pneg %p72
        $region14: #{tpu_custom_call.1} parent=11 // pred_check_branch
          %346 = sbr.rel (%p344) target = $region16
        $region15: #{tpu_custom_call.1} parent=11 // pred_region
          %348 = vsyncadd [#allocation7], 0
          %s349 = sshll.u32 %s1, 4
          %s350 = int_to_ptr.hbm [resolvable:$true] %s349
          %s351 = sshll.u32 [#allocation6], 4
          %s352 = int_to_ptr.vmem [resolvable:$true] %s351
          %357 = dma.hbm_to_vmem [thread:$0]  %s350, 3072, %s352, [#allocation7], 64, 64, 4
        $region16: #{tpu_custom_call.1} parent=11 // pred_fallthru
          _
        // Predicated region
        $region17: #{tpu_custom_call.1} parent=11 // pred_check
          %p358 = pneg %p93
        $region18: #{tpu_custom_call.1} parent=11 // pred_check_branch
          %360 = sbr.rel (%p358) target = $region20
        $region19: #{tpu_custom_call.1} parent=11 // pred_region
          _
        $region20: #{tpu_custom_call.1} parent=11 // pred_fallthru
          _
        // Predicated region
        $region21: #{tpu_custom_call.1} parent=11 // pred_check
          %p361 = pneg %p114
        $region22: #{tpu_custom_call.1} parent=11 // pred_check_branch
          %363 = sbr.rel (%p361) target = $region24
        $region23: #{tpu_custom_call.1} parent=11 // pred_region
          %365 = vsyncadd [#allocation7], 0
          %s366 = sshll.u32 %s3, 4
          %s367 = int_to_ptr.hbm [resolvable:$true] %s366
          %s368 = sshll.u32 [#allocation8], 4
          %s369 = int_to_ptr.vmem [resolvable:$true] %s368
          %374 = dma.hbm_to_vmem [thread:$0]  %s367, 3072, %s369, [#allocation7], 64, 64, 4
        $region24: #{tpu_custom_call.1} parent=11 // pred_fallthru
          _
        // Predicated region
        $region25: #{tpu_custom_call.1} parent=11 // pred_check
          %p375 = pneg %p135
        $region26: #{tpu_custom_call.1} parent=11 // pred_check_branch
          %377 = sbr.rel (%p375) target = $region28
        $region27: #{tpu_custom_call.1} parent=11 // pred_region
          _
        $region28: #{tpu_custom_call.1} parent=11 // pred_fallthru
          _
        // Predicated region
        $region29: #{tpu_custom_call.1} parent=11 // pred_check
          %p378 = pneg %p156
        $region30: #{tpu_custom_call.1} parent=11 // pred_check_branch
          %380 = sbr.rel (%p378) target = $region32
        $region31: #{tpu_custom_call.1} parent=11 // pred_region
          %382 = vsyncadd [#allocation10], 0
          %s383 = sshll.u32 %s5, 4
          %s384 = int_to_ptr.hbm [resolvable:$true] %s383
          %s385 = sshll.u32 [#allocation9], 4
          %s386 = int_to_ptr.vmem [resolvable:$true] %s385
          %391 = dma.hbm_to_vmem [thread:$0]  %s384, 1024, %s386, [#allocation10], 64, 64, 4
        $region32: #{tpu_custom_call.1} parent=11 // pred_fallthru
          _
        // Predicated region
        $region33: #{tpu_custom_call.1} parent=11 // pred_check
          %p392 = pneg %p177
        $region34: #{tpu_custom_call.1} parent=11 // pred_check_branch
          %394 = sbr.rel (%p392) target = $region36
        $region35: #{tpu_custom_call.1} parent=11 // pred_region
          _
        $region36: #{tpu_custom_call.1} parent=11 // pred_fallthru
          _
        // Predicated region
        $region37: #{tpu_custom_call.1} parent=11 // pred_check
          %p395 = pneg %p198
        $region38: #{tpu_custom_call.1} parent=11 // pred_check_branch
          %397 = sbr.rel (%p395) target = $region40
        $region39: #{tpu_custom_call.1} parent=11 // pred_region
          %399 = vsyncadd [#allocation10], 0
          %s400 = sshll.u32 %s7, 4
          %s401 = int_to_ptr.hbm [resolvable:$true] %s400
          %s402 = sshll.u32 [#allocation11], 4
          %s403 = int_to_ptr.vmem [resolvable:$true] %s402
          %408 = dma.hbm_to_vmem [thread:$0]  %s401, 3072, %s403, [#allocation10], 64, 64, 4
        $region40: #{tpu_custom_call.1} parent=11 // pred_fallthru
          _
        // Predicated region
        $region41: #{tpu_custom_call.1} parent=11 // pred_check
          %p409 = pneg %p219
        $region42: #{tpu_custom_call.1} parent=11 // pred_check_branch
          %411 = sbr.rel (%p409) target = $region44
        $region43: #{tpu_custom_call.1} parent=11 // pred_region
          _
        $region44: #{tpu_custom_call.1} parent=11 // pred_fallthru
          _
        // Predicated region
        $region45: #{tpu_custom_call.1} parent=11 // pred_check
          %p412 = pneg %p240
        $region46: #{tpu_custom_call.1} parent=11 // pred_check_branch
          %414 = sbr.rel (%p412) target = $region48
        $region47: #{tpu_custom_call.1} parent=11 // pred_region
          %416 = vsyncadd [#allocation13], 0
          %s417 = sshll.u32 %s9, 4
          %s418 = int_to_ptr.hbm [resolvable:$true] %s417
          %s419 = sshll.u32 [#allocation12], 4
          %s420 = int_to_ptr.vmem [resolvable:$true] %s419
          %425 = dma.hbm_to_vmem [thread:$0]  %s418, 3072, %s420, [#allocation13], 64, 64, 4
        $region48: #{tpu_custom_call.1} parent=11 // pred_fallthru
          _
        // Predicated region
        $region49: #{tpu_custom_call.1} parent=11 // pred_check
          %p426 = pneg %p261
        $region50: #{tpu_custom_call.1} parent=11 // pred_check_branch
          %428 = sbr.rel (%p426) target = $region52
        $region51: #{tpu_custom_call.1} parent=11 // pred_region
          _
        $region52: #{tpu_custom_call.1} parent=11 // pred_fallthru
          _
        // Predicated region
        $region53: #{tpu_custom_call.1} parent=11 // pred_check
          %p429 = pneg %p282
        $region54: #{tpu_custom_call.1} parent=11 // pred_check_branch
          %431 = sbr.rel (%p429) target = $region56
        $region55: #{tpu_custom_call.1} parent=11 // pred_region
          %433 = vsyncadd [#allocation13], 0
          %s434 = sshll.u32 %s11, 4
          %s435 = int_to_ptr.hbm [resolvable:$true] %s434
          %s436 = sshll.u32 [#allocation14], 4
          %s437 = int_to_ptr.vmem [resolvable:$true] %s436
          %442 = dma.hbm_to_vmem [thread:$0]  %s435, 1024, %s437, [#allocation13], 64, 64, 4
        $region56: #{tpu_custom_call.1} parent=11 // pred_fallthru
          _
        // Predicated region
        $region57: #{tpu_custom_call.1} parent=11 // pred_check
          %p443 = pneg %p303
        $region58: #{tpu_custom_call.1} parent=11 // pred_check_branch
          %445 = sbr.rel (%p443) target = $region60
        $region59: #{tpu_custom_call.1} parent=11 // pred_region
          _
        $region60: #{tpu_custom_call.1} parent=11 // pred_fallthru
          _
      $region12: #{tpu_custom_call.1} parent=5 // pred_fallthru
        _
      %p446 = scmp.lt.s32.totalorder %s25, 2
      // Predicated region
      $region61: #{tpu_custom_call.1} parent=5 // pred_check
        %p447 = pneg %p446
      $region62: #{tpu_custom_call.1} parent=5 // pred_check_branch
        %449 = sbr.rel (%p447) target = $region64
      $region63: #{tpu_custom_call.1} parent=5 // pred_region
        // Predicated region
        $region65: #{tpu_custom_call.1} parent=63 // pred_check
          %p450 = pneg %p45
        $region66: #{tpu_custom_call.1} parent=63 // pred_check_branch
          %452 = sbr.rel (%p450) target = $region68
        $region67: #{tpu_custom_call.1} parent=63 // pred_region
          %s453 = sand.u32 %s35, 1
          %s454 = scalar_lea.sflag [#allocation5], %s453
          %s455 = sand.u32 %s35, 1
          %s456 = smul.addr %s455, 64
          %s457 = scalar_lea.vmem [#allocation4], %s456
          %459 = vsyncadd %s454, 0
          %s460 = smul.addr %s25, 16
          %s461 = smul.addr %s460, 4
          %s462 = scalar_lea.hbm %s0, %s461
          %s463 = sshll.u32 %s462, 4
          %s464 = int_to_ptr.hbm [resolvable:$true] %s463
          %s465 = sshll.u32 %s457, 4
          %s466 = int_to_ptr.vmem [resolvable:$true] %s465
          %471 = dma.hbm_to_vmem [thread:$0]  %s464, 1024, %s466, %s454, 64, 64, 4
        $region68: #{tpu_custom_call.1} parent=63 // pred_fallthru
          _
      $region64: #{tpu_custom_call.1} parent=5 // pred_fallthru
        _
      %p472 = scmp.le.s32.totalorder 1, %s25
      %p473 = scmp.lt.s32.totalorder %s25, 3
      %p474 = pnand %p472, %p473
      %p475 = pneg %p474
      // Predicated region
      $region69: #{tpu_custom_call.1} parent=5 // pred_check
        _
      $region70: #{tpu_custom_call.1} parent=5 // pred_check_branch
        %477 = sbr.rel (%p474) target = $region72
      $region71: #{tpu_custom_call.1} parent=5 // pred_region
        %s478 = ssub.s32 %s25, 1
        %s479 = sand.u32 %s38, 1
        %s480 = scalar_lea.sflag [#allocation5], %s479
        %s481 = sand.u32 %s38, 1
        %s482 = smul.addr %s481, 64
        %s483 = scalar_lea.vmem [#allocation4], %s482
        // Predicated region
        $region73: #{tpu_custom_call.1} parent=71 // pred_check
          %p484 = pneg %p51
        $region74: #{tpu_custom_call.1} parent=71 // pred_check_branch
          %486 = sbr.rel (%p484) target = $region76
        $region75: #{tpu_custom_call.1} parent=71 // pred_region
          %488 = dma.done %s480, 1024
        $region76: #{tpu_custom_call.1} parent=71 // pred_fallthru
          _
        // Predicated region
        $region77: #{tpu_custom_call.1} parent=71 // pred_check
          %p489 = pneg %p72
        $region78: #{tpu_custom_call.1} parent=71 // pred_check_branch
          %491 = sbr.rel (%p489) target = $region80
        $region79: #{tpu_custom_call.1} parent=71 // pred_region
          %493 = dma.done [#allocation7], 3072
        $region80: #{tpu_custom_call.1} parent=71 // pred_fallthru
          _
        // Predicated region
        $region81: #{tpu_custom_call.1} parent=71 // pred_check
          %p494 = pneg %p114
        $region82: #{tpu_custom_call.1} parent=71 // pred_check_branch
          %496 = sbr.rel (%p494) target = $region84
        $region83: #{tpu_custom_call.1} parent=71 // pred_region
          %498 = dma.done [#allocation7], 3072
        $region84: #{tpu_custom_call.1} parent=71 // pred_fallthru
          _
        // Predicated region
        $region85: #{tpu_custom_call.1} parent=71 // pred_check
          %p499 = pneg %p156
        $region86: #{tpu_custom_call.1} parent=71 // pred_check_branch
          %501 = sbr.rel (%p499) target = $region88
        $region87: #{tpu_custom_call.1} parent=71 // pred_region
          %503 = dma.done [#allocation10], 1024
        $region88: #{tpu_custom_call.1} parent=71 // pred_fallthru
          _
        // Predicated region
        $region89: #{tpu_custom_call.1} parent=71 // pred_check
          %p504 = pneg %p198
        $region90: #{tpu_custom_call.1} parent=71 // pred_check_branch
          %506 = sbr.rel (%p504) target = $region92
        $region91: #{tpu_custom_call.1} parent=71 // pred_region
          %508 = dma.done [#allocation10], 3072
        $region92: #{tpu_custom_call.1} parent=71 // pred_fallthru
          _
        // Predicated region
        $region93: #{tpu_custom_call.1} parent=71 // pred_check
          %p509 = pneg %p240
        $region94: #{tpu_custom_call.1} parent=71 // pred_check_branch
          %511 = sbr.rel (%p509) target = $region96
        $region95: #{tpu_custom_call.1} parent=71 // pred_region
          %513 = dma.done [#allocation13], 3072
        $region96: #{tpu_custom_call.1} parent=71 // pred_fallthru
          _
        // Predicated region
        $region97: #{tpu_custom_call.1} parent=71 // pred_check
          %p514 = pneg %p282
        $region98: #{tpu_custom_call.1} parent=71 // pred_check_branch
          %516 = sbr.rel (%p514) target = $region100
        $region99: #{tpu_custom_call.1} parent=71 // pred_region
          %518 = dma.done [#allocation13], 1024
        $region100: #{tpu_custom_call.1} parent=71 // pred_fallthru
          _
        %s519 = sand.u32 %s38, 1
        %s520 = scalar_lea.sflag [#allocation5], %s519
        %s521 = sand.u32 %s38, 1
        %s522 = smul.addr %s521, 64
        %s523 = scalar_lea.vmem [#allocation4], %s522
        %p524 = pneg %p51
        %p525 = pneg %p48
        %p526 = pneg %p72
        %p527 = pneg %p69
        %p528 = pneg %p93
        %p529 = pneg %p90
        %p530 = pneg %p114
        %p531 = pneg %p111
        %p532 = pneg %p135
        %p533 = pneg %p132
        %p534 = pneg %p156
        %p535 = pneg %p153
        %p536 = pneg %p177
        %p537 = pneg %p174
        %p538 = pneg %p198
        %p539 = pneg %p195
        %p540 = pneg %p219
        %p541 = pneg %p216
        %p542 = pneg %p240
        %p543 = pneg %p237
        %p544 = pneg %p261
        %p545 = pneg %p258
        %p546 = pneg %p282
        %p547 = pneg %p279
        %p548 = pneg %p303
        %p549 = pneg %p300
        %p550 = pneg %p329
        %p551 = pneg %p326
        %p552 = scmp.lt.s32.totalorder %s30, 1
        %s553 = scalar_select %p552, %s30, 1
        %s554 = smul.addr %s553, 16
        %s555 = smul.addr %s554, 8
        %s556 = scalar_lea.vmem %s13, %s555
        %p557 = scmp.lt.s32.totalorder %s30, 1
        %s558 = scalar_select %p557, %s30, 1
        %s559 = smul.addr %s558, 16
        %s560 = smul.addr %s559, 8
        %s561 = scalar_lea.vmem %s13, %s560
        %563 = vst [vmem:[#allocation2] sm:$0xf] 0
        %564 = vst [vmem:[#allocation3] sm:$0xf] 0
        %v565 = vld [vmem:[%s483] sm:$0xf]
        %v566 = vld [vmem:[%s483 + $0x4] sm:$0xf]
        %v567 = vld [vmem:[%s483 + $0x8] sm:$0xf]
        %v568 = vld [vmem:[%s483 + $0xc] sm:$0xf]
        %v569 = vld [vmem:[%s483 + $0x10] sm:$0xf]
        %v570 = vld [vmem:[%s483 + $0x14] sm:$0xf]
        %v571 = vld [vmem:[%s483 + $0x18] sm:$0xf]
        %v572 = vld [vmem:[%s483 + $0x1c] sm:$0xf]
        %v573 = vld [vmem:[%s483 + $0x20] sm:$0xf]
        %v574 = vld [vmem:[%s483 + $0x24] sm:$0xf]
        %v575 = vld [vmem:[%s483 + $0x28] sm:$0xf]
        %v576 = vld [vmem:[%s483 + $0x2c] sm:$0xf]
        %v577 = vld [vmem:[%s483 + $0x30] sm:$0xf]
        %v578 = vld [vmem:[%s483 + $0x34] sm:$0xf]
        %v579 = vld [vmem:[%s483 + $0x38] sm:$0xf]
        %v580 = vld [vmem:[%s483 + $0x3c] sm:$0xf]
        %581 = vst [vmem:[#allocation2 + $0x4] sm:$0xf] %v565
        %582 = vst [vmem:[#allocation2 + $0x8] sm:$0xf] %v566
        %583 = vst [vmem:[#allocation2 + $0xc] sm:$0xf] %v567
        %584 = vst [vmem:[#allocation2 + $0x10] sm:$0xf] %v568
        %585 = vst [vmem:[#allocation2 + $0x14] sm:$0xf] %v569
        %586 = vst [vmem:[#allocation2 + $0x18] sm:$0xf] %v570
        %587 = vst [vmem:[#allocation2 + $0x1c] sm:$0xf] %v571
        %588 = vst [vmem:[#allocation2 + $0x20] sm:$0xf] %v572
        %589 = vst [vmem:[#allocation2 + $0x24] sm:$0xf] %v573
        %590 = vst [vmem:[#allocation2 + $0x28] sm:$0xf] %v574
        %591 = vst [vmem:[#allocation2 + $0x2c] sm:$0xf] %v575
        %592 = vst [vmem:[#allocation2 + $0x30] sm:$0xf] %v576
        %593 = vst [vmem:[#allocation2 + $0x34] sm:$0xf] %v577
        %594 = vst [vmem:[#allocation2 + $0x38] sm:$0xf] %v578
        %595 = vst [vmem:[#allocation2 + $0x3c] sm:$0xf] %v579
        %596 = vst [vmem:[#allocation2 + $0x40] sm:$0xf] %v580
        %v597 = vld [vmem:[#allocation2] sm:$0x8]
        %v598 = vld [vmem:[#allocation2 + $0x4] sm:$0xf]
        %v599 = vld [vmem:[#allocation2 + $0x8] sm:$0xf]
        %v600 = vld [vmem:[#allocation2 + $0xc] sm:$0xf]
        %v601 = vld [vmem:[#allocation2 + $0x10] sm:$0xf]
        %v602 = vld [vmem:[#allocation2 + $0x14] sm:$0xf]
        %v603 = vld [vmem:[#allocation2 + $0x18] sm:$0xf]
        %v604 = vld [vmem:[#allocation2 + $0x1c] sm:$0xf]
        %v605 = vld [vmem:[#allocation2 + $0x20] sm:$0xf]
        %v606 = vld [vmem:[#allocation2 + $0x24] sm:$0xf]
        %v607 = vld [vmem:[#allocation2 + $0x28] sm:$0xf]
        %v608 = vld [vmem:[#allocation2 + $0x2c] sm:$0xf]
        %v609 = vld [vmem:[#allocation2 + $0x30] sm:$0xf]
        %v610 = vld [vmem:[#allocation2 + $0x34] sm:$0xf]
        %v611 = vld [vmem:[#allocation2 + $0x38] sm:$0xf]
        %v612 = vld [vmem:[#allocation2 + $0x3c] sm:$0xf]
        %v613 = vld [vmem:[#allocation2 + $0x40] sm:$0x7]
        %v614 = vld [vmem:[#allocation2 + $0x40] sm:$0xf]
        %v632 = vunpack.c.l.b16 %v597
        %v633 = vunpack.c.l.b16 %v598
        %v634 = vunpack.c.l.b16 %v599
        %v635 = vunpack.c.l.b16 %v600
        %v636 = vunpack.c.l.b16 %v601
        %v637 = vunpack.c.l.b16 %v602
        %v638 = vunpack.c.l.b16 %v603
        %v639 = vunpack.c.l.b16 %v604
        %v640 = vunpack.c.l.b16 %v605
        %v641 = vunpack.c.l.b16 %v606
        %v642 = vunpack.c.l.b16 %v607
        %v643 = vunpack.c.l.b16 %v608
        %v644 = vunpack.c.l.b16 %v609
        %v645 = vunpack.c.l.b16 %v610
        %v646 = vunpack.c.l.b16 %v611
        %v647 = vunpack.c.l.b16 %v612
        %v648 = vunpack.c.l.b16 %v613
        %v649 = vpack.c.b16 %v633, %v632
        %v650 = vpack.c.b16 %v635, %v634
        %v651 = vpack.c.b16 %v637, %v636
        %v652 = vpack.c.b16 %v639, %v638
        %v653 = vpack.c.b16 %v641, %v640
        %v654 = vpack.c.b16 %v643, %v642
        %v655 = vpack.c.b16 %v645, %v644
        %v656 = vpack.c.b16 %v647, %v646
        %v657 = vpack.c.b16 %v648, %v648
        %v659 = vunpack.c.l.b16 %v614
        %v660 = vpack.c.b16 %v659, %v659
        %vm661 = vsmask.f32 7424
        %v663 = vshrl.u32 %v649, 16
        %v665 = vshll.u32 %v649, 16
        %v667 = vrot.slane %v665, 1
        %v668 = vor.u32 %v663, %v667
        %v670 = vshll.u32 %v650, 16
        %v672 = vrot.slane %v670, 1
        %v673 = vsel %vm661, %v668, %v672
        %v674 = vshrl.u32 %v650, 16
        %v676 = vor.u32 %v674, %v672
        %v678 = vshll.u32 %v651, 16
        %v680 = vrot.slane %v678, 1
        %v681 = vsel %vm661, %v676, %v680
        %v682 = vshrl.u32 %v651, 16
        %v684 = vor.u32 %v682, %v680
        %v686 = vshll.u32 %v652, 16
        %v688 = vrot.slane %v686, 1
        %v689 = vsel %vm661, %v684, %v688
        %v690 = vshrl.u32 %v652, 16
        %v692 = vor.u32 %v690, %v688
        %v694 = vshll.u32 %v653, 16
        %v696 = vrot.slane %v694, 1
        %v697 = vsel %vm661, %v692, %v696
        %v698 = vshrl.u32 %v653, 16
        %v700 = vor.u32 %v698, %v696
        %v702 = vshll.u32 %v654, 16
        %v704 = vrot.slane %v702, 1
        %v705 = vsel %vm661, %v700, %v704
        %v706 = vshrl.u32 %v654, 16
        %v708 = vor.u32 %v706, %v704
        %v710 = vshll.u32 %v655, 16
        %v712 = vrot.slane %v710, 1
        %v713 = vsel %vm661, %v708, %v712
        %v714 = vshrl.u32 %v655, 16
        %v716 = vor.u32 %v714, %v712
        %v718 = vshll.u32 %v656, 16
        %v720 = vrot.slane %v718, 1
        %v721 = vsel %vm661, %v716, %v720
        %v722 = vshrl.u32 %v656, 16
        %v724 = vor.u32 %v722, %v720
        %v726 = vshll.u32 %v660, 16
        %v728 = vrot.slane %v726, 1
        %v729 = vsel %vm661, %v724, %v728
        %v730 = vshrl.u32 %v660, 16
        %v732 = vor.u32 %v730, %v728
        %v733 = vpack.c.b16 %v634, %v633
        %v734 = vpack.c.b16 %v636, %v635
        %v735 = vpack.c.b16 %v638, %v637
        %v736 = vpack.c.b16 %v640, %v639
        %v737 = vpack.c.b16 %v642, %v641
        %v738 = vpack.c.b16 %v644, %v643
        %v739 = vpack.c.b16 %v646, %v645
        %v740 = vpack.c.b16 %v659, %v647
        %vm741 = vcmask 1042432
        %v742 = vrot.slane %v733, 5
        %v743 = vrot.slane %v734, 5
        %v744 = vsel %vm741, %v742, %v743
        %v745 = vrot.slane %v735, 5
        %v746 = vsel %vm741, %v743, %v745
        %v747 = vrot.slane %v736, 5
        %v748 = vsel %vm741, %v745, %v747
        %v749 = vrot.slane %v737, 5
        %v750 = vsel %vm741, %v747, %v749
        %v751 = vrot.slane %v738, 5
        %v752 = vsel %vm741, %v749, %v751
        %v753 = vrot.slane %v739, 5
        %v754 = vsel %vm741, %v751, %v753
        %v755 = vrot.slane %v740, 5
        %v756 = vsel %vm741, %v753, %v755
        %v757 = vld [vmem:[#allocation6] sm:$0xf]
        %v758 = vld [vmem:[#allocation6 + $0x4] sm:$0xf]
        %v759 = vld [vmem:[#allocation6 + $0x8] sm:$0xf]
        %v760 = vld [vmem:[#allocation6 + $0xc] sm:$0xf]
        %v761 = vld [vmem:[#allocation6 + $0x10] sm:$0xf]
        %v762 = vld [vmem:[#allocation6 + $0x14] sm:$0xf]
        %v763 = vld [vmem:[#allocation6 + $0x18] sm:$0xf]
        %v764 = vld [vmem:[#allocation6 + $0x1c] sm:$0xf]
        %v765 = vld [vmem:[#allocation6 + $0x20] sm:$0xf]
        %v766 = vld [vmem:[#allocation6 + $0x24] sm:$0xf]
        %v767 = vld [vmem:[#allocation6 + $0x28] sm:$0xf]
        %v768 = vld [vmem:[#allocation6 + $0x2c] sm:$0xf]
        %v769 = vld [vmem:[#allocation6 + $0x30] sm:$0xf]
        %v770 = vld [vmem:[#allocation6 + $0x34] sm:$0xf]
        %v771 = vld [vmem:[#allocation6 + $0x38] sm:$0xf]
        %v772 = vld [vmem:[#allocation6 + $0x3c] sm:$0xf]
        %v773 = vld [vmem:[#allocation6 + $0x40] sm:$0xf]
        %v774 = vld [vmem:[#allocation6 + $0x44] sm:$0xf]
        %v775 = vld [vmem:[#allocation6 + $0x48] sm:$0xf]
        %v776 = vld [vmem:[#allocation6 + $0x4c] sm:$0xf]
        %v777 = vld [vmem:[#allocation6 + $0x50] sm:$0xf]
        %v778 = vld [vmem:[#allocation6 + $0x54] sm:$0xf]
        %v779 = vld [vmem:[#allocation6 + $0x58] sm:$0xf]
        %v780 = vld [vmem:[#allocation6 + $0x5c] sm:$0xf]
        %v781 = vld [vmem:[#allocation6 + $0x60] sm:$0xf]
        %v782 = vld [vmem:[#allocation6 + $0x64] sm:$0xf]
        %v783 = vld [vmem:[#allocation6 + $0x68] sm:$0xf]
        %v784 = vld [vmem:[#allocation6 + $0x6c] sm:$0xf]
        %v785 = vld [vmem:[#allocation6 + $0x70] sm:$0xf]
        %v786 = vld [vmem:[#allocation6 + $0x74] sm:$0xf]
        %v787 = vld [vmem:[#allocation6 + $0x78] sm:$0xf]
        %v788 = vld [vmem:[#allocation6 + $0x7c] sm:$0xf]
        %v789 = vld [vmem:[#allocation6 + $0x80] sm:$0xf]
        %v790 = vld [vmem:[#allocation6 + $0x84] sm:$0xf]
        %v791 = vld [vmem:[#allocation6 + $0x88] sm:$0xf]
        %v792 = vld [vmem:[#allocation6 + $0x8c] sm:$0xf]
        %v793 = vld [vmem:[#allocation6 + $0x90] sm:$0xf]
        %v794 = vld [vmem:[#allocation6 + $0x94] sm:$0xf]
        %v795 = vld [vmem:[#allocation6 + $0x98] sm:$0xf]
        %v796 = vld [vmem:[#allocation6 + $0x9c] sm:$0xf]
        %v797 = vld [vmem:[#allocation6 + $0xa0] sm:$0xf]
        %v798 = vld [vmem:[#allocation6 + $0xa4] sm:$0xf]
        %v799 = vld [vmem:[#allocation6 + $0xa8] sm:$0xf]
        %v800 = vld [vmem:[#allocation6 + $0xac] sm:$0xf]
        %v801 = vld [vmem:[#allocation6 + $0xb0] sm:$0xf]
        %v802 = vld [vmem:[#allocation6 + $0xb4] sm:$0xf]
        %v803 = vld [vmem:[#allocation6 + $0xb8] sm:$0xf]
        %v804 = vld [vmem:[#allocation6 + $0xbc] sm:$0xf]
        %v805 = vld [vmem:[%s2] sm:$0x1]
        %v807 = vperm.slane %v805, 0
        %vm809 = vcmask 1044480
        %v810 = vrot.slane %v649, 3
        %v811 = vrot.slane %v650, 3
        %v812 = vsel %vm809, %v810, %v811
        %v813 = vrot.slane %v673, 3
        %v814 = vrot.slane %v681, 3
        %v815 = vsel %vm809, %v813, %v814
        %v816 = vrot.slane %v742, 3
        %v817 = vrot.slane %v744, 3
        %v818 = vsel %vm809, %v816, %v817
        %v819 = vrot.slane %v651, 3
        %v820 = vsel %vm809, %v811, %v819
        %v821 = vrot.slane %v689, 3
        %v822 = vsel %vm809, %v814, %v821
        %v823 = vrot.slane %v746, 3
        %v824 = vsel %vm809, %v817, %v823
        %v825 = vrot.slane %v652, 3
        %v826 = vsel %vm809, %v819, %v825
        %v827 = vrot.slane %v697, 3
        %v828 = vsel %vm809, %v821, %v827
        %v829 = vrot.slane %v748, 3
        %v830 = vsel %vm809, %v823, %v829
        %v831 = vrot.slane %v653, 3
        %v832 = vsel %vm809, %v825, %v831
        %v833 = vrot.slane %v705, 3
        %v834 = vsel %vm809, %v827, %v833
        %v835 = vrot.slane %v750, 3
        %v836 = vsel %vm809, %v829, %v835
        %v837 = vrot.slane %v654, 3
        %v838 = vsel %vm809, %v831, %v837
        %v839 = vrot.slane %v713, 3
        %v840 = vsel %vm809, %v833, %v839
        %v841 = vrot.slane %v752, 3
        %v842 = vsel %vm809, %v835, %v841
        %v843 = vrot.slane %v655, 3
        %v844 = vsel %vm809, %v837, %v843
        %v845 = vrot.slane %v721, 3
        %v846 = vsel %vm809, %v839, %v845
        %v847 = vrot.slane %v754, 3
        %v848 = vsel %vm809, %v841, %v847
        %v849 = vrot.slane %v656, 3
        %v850 = vsel %vm809, %v843, %v849
        %v851 = vrot.slane %v729, 3
        %v852 = vsel %vm809, %v845, %v851
        %v853 = vrot.slane %v756, 3
        %v854 = vsel %vm809, %v847, %v853
        %v855 = vrot.slane %v657, 3
        %v856 = vsel %vm809, %v849, %v855
        %v857 = vrot.slane %v732, 3
        %v858 = vsel %vm809, %v851, %v857
        %v859 = vrot.slane %v755, 3
        %v860 = vsel %vm809, %v853, %v859
        %v933 = vunpack.c.l.b16 %v757
        %v934 = vunpack.c.l.b16 %v758
        %v935 = vunpack.c.l.b16 %v759
        %v936 = vunpack.c.l.b16 %v760
        %v937 = vunpack.c.l.b16 %v761
        %v938 = vunpack.c.l.b16 %v762
        %v939 = vunpack.c.l.b16 %v763
        %v940 = vunpack.c.l.b16 %v764
        %v941 = vunpack.c.l.b16 %v765
        %v942 = vunpack.c.l.b16 %v766
        %v943 = vunpack.c.l.b16 %v767
        %v944 = vunpack.c.l.b16 %v768
        %v945 = vunpack.c.l.b16 %v769
        %v946 = vunpack.c.l.b16 %v770
        %v947 = vunpack.c.l.b16 %v771
        %v948 = vunpack.c.l.b16 %v772
        %v949 = vunpack.c.l.b16 %v773
        %v950 = vunpack.c.l.b16 %v774
        %v951 = vunpack.c.l.b16 %v775
        %v952 = vunpack.c.l.b16 %v776
        %v953 = vunpack.c.l.b16 %v777
        %v954 = vunpack.c.l.b16 %v778
        %v955 = vunpack.c.l.b16 %v779
        %v956 = vunpack.c.l.b16 %v780
        %v957 = vunpack.c.l.b16 %v781
        %v958 = vunpack.c.l.b16 %v782
        %v959 = vunpack.c.l.b16 %v783
        %v960 = vunpack.c.l.b16 %v784
        %v961 = vunpack.c.l.b16 %v785
        %v962 = vunpack.c.l.b16 %v786
        %v963 = vunpack.c.l.b16 %v787
        %v964 = vunpack.c.l.b16 %v788
        %v965 = vunpack.c.l.b16 %v789
        %v966 = vunpack.c.l.b16 %v790
        %v967 = vunpack.c.l.b16 %v791
        %v968 = vunpack.c.l.b16 %v792
        %v969 = vunpack.c.l.b16 %v793
        %v970 = vunpack.c.l.b16 %v794
        %v971 = vunpack.c.l.b16 %v795
        %v972 = vunpack.c.l.b16 %v796
        %v973 = vunpack.c.l.b16 %v797
        %v974 = vunpack.c.l.b16 %v798
        %v975 = vunpack.c.l.b16 %v799
        %v976 = vunpack.c.l.b16 %v800
        %v977 = vunpack.c.l.b16 %v801
        %v978 = vunpack.c.l.b16 %v802
        %v979 = vunpack.c.l.b16 %v803
        %v980 = vunpack.c.l.b16 %v804
        %v981 = vpack.c.b16 %v934, %v933
        %v982 = vpack.c.b16 %v936, %v935
        %v983 = vpack.c.b16 %v938, %v937
        %v984 = vpack.c.b16 %v940, %v939
        %v985 = vpack.c.b16 %v942, %v941
        %v986 = vpack.c.b16 %v944, %v943
        %v987 = vpack.c.b16 %v946, %v945
        %v988 = vpack.c.b16 %v948, %v947
        %v989 = vpack.c.b16 %v950, %v949
        %v990 = vpack.c.b16 %v952, %v951
        %v991 = vpack.c.b16 %v954, %v953
        %v992 = vpack.c.b16 %v956, %v955
        %v993 = vpack.c.b16 %v958, %v957
        %v994 = vpack.c.b16 %v960, %v959
        %v995 = vpack.c.b16 %v962, %v961
        %v996 = vpack.c.b16 %v964, %v963
        %v997 = vpack.c.b16 %v966, %v965
        %v998 = vpack.c.b16 %v968, %v967
        %v999 = vpack.c.b16 %v970, %v969
        %v1000 = vpack.c.b16 %v972, %v971
        %v1001 = vpack.c.b16 %v974, %v973
        %v1002 = vpack.c.b16 %v976, %v975
        %v1003 = vpack.c.b16 %v978, %v977
        %v1004 = vpack.c.b16 %v980, %v979
        %1029 = vmatpush.bf16.msra.mxu0 %v988
        %1030 = vmatpush.bf16.msra.mxu0 %v987
        %1031 = vmatpush.bf16.msra.mxu0 %v986
        %1032 = vmatpush.bf16.msra.mxu0 %v985
        %1033 = vmatpush.bf16.msra.mxu0 %v984
        %1034 = vmatpush.bf16.msra.mxu0 %v983
        %1035 = vmatpush.bf16.msra.mxu0 %v982
        %1036 = vmatpush.bf16.msra.mxu0 %v981
        %1037 = vmatmul.bf16.gmra.mxu0 %v812
        %v1038 = vpop.f32.mrf.mxu0
        %v1039 = vadd.f32 %v807, %v1038
        %v1040 = vpop.f32.mrf.mxu0
        %v1041 = vadd.f32 %v807, %v1040
        %1042 = vmatmul.bf16.gmra.mxu0 %v820
        %v1043 = vpop.f32.mrf.mxu0
        %v1044 = vadd.f32 %v807, %v1043
        %v1045 = vpop.f32.mrf.mxu0
        %v1046 = vadd.f32 %v807, %v1045
        %1047 = vmatmul.bf16.gmra.mxu0 %v826
        %v1048 = vpop.f32.mrf.mxu0
        %v1049 = vadd.f32 %v807, %v1048
        %v1050 = vpop.f32.mrf.mxu0
        %v1051 = vadd.f32 %v807, %v1050
        %1052 = vmatmul.bf16.gmra.mxu0 %v832
        %v1053 = vpop.f32.mrf.mxu0
        %v1054 = vadd.f32 %v807, %v1053
        %v1055 = vpop.f32.mrf.mxu0
        %v1056 = vadd.f32 %v807, %v1055
        %1057 = vmatmul.bf16.gmra.mxu0 %v838
        %v1058 = vpop.f32.mrf.mxu0
        %v1059 = vadd.f32 %v807, %v1058
        %v1060 = vpop.f32.mrf.mxu0
        %v1061 = vadd.f32 %v807, %v1060
        %1062 = vmatmul.bf16.gmra.mxu0 %v844
        %v1063 = vpop.f32.mrf.mxu0
        %v1064 = vadd.f32 %v807, %v1063
        %v1065 = vpop.f32.mrf.mxu0
        %v1066 = vadd.f32 %v807, %v1065
        %1067 = vmatmul.bf16.gmra.mxu0 %v850
        %v1068 = vpop.f32.mrf.mxu0
        %v1069 = vadd.f32 %v807, %v1068
        %v1070 = vpop.f32.mrf.mxu0
        %v1071 = vadd.f32 %v807, %v1070
        %1072 = vmatmul.bf16.gmra.mxu0 %v856
        %v1073 = vpop.f32.mrf.mxu0
        %v1074 = vadd.f32 %v807, %v1073
        %v1075 = vpop.f32.mrf.mxu0
        %v1076 = vadd.f32 %v807, %v1075
        %1077 = vdwg.mxu0
        %1078 = vmatpush.bf16.msra.mxu0 %v996
        %1079 = vmatpush.bf16.msra.mxu0 %v995
        %1080 = vmatpush.bf16.msra.mxu0 %v994
        %1081 = vmatpush.bf16.msra.mxu0 %v993
        %1082 = vmatpush.bf16.msra.mxu0 %v992
        %1083 = vmatpush.bf16.msra.mxu0 %v991
        %1084 = vmatpush.bf16.msra.mxu0 %v990
        %1085 = vmatpush.bf16.msra.mxu0 %v989
        %1086 = vmatmul.bf16.gmra.mxu0 %v815
        %v1087 = vpop.f32.mrf.mxu0
        %v1088 = vadd.f32 %v1039, %v1087
        %v1089 = vpop.f32.mrf.mxu0
        %v1090 = vadd.f32 %v1041, %v1089
        %1091 = vmatmul.bf16.gmra.mxu0 %v822
        %v1092 = vpop.f32.mrf.mxu0
        %v1093 = vadd.f32 %v1044, %v1092
        %v1094 = vpop.f32.mrf.mxu0
        %v1095 = vadd.f32 %v1046, %v1094
        %1096 = vmatmul.bf16.gmra.mxu0 %v828
        %v1097 = vpop.f32.mrf.mxu0
        %v1098 = vadd.f32 %v1049, %v1097
        %v1099 = vpop.f32.mrf.mxu0
        %v1100 = vadd.f32 %v1051, %v1099
        %1101 = vmatmul.bf16.gmra.mxu0 %v834
        %v1102 = vpop.f32.mrf.mxu0
        %v1103 = vadd.f32 %v1054, %v1102
        %v1104 = vpop.f32.mrf.mxu0
        %v1105 = vadd.f32 %v1056, %v1104
        %1106 = vmatmul.bf16.gmra.mxu0 %v840
        %v1107 = vpop.f32.mrf.mxu0
        %v1108 = vadd.f32 %v1059, %v1107
        %v1109 = vpop.f32.mrf.mxu0
        %v1110 = vadd.f32 %v1061, %v1109
        %1111 = vmatmul.bf16.gmra.mxu0 %v846
        %v1112 = vpop.f32.mrf.mxu0
        %v1113 = vadd.f32 %v1064, %v1112
        %v1114 = vpop.f32.mrf.mxu0
        %v1115 = vadd.f32 %v1066, %v1114
        %1116 = vmatmul.bf16.gmra.mxu0 %v852
        %v1117 = vpop.f32.mrf.mxu0
        %v1118 = vadd.f32 %v1069, %v1117
        %v1119 = vpop.f32.mrf.mxu0
        %v1120 = vadd.f32 %v1071, %v1119
        %1121 = vmatmul.bf16.gmra.mxu0 %v858
        %v1122 = vpop.f32.mrf.mxu0
        %v1123 = vadd.f32 %v1074, %v1122
        %v1124 = vpop.f32.mrf.mxu0
        %v1125 = vadd.f32 %v1076, %v1124
        %1126 = vdwg.mxu0
        %1127 = vmatpush.bf16.msra.mxu0 %v1004
        %1128 = vmatpush.bf16.msra.mxu0 %v1003
        %1129 = vmatpush.bf16.msra.mxu0 %v1002
        %1130 = vmatpush.bf16.msra.mxu0 %v1001
        %1131 = vmatpush.bf16.msra.mxu0 %v1000
        %1132 = vmatpush.bf16.msra.mxu0 %v999
        %1133 = vmatpush.bf16.msra.mxu0 %v998
        %1134 = vmatpush.bf16.msra.mxu0 %v997
        %1135 = vmatmul.bf16.gmra.mxu0 %v818
        %v1136 = vpop.f32.mrf.mxu0
        %v1137 = vadd.f32 %v1088, %v1136
        %v1138 = vpop.f32.mrf.mxu0
        %v1139 = vadd.f32 %v1090, %v1138
        %1140 = vmatmul.bf16.gmra.mxu0 %v824
        %v1141 = vpop.f32.mrf.mxu0
        %v1142 = vadd.f32 %v1093, %v1141
        %v1143 = vpop.f32.mrf.mxu0
        %v1144 = vadd.f32 %v1095, %v1143
        %1145 = vmatmul.bf16.gmra.mxu0 %v830
        %v1146 = vpop.f32.mrf.mxu0
        %v1147 = vadd.f32 %v1098, %v1146
        %v1148 = vpop.f32.mrf.mxu0
        %v1149 = vadd.f32 %v1100, %v1148
        %1150 = vmatmul.bf16.gmra.mxu0 %v836
        %v1151 = vpop.f32.mrf.mxu0
        %v1152 = vadd.f32 %v1103, %v1151
        %v1153 = vpop.f32.mrf.mxu0
        %v1154 = vadd.f32 %v1105, %v1153
        %1155 = vmatmul.bf16.gmra.mxu0 %v842
        %v1156 = vpop.f32.mrf.mxu0
        %v1157 = vadd.f32 %v1108, %v1156
        %v1158 = vpop.f32.mrf.mxu0
        %v1159 = vadd.f32 %v1110, %v1158
        %1160 = vmatmul.bf16.gmra.mxu0 %v848
        %v1161 = vpop.f32.mrf.mxu0
        %v1162 = vadd.f32 %v1113, %v1161
        %v1163 = vpop.f32.mrf.mxu0
        %v1164 = vadd.f32 %v1115, %v1163
        %1165 = vmatmul.bf16.gmra.mxu0 %v854
        %v1166 = vpop.f32.mrf.mxu0
        %v1167 = vadd.f32 %v1118, %v1166
        %v1168 = vpop.f32.mrf.mxu0
        %v1169 = vadd.f32 %v1120, %v1168
        %1170 = vmatmul.bf16.gmra.mxu0 %v860
        %v1171 = vpop.f32.mrf.mxu0
        %v1172 = vadd.f32 %v1123, %v1171
        %v1173 = vpop.f32.mrf.mxu0
        %v1174 = vadd.f32 %v1125, %v1173
        %1175 = vdwg.mxu0
        %v1176 = vmax.f32 %v1137, 0.0
        %v1177 = vmax.f32 %v1139, 0.0
        %v1178 = vmax.f32 %v1142, 0.0
        %v1179 = vmax.f32 %v1144, 0.0
        %v1180 = vmax.f32 %v1147, 0.0
        %v1181 = vmax.f32 %v1149, 0.0
        %v1182 = vmax.f32 %v1152, 0.0
        %v1183 = vmax.f32 %v1154, 0.0
        %v1184 = vmax.f32 %v1157, 0.0
        %v1185 = vmax.f32 %v1159, 0.0
        %v1186 = vmax.f32 %v1162, 0.0
        %v1187 = vmax.f32 %v1164, 0.0
        %v1188 = vmax.f32 %v1167, 0.0
        %v1189 = vmax.f32 %v1169, 0.0
        %v1190 = vmax.f32 %v1172, 0.0
        %v1191 = vmax.f32 %v1174, 0.0
        %v1192 = vpack.c.bf16 %v1176, %v1176
        %v1193 = vpack.c.bf16 %v1177, %v1177
        %v1194 = vpack.c.bf16 %v1178, %v1178
        %v1195 = vpack.c.bf16 %v1179, %v1179
        %v1196 = vpack.c.bf16 %v1180, %v1180
        %v1197 = vpack.c.bf16 %v1181, %v1181
        %v1198 = vpack.c.bf16 %v1182, %v1182
        %v1199 = vpack.c.bf16 %v1183, %v1183
        %v1200 = vpack.c.bf16 %v1184, %v1184
        %v1201 = vpack.c.bf16 %v1185, %v1185
        %v1202 = vpack.c.bf16 %v1186, %v1186
        %v1203 = vpack.c.bf16 %v1187, %v1187
        %v1204 = vpack.c.bf16 %v1188, %v1188
        %v1205 = vpack.c.bf16 %v1189, %v1189
        %v1206 = vpack.c.bf16 %v1190, %v1190
        %v1207 = vpack.c.bf16 %v1191, %v1191
        %1208 = vst [vmem:[#allocation3 + $0x4] sm:$0xf] %v1192
        %1209 = vst [vmem:[#allocation3 + $0x8] sm:$0xf] %v1193
        %1210 = vst [vmem:[#allocation3 + $0xc] sm:$0xf] %v1194
        %1211 = vst [vmem:[#allocation3 + $0x10] sm:$0xf] %v1195
        %1212 = vst [vmem:[#allocation3 + $0x14] sm:$0xf] %v1196
        %1213 = vst [vmem:[#allocation3 + $0x18] sm:$0xf] %v1197
        %1214 = vst [vmem:[#allocation3 + $0x1c] sm:$0xf] %v1198
        %1215 = vst [vmem:[#allocation3 + $0x20] sm:$0xf] %v1199
        %1216 = vst [vmem:[#allocation3 + $0x24] sm:$0xf] %v1200
        %1217 = vst [vmem:[#allocation3 + $0x28] sm:$0xf] %v1201
        %1218 = vst [vmem:[#allocation3 + $0x2c] sm:$0xf] %v1202
        %1219 = vst [vmem:[#allocation3 + $0x30] sm:$0xf] %v1203
        %1220 = vst [vmem:[#allocation3 + $0x34] sm:$0xf] %v1204
        %1221 = vst [vmem:[#allocation3 + $0x38] sm:$0xf] %v1205
        %1222 = vst [vmem:[#allocation3 + $0x3c] sm:$0xf] %v1206
        %1223 = vst [vmem:[#allocation3 + $0x40] sm:$0xf] %v1207
        %v1224 = vld [vmem:[#allocation3] sm:$0x8]
        %v1225 = vld [vmem:[#allocation3 + $0x4] sm:$0xf]
        %v1226 = vld [vmem:[#allocation3 + $0x8] sm:$0xf]
        %v1227 = vld [vmem:[#allocation3 + $0xc] sm:$0xf]
        %v1228 = vld [vmem:[#allocation3 + $0x10] sm:$0xf]
        %v1229 = vld [vmem:[#allocation3 + $0x14] sm:$0xf]
        %v1230 = vld [vmem:[#allocation3 + $0x18] sm:$0xf]
        %v1231 = vld [vmem:[#allocation3 + $0x1c] sm:$0xf]
        %v1232 = vld [vmem:[#allocation3 + $0x20] sm:$0xf]
        %v1233 = vld [vmem:[#allocation3 + $0x24] sm:$0xf]
        %v1234 = vld [vmem:[#allocation3 + $0x28] sm:$0xf]
        %v1235 = vld [vmem:[#allocation3 + $0x2c] sm:$0xf]
        %v1236 = vld [vmem:[#allocation3 + $0x30] sm:$0xf]
        %v1237 = vld [vmem:[#allocation3 + $0x34] sm:$0xf]
        %v1238 = vld [vmem:[#allocation3 + $0x38] sm:$0xf]
        %v1239 = vld [vmem:[#allocation3 + $0x3c] sm:$0xf]
        %v1240 = vld [vmem:[#allocation3 + $0x40] sm:$0x7]
        %v1241 = vld [vmem:[#allocation3 + $0x40] sm:$0xf]
        %v1259 = vunpack.c.l.b16 %v1224
        %v1260 = vunpack.c.l.b16 %v1225
        %v1261 = vunpack.c.l.b16 %v1226
        %v1262 = vunpack.c.l.b16 %v1227
        %v1263 = vunpack.c.l.b16 %v1228
        %v1264 = vunpack.c.l.b16 %v1229
        %v1265 = vunpack.c.l.b16 %v1230
        %v1266 = vunpack.c.l.b16 %v1231
        %v1267 = vunpack.c.l.b16 %v1232
        %v1268 = vunpack.c.l.b16 %v1233
        %v1269 = vunpack.c.l.b16 %v1234
        %v1270 = vunpack.c.l.b16 %v1235
        %v1271 = vunpack.c.l.b16 %v1236
        %v1272 = vunpack.c.l.b16 %v1237
        %v1273 = vunpack.c.l.b16 %v1238
        %v1274 = vunpack.c.l.b16 %v1239
        %v1275 = vunpack.c.l.b16 %v1240
        %v1276 = vpack.c.b16 %v1260, %v1259
        %v1277 = vpack.c.b16 %v1262, %v1261
        %v1278 = vpack.c.b16 %v1264, %v1263
        %v1279 = vpack.c.b16 %v1266, %v1265
        %v1280 = vpack.c.b16 %v1268, %v1267
        %v1281 = vpack.c.b16 %v1270, %v1269
        %v1282 = vpack.c.b16 %v1272, %v1271
        %v1283 = vpack.c.b16 %v1274, %v1273
        %v1284 = vpack.c.b16 %v1275, %v1275
        %v1286 = vunpack.c.l.b16 %v1241
        %v1287 = vpack.c.b16 %v1286, %v1286
        %v1289 = vshrl.u32 %v1276, 16
        %v1291 = vshll.u32 %v1276, 16
        %v1293 = vrot.slane %v1291, 1
        %v1294 = vor.u32 %v1289, %v1293
        %v1296 = vshll.u32 %v1277, 16
        %v1298 = vrot.slane %v1296, 1
        %v1299 = vsel %vm661, %v1294, %v1298
        %v1300 = vshrl.u32 %v1277, 16
        %v1302 = vor.u32 %v1300, %v1298
        %v1304 = vshll.u32 %v1278, 16
        %v1306 = vrot.slane %v1304, 1
        %v1307 = vsel %vm661, %v1302, %v1306
        %v1308 = vshrl.u32 %v1278, 16
        %v1310 = vor.u32 %v1308, %v1306
        %v1312 = vshll.u32 %v1279, 16
        %v1314 = vrot.slane %v1312, 1
        %v1315 = vsel %vm661, %v1310, %v1314
        %v1316 = vshrl.u32 %v1279, 16
        %v1318 = vor.u32 %v1316, %v1314
        %v1320 = vshll.u32 %v1280, 16
        %v1322 = vrot.slane %v1320, 1
        %v1323 = vsel %vm661, %v1318, %v1322
        %v1324 = vshrl.u32 %v1280, 16
        %v1326 = vor.u32 %v1324, %v1322
        %v1328 = vshll.u32 %v1281, 16
        %v1330 = vrot.slane %v1328, 1
        %v1331 = vsel %vm661, %v1326, %v1330
        %v1332 = vshrl.u32 %v1281, 16
        %v1334 = vor.u32 %v1332, %v1330
        %v1336 = vshll.u32 %v1282, 16
        %v1338 = vrot.slane %v1336, 1
        %v1339 = vsel %vm661, %v1334, %v1338
        %v1340 = vshrl.u32 %v1282, 16
        %v1342 = vor.u32 %v1340, %v1338
        %v1344 = vshll.u32 %v1283, 16
        %v1346 = vrot.slane %v1344, 1
        %v1347 = vsel %vm661, %v1342, %v1346
        %v1348 = vshrl.u32 %v1283, 16
        %v1350 = vor.u32 %v1348, %v1346
        %v1352 = vshll.u32 %v1287, 16
        %v1354 = vrot.slane %v1352, 1
        %v1355 = vsel %vm661, %v1350, %v1354
        %v1356 = vshrl.u32 %v1287, 16
        %v1358 = vor.u32 %v1356, %v1354
        %v1359 = vpack.c.b16 %v1261, %v1260
        %v1360 = vpack.c.b16 %v1263, %v1262
        %v1361 = vpack.c.b16 %v1265, %v1264
        %v1362 = vpack.c.b16 %v1267, %v1266
        %v1363 = vpack.c.b16 %v1269, %v1268
        %v1364 = vpack.c.b16 %v1271, %v1270
        %v1365 = vpack.c.b16 %v1273, %v1272
        %v1366 = vpack.c.b16 %v1286, %v1274
        %v1367 = vrot.slane %v1359, 5
        %v1368 = vrot.slane %v1360, 5
        %v1369 = vsel %vm741, %v1367, %v1368
        %v1370 = vrot.slane %v1361, 5
        %v1371 = vsel %vm741, %v1368, %v1370
        %v1372 = vrot.slane %v1362, 5
        %v1373 = vsel %vm741, %v1370, %v1372
        %v1374 = vrot.slane %v1363, 5
        %v1375 = vsel %vm741, %v1372, %v1374
        %v1376 = vrot.slane %v1364, 5
        %v1377 = vsel %vm741, %v1374, %v1376
        %v1378 = vrot.slane %v1365, 5
        %v1379 = vsel %vm741, %v1376, %v1378
        %v1380 = vrot.slane %v1366, 5
        %v1381 = vsel %vm741, %v1378, %v1380
        %v1382 = vld [vmem:[#allocation8] sm:$0xf]
        %v1383 = vld [vmem:[#allocation8 + $0x4] sm:$0xf]
        %v1384 = vld [vmem:[#allocation8 + $0x8] sm:$0xf]
        %v1385 = vld [vmem:[#allocation8 + $0xc] sm:$0xf]
        %v1386 = vld [vmem:[#allocation8 + $0x10] sm:$0xf]
        %v1387 = vld [vmem:[#allocation8 + $0x14] sm:$0xf]
        %v1388 = vld [vmem:[#allocation8 + $0x18] sm:$0xf]
        %v1389 = vld [vmem:[#allocation8 + $0x1c] sm:$0xf]
        %v1390 = vld [vmem:[#allocation8 + $0x20] sm:$0xf]
        %v1391 = vld [vmem:[#allocation8 + $0x24] sm:$0xf]
        %v1392 = vld [vmem:[#allocation8 + $0x28] sm:$0xf]
        %v1393 = vld [vmem:[#allocation8 + $0x2c] sm:$0xf]
        %v1394 = vld [vmem:[#allocation8 + $0x30] sm:$0xf]
        %v1395 = vld [vmem:[#allocation8 + $0x34] sm:$0xf]
        %v1396 = vld [vmem:[#allocation8 + $0x38] sm:$0xf]
        %v1397 = vld [vmem:[#allocation8 + $0x3c] sm:$0xf]
        %v1398 = vld [vmem:[#allocation8 + $0x40] sm:$0xf]
        %v1399 = vld [vmem:[#allocation8 + $0x44] sm:$0xf]
        %v1400 = vld [vmem:[#allocation8 + $0x48] sm:$0xf]
        %v1401 = vld [vmem:[#allocation8 + $0x4c] sm:$0xf]
        %v1402 = vld [vmem:[#allocation8 + $0x50] sm:$0xf]
        %v1403 = vld [vmem:[#allocation8 + $0x54] sm:$0xf]
        %v1404 = vld [vmem:[#allocation8 + $0x58] sm:$0xf]
        %v1405 = vld [vmem:[#allocation8 + $0x5c] sm:$0xf]
        %v1406 = vld [vmem:[#allocation8 + $0x60] sm:$0xf]
        %v1407 = vld [vmem:[#allocation8 + $0x64] sm:$0xf]
        %v1408 = vld [vmem:[#allocation8 + $0x68] sm:$0xf]
        %v1409 = vld [vmem:[#allocation8 + $0x6c] sm:$0xf]
        %v1410 = vld [vmem:[#allocation8 + $0x70] sm:$0xf]
        %v1411 = vld [vmem:[#allocation8 + $0x74] sm:$0xf]
        %v1412 = vld [vmem:[#allocation8 + $0x78] sm:$0xf]
        %v1413 = vld [vmem:[#allocation8 + $0x7c] sm:$0xf]
        %v1414 = vld [vmem:[#allocation8 + $0x80] sm:$0xf]
        %v1415 = vld [vmem:[#allocation8 + $0x84] sm:$0xf]
        %v1416 = vld [vmem:[#allocation8 + $0x88] sm:$0xf]
        %v1417 = vld [vmem:[#allocation8 + $0x8c] sm:$0xf]
        %v1418 = vld [vmem:[#allocation8 + $0x90] sm:$0xf]
        %v1419 = vld [vmem:[#allocation8 + $0x94] sm:$0xf]
        %v1420 = vld [vmem:[#allocation8 + $0x98] sm:$0xf]
        %v1421 = vld [vmem:[#allocation8 + $0x9c] sm:$0xf]
        %v1422 = vld [vmem:[#allocation8 + $0xa0] sm:$0xf]
        %v1423 = vld [vmem:[#allocation8 + $0xa4] sm:$0xf]
        %v1424 = vld [vmem:[#allocation8 + $0xa8] sm:$0xf]
        %v1425 = vld [vmem:[#allocation8 + $0xac] sm:$0xf]
        %v1426 = vld [vmem:[#allocation8 + $0xb0] sm:$0xf]
        %v1427 = vld [vmem:[#allocation8 + $0xb4] sm:$0xf]
        %v1428 = vld [vmem:[#allocation8 + $0xb8] sm:$0xf]
        %v1429 = vld [vmem:[#allocation8 + $0xbc] sm:$0xf]
        %v1430 = vld [vmem:[%s4] sm:$0x1]
        %v1432 = vperm.slane %v1430, 0
        %v1434 = vrot.slane %v1276, 3
        %v1435 = vrot.slane %v1277, 3
        %v1436 = vsel %vm809, %v1434, %v1435
        %v1437 = vrot.slane %v1299, 3
        %v1438 = vrot.slane %v1307, 3
        %v1439 = vsel %vm809, %v1437, %v1438
        %v1440 = vrot.slane %v1367, 3
        %v1441 = vrot.slane %v1369, 3
        %v1442 = vsel %vm809, %v1440, %v1441
        %v1443 = vrot.slane %v1278, 3
        %v1444 = vsel %vm809, %v1435, %v1443
        %v1445 = vrot.slane %v1315, 3
        %v1446 = vsel %vm809, %v1438, %v1445
        %v1447 = vrot.slane %v1371, 3
        %v1448 = vsel %vm809, %v1441, %v1447
        %v1449 = vrot.slane %v1279, 3
        %v1450 = vsel %vm809, %v1443, %v1449
        %v1451 = vrot.slane %v1323, 3
        %v1452 = vsel %vm809, %v1445, %v1451
        %v1453 = vrot.slane %v1373, 3
        %v1454 = vsel %vm809, %v1447, %v1453
        %v1455 = vrot.slane %v1280, 3
        %v1456 = vsel %vm809, %v1449, %v1455
        %v1457 = vrot.slane %v1331, 3
        %v1458 = vsel %vm809, %v1451, %v1457
        %v1459 = vrot.slane %v1375, 3
        %v1460 = vsel %vm809, %v1453, %v1459
        %v1461 = vrot.slane %v1281, 3
        %v1462 = vsel %vm809, %v1455, %v1461
        %v1463 = vrot.slane %v1339, 3
        %v1464 = vsel %vm809, %v1457, %v1463
        %v1465 = vrot.slane %v1377, 3
        %v1466 = vsel %vm809, %v1459, %v1465
        %v1467 = vrot.slane %v1282, 3
        %v1468 = vsel %vm809, %v1461, %v1467
        %v1469 = vrot.slane %v1347, 3
        %v1470 = vsel %vm809, %v1463, %v1469
        %v1471 = vrot.slane %v1379, 3
        %v1472 = vsel %vm809, %v1465, %v1471
        %v1473 = vrot.slane %v1283, 3
        %v1474 = vsel %vm809, %v1467, %v1473
        %v1475 = vrot.slane %v1355, 3
        %v1476 = vsel %vm809, %v1469, %v1475
        %v1477 = vrot.slane %v1381, 3
        %v1478 = vsel %vm809, %v1471, %v1477
        %v1479 = vrot.slane %v1284, 3
        %v1480 = vsel %vm809, %v1473, %v1479
        %v1481 = vrot.slane %v1358, 3
        %v1482 = vsel %vm809, %v1475, %v1481
        %v1483 = vrot.slane %v1380, 3
        %v1484 = vsel %vm809, %v1477, %v1483
        %v1557 = vunpack.c.l.b16 %v1382
        %v1558 = vunpack.c.l.b16 %v1383
        %v1559 = vunpack.c.l.b16 %v1384
        %v1560 = vunpack.c.l.b16 %v1385
        %v1561 = vunpack.c.l.b16 %v1386
        %v1562 = vunpack.c.l.b16 %v1387
        %v1563 = vunpack.c.l.b16 %v1388
        %v1564 = vunpack.c.l.b16 %v1389
        %v1565 = vunpack.c.l.b16 %v1390
        %v1566 = vunpack.c.l.b16 %v1391
        %v1567 = vunpack.c.l.b16 %v1392
        %v1568 = vunpack.c.l.b16 %v1393
        %v1569 = vunpack.c.l.b16 %v1394
        %v1570 = vunpack.c.l.b16 %v1395
        %v1571 = vunpack.c.l.b16 %v1396
        %v1572 = vunpack.c.l.b16 %v1397
        %v1573 = vunpack.c.l.b16 %v1398
        %v1574 = vunpack.c.l.b16 %v1399
        %v1575 = vunpack.c.l.b16 %v1400
        %v1576 = vunpack.c.l.b16 %v1401
        %v1577 = vunpack.c.l.b16 %v1402
        %v1578 = vunpack.c.l.b16 %v1403
        %v1579 = vunpack.c.l.b16 %v1404
        %v1580 = vunpack.c.l.b16 %v1405
        %v1581 = vunpack.c.l.b16 %v1406
        %v1582 = vunpack.c.l.b16 %v1407
        %v1583 = vunpack.c.l.b16 %v1408
        %v1584 = vunpack.c.l.b16 %v1409
        %v1585 = vunpack.c.l.b16 %v1410
        %v1586 = vunpack.c.l.b16 %v1411
        %v1587 = vunpack.c.l.b16 %v1412
        %v1588 = vunpack.c.l.b16 %v1413
        %v1589 = vunpack.c.l.b16 %v1414
        %v1590 = vunpack.c.l.b16 %v1415
        %v1591 = vunpack.c.l.b16 %v1416
        %v1592 = vunpack.c.l.b16 %v1417
        %v1593 = vunpack.c.l.b16 %v1418
        %v1594 = vunpack.c.l.b16 %v1419
        %v1595 = vunpack.c.l.b16 %v1420
        %v1596 = vunpack.c.l.b16 %v1421
        %v1597 = vunpack.c.l.b16 %v1422
        %v1598 = vunpack.c.l.b16 %v1423
        %v1599 = vunpack.c.l.b16 %v1424
        %v1600 = vunpack.c.l.b16 %v1425
        %v1601 = vunpack.c.l.b16 %v1426
        %v1602 = vunpack.c.l.b16 %v1427
        %v1603 = vunpack.c.l.b16 %v1428
        %v1604 = vunpack.c.l.b16 %v1429
        %v1605 = vpack.c.b16 %v1558, %v1557
        %v1606 = vpack.c.b16 %v1560, %v1559
        %v1607 = vpack.c.b16 %v1562, %v1561
        %v1608 = vpack.c.b16 %v1564, %v1563
        %v1609 = vpack.c.b16 %v1566, %v1565
        %v1610 = vpack.c.b16 %v1568, %v1567
        %v1611 = vpack.c.b16 %v1570, %v1569
        %v1612 = vpack.c.b16 %v1572, %v1571
        %v1613 = vpack.c.b16 %v1574, %v1573
        %v1614 = vpack.c.b16 %v1576, %v1575
        %v1615 = vpack.c.b16 %v1578, %v1577
        %v1616 = vpack.c.b16 %v1580, %v1579
        %v1617 = vpack.c.b16 %v1582, %v1581
        %v1618 = vpack.c.b16 %v1584, %v1583
        %v1619 = vpack.c.b16 %v1586, %v1585
        %v1620 = vpack.c.b16 %v1588, %v1587
        %v1621 = vpack.c.b16 %v1590, %v1589
        %v1622 = vpack.c.b16 %v1592, %v1591
        %v1623 = vpack.c.b16 %v1594, %v1593
        %v1624 = vpack.c.b16 %v1596, %v1595
        %v1625 = vpack.c.b16 %v1598, %v1597
        %v1626 = vpack.c.b16 %v1600, %v1599
        %v1627 = vpack.c.b16 %v1602, %v1601
        %v1628 = vpack.c.b16 %v1604, %v1603
        %1653 = vmatpush.bf16.msra.mxu0 %v1612
        %1654 = vmatpush.bf16.msra.mxu0 %v1611
        %1655 = vmatpush.bf16.msra.mxu0 %v1610
        %1656 = vmatpush.bf16.msra.mxu0 %v1609
        %1657 = vmatpush.bf16.msra.mxu0 %v1608
        %1658 = vmatpush.bf16.msra.mxu0 %v1607
        %1659 = vmatpush.bf16.msra.mxu0 %v1606
        %1660 = vmatpush.bf16.msra.mxu0 %v1605
        %1661 = vmatmul.bf16.gmra.mxu0 %v1436
        %v1662 = vpop.f32.mrf.mxu0
        %v1663 = vadd.f32 %v1432, %v1662
        %v1664 = vpop.f32.mrf.mxu0
        %v1665 = vadd.f32 %v1432, %v1664
        %1666 = vmatmul.bf16.gmra.mxu0 %v1444
        %v1667 = vpop.f32.mrf.mxu0
        %v1668 = vadd.f32 %v1432, %v1667
        %v1669 = vpop.f32.mrf.mxu0
        %v1670 = vadd.f32 %v1432, %v1669
        %1671 = vmatmul.bf16.gmra.mxu0 %v1450
        %v1672 = vpop.f32.mrf.mxu0
        %v1673 = vadd.f32 %v1432, %v1672
        %v1674 = vpop.f32.mrf.mxu0
        %v1675 = vadd.f32 %v1432, %v1674
        %1676 = vmatmul.bf16.gmra.mxu0 %v1456
        %v1677 = vpop.f32.mrf.mxu0
        %v1678 = vadd.f32 %v1432, %v1677
        %v1679 = vpop.f32.mrf.mxu0
        %v1680 = vadd.f32 %v1432, %v1679
        %1681 = vmatmul.bf16.gmra.mxu0 %v1462
        %v1682 = vpop.f32.mrf.mxu0
        %v1683 = vadd.f32 %v1432, %v1682
        %v1684 = vpop.f32.mrf.mxu0
        %v1685 = vadd.f32 %v1432, %v1684
        %1686 = vmatmul.bf16.gmra.mxu0 %v1468
        %v1687 = vpop.f32.mrf.mxu0
        %v1688 = vadd.f32 %v1432, %v1687
        %v1689 = vpop.f32.mrf.mxu0
        %v1690 = vadd.f32 %v1432, %v1689
        %1691 = vmatmul.bf16.gmra.mxu0 %v1474
        %v1692 = vpop.f32.mrf.mxu0
        %v1693 = vadd.f32 %v1432, %v1692
        %v1694 = vpop.f32.mrf.mxu0
        %v1695 = vadd.f32 %v1432, %v1694
        %1696 = vmatmul.bf16.gmra.mxu0 %v1480
        %v1697 = vpop.f32.mrf.mxu0
        %v1698 = vadd.f32 %v1432, %v1697
        %v1699 = vpop.f32.mrf.mxu0
        %v1700 = vadd.f32 %v1432, %v1699
        %1701 = vdwg.mxu0
        %1702 = vmatpush.bf16.msra.mxu0 %v1620
        %1703 = vmatpush.bf16.msra.mxu0 %v1619
        %1704 = vmatpush.bf16.msra.mxu0 %v1618
        %1705 = vmatpush.bf16.msra.mxu0 %v1617
        %1706 = vmatpush.bf16.msra.mxu0 %v1616
        %1707 = vmatpush.bf16.msra.mxu0 %v1615
        %1708 = vmatpush.bf16.msra.mxu0 %v1614
        %1709 = vmatpush.bf16.msra.mxu0 %v1613
        %1710 = vmatmul.bf16.gmra.mxu0 %v1439
        %v1711 = vpop.f32.mrf.mxu0
        %v1712 = vadd.f32 %v1663, %v1711
        %v1713 = vpop.f32.mrf.mxu0
        %v1714 = vadd.f32 %v1665, %v1713
        %1715 = vmatmul.bf16.gmra.mxu0 %v1446
        %v1716 = vpop.f32.mrf.mxu0
        %v1717 = vadd.f32 %v1668, %v1716
        %v1718 = vpop.f32.mrf.mxu0
        %v1719 = vadd.f32 %v1670, %v1718
        %1720 = vmatmul.bf16.gmra.mxu0 %v1452
        %v1721 = vpop.f32.mrf.mxu0
        %v1722 = vadd.f32 %v1673, %v1721
        %v1723 = vpop.f32.mrf.mxu0
        %v1724 = vadd.f32 %v1675, %v1723
        %1725 = vmatmul.bf16.gmra.mxu0 %v1458
        %v1726 = vpop.f32.mrf.mxu0
        %v1727 = vadd.f32 %v1678, %v1726
        %v1728 = vpop.f32.mrf.mxu0
        %v1729 = vadd.f32 %v1680, %v1728
        %1730 = vmatmul.bf16.gmra.mxu0 %v1464
        %v1731 = vpop.f32.mrf.mxu0
        %v1732 = vadd.f32 %v1683, %v1731
        %v1733 = vpop.f32.mrf.mxu0
        %v1734 = vadd.f32 %v1685, %v1733
        %1735 = vmatmul.bf16.gmra.mxu0 %v1470
        %v1736 = vpop.f32.mrf.mxu0
        %v1737 = vadd.f32 %v1688, %v1736
        %v1738 = vpop.f32.mrf.mxu0
        %v1739 = vadd.f32 %v1690, %v1738
        %1740 = vmatmul.bf16.gmra.mxu0 %v1476
        %v1741 = vpop.f32.mrf.mxu0
        %v1742 = vadd.f32 %v1693, %v1741
        %v1743 = vpop.f32.mrf.mxu0
        %v1744 = vadd.f32 %v1695, %v1743
        %1745 = vmatmul.bf16.gmra.mxu0 %v1482
        %v1746 = vpop.f32.mrf.mxu0
        %v1747 = vadd.f32 %v1698, %v1746
        %v1748 = vpop.f32.mrf.mxu0
        %v1749 = vadd.f32 %v1700, %v1748
        %1750 = vdwg.mxu0
        %1751 = vmatpush.bf16.msra.mxu0 %v1628
        %1752 = vmatpush.bf16.msra.mxu0 %v1627
        %1753 = vmatpush.bf16.msra.mxu0 %v1626
        %1754 = vmatpush.bf16.msra.mxu0 %v1625
        %1755 = vmatpush.bf16.msra.mxu0 %v1624
        %1756 = vmatpush.bf16.msra.mxu0 %v1623
        %1757 = vmatpush.bf16.msra.mxu0 %v1622
        %1758 = vmatpush.bf16.msra.mxu0 %v1621
        %1759 = vmatmul.bf16.gmra.mxu0 %v1442
        %v1760 = vpop.f32.mrf.mxu0
        %v1761 = vadd.f32 %v1712, %v1760
        %v1762 = vpop.f32.mrf.mxu0
        %v1763 = vadd.f32 %v1714, %v1762
        %1764 = vmatmul.bf16.gmra.mxu0 %v1448
        %v1765 = vpop.f32.mrf.mxu0
        %v1766 = vadd.f32 %v1717, %v1765
        %v1767 = vpop.f32.mrf.mxu0
        %v1768 = vadd.f32 %v1719, %v1767
        %1769 = vmatmul.bf16.gmra.mxu0 %v1454
        %v1770 = vpop.f32.mrf.mxu0
        %v1771 = vadd.f32 %v1722, %v1770
        %v1772 = vpop.f32.mrf.mxu0
        %v1773 = vadd.f32 %v1724, %v1772
        %1774 = vmatmul.bf16.gmra.mxu0 %v1460
        %v1775 = vpop.f32.mrf.mxu0
        %v1776 = vadd.f32 %v1727, %v1775
        %v1777 = vpop.f32.mrf.mxu0
        %v1778 = vadd.f32 %v1729, %v1777
        %1779 = vmatmul.bf16.gmra.mxu0 %v1466
        %v1780 = vpop.f32.mrf.mxu0
        %v1781 = vadd.f32 %v1732, %v1780
        %v1782 = vpop.f32.mrf.mxu0
        %v1783 = vadd.f32 %v1734, %v1782
        %1784 = vmatmul.bf16.gmra.mxu0 %v1472
        %v1785 = vpop.f32.mrf.mxu0
        %v1786 = vadd.f32 %v1737, %v1785
        %v1787 = vpop.f32.mrf.mxu0
        %v1788 = vadd.f32 %v1739, %v1787
        %1789 = vmatmul.bf16.gmra.mxu0 %v1478
        %v1790 = vpop.f32.mrf.mxu0
        %v1791 = vadd.f32 %v1742, %v1790
        %v1792 = vpop.f32.mrf.mxu0
        %v1793 = vadd.f32 %v1744, %v1792
        %1794 = vmatmul.bf16.gmra.mxu0 %v1484
        %v1795 = vpop.f32.mrf.mxu0
        %v1796 = vadd.f32 %v1747, %v1795
        %v1797 = vpop.f32.mrf.mxu0
        %v1798 = vadd.f32 %v1749, %v1797
        %1799 = vdwg.mxu0
        %v1800 = vmax.f32 %v1761, 0.0
        %v1801 = vmax.f32 %v1763, 0.0
        %v1802 = vmax.f32 %v1766, 0.0
        %v1803 = vmax.f32 %v1768, 0.0
        %v1804 = vmax.f32 %v1771, 0.0
        %v1805 = vmax.f32 %v1773, 0.0
        %v1806 = vmax.f32 %v1776, 0.0
        %v1807 = vmax.f32 %v1778, 0.0
        %v1808 = vmax.f32 %v1781, 0.0
        %v1809 = vmax.f32 %v1783, 0.0
        %v1810 = vmax.f32 %v1786, 0.0
        %v1811 = vmax.f32 %v1788, 0.0
        %v1812 = vmax.f32 %v1791, 0.0
        %v1813 = vmax.f32 %v1793, 0.0
        %v1814 = vmax.f32 %v1796, 0.0
        %v1815 = vmax.f32 %v1798, 0.0
        %v1816 = vld [vmem:[#allocation2 + $0x4] sm:$0xf]
        %v1817 = vld [vmem:[#allocation2 + $0x8] sm:$0xf]
        %v1818 = vld [vmem:[#allocation2 + $0xc] sm:$0xf]
        %v1819 = vld [vmem:[#allocation2 + $0x10] sm:$0xf]
        %v1820 = vld [vmem:[#allocation2 + $0x14] sm:$0xf]
        %v1821 = vld [vmem:[#allocation2 + $0x18] sm:$0xf]
        %v1822 = vld [vmem:[#allocation2 + $0x1c] sm:$0xf]
        %v1823 = vld [vmem:[#allocation2 + $0x20] sm:$0xf]
        %v1824 = vld [vmem:[#allocation2 + $0x24] sm:$0xf]
        %v1825 = vld [vmem:[#allocation2 + $0x28] sm:$0xf]
        %v1826 = vld [vmem:[#allocation2 + $0x2c] sm:$0xf]
        %v1827 = vld [vmem:[#allocation2 + $0x30] sm:$0xf]
        %v1828 = vld [vmem:[#allocation2 + $0x34] sm:$0xf]
        %v1829 = vld [vmem:[#allocation2 + $0x38] sm:$0xf]
        %v1830 = vld [vmem:[#allocation2 + $0x3c] sm:$0xf]
        %v1831 = vld [vmem:[#allocation2 + $0x40] sm:$0xf]
        %v1832 = vld [vmem:[#allocation9] sm:$0xf]
        %v1833 = vld [vmem:[#allocation9 + $0x4] sm:$0xf]
        %v1834 = vld [vmem:[#allocation9 + $0x8] sm:$0xf]
        %v1835 = vld [vmem:[#allocation9 + $0xc] sm:$0xf]
        %v1836 = vld [vmem:[#allocation9 + $0x10] sm:$0xf]
        %v1837 = vld [vmem:[#allocation9 + $0x14] sm:$0xf]
        %v1838 = vld [vmem:[#allocation9 + $0x18] sm:$0xf]
        %v1839 = vld [vmem:[#allocation9 + $0x1c] sm:$0xf]
        %v1840 = vld [vmem:[#allocation9 + $0x20] sm:$0xf]
        %v1841 = vld [vmem:[#allocation9 + $0x24] sm:$0xf]
        %v1842 = vld [vmem:[#allocation9 + $0x28] sm:$0xf]
        %v1843 = vld [vmem:[#allocation9 + $0x2c] sm:$0xf]
        %v1844 = vld [vmem:[#allocation9 + $0x30] sm:$0xf]
        %v1845 = vld [vmem:[#allocation9 + $0x34] sm:$0xf]
        %v1846 = vld [vmem:[#allocation9 + $0x38] sm:$0xf]
        %v1847 = vld [vmem:[#allocation9 + $0x3c] sm:$0xf]
        %v1848 = vld [vmem:[%s6] sm:$0x1]
        %v1850 = vperm.slane %v1848, 0
        %v1868 = vunpack.c.l.b16 %v1816
        %v1869 = vunpack.c.l.b16 %v1817
        %v1870 = vunpack.c.l.b16 %v1818
        %v1871 = vunpack.c.l.b16 %v1819
        %v1872 = vunpack.c.l.b16 %v1820
        %v1873 = vunpack.c.l.b16 %v1821
        %v1874 = vunpack.c.l.b16 %v1822
        %v1875 = vunpack.c.l.b16 %v1823
        %v1876 = vunpack.c.l.b16 %v1824
        %v1877 = vunpack.c.l.b16 %v1825
        %v1878 = vunpack.c.l.b16 %v1826
        %v1879 = vunpack.c.l.b16 %v1827
        %v1880 = vunpack.c.l.b16 %v1828
        %v1881 = vunpack.c.l.b16 %v1829
        %v1882 = vunpack.c.l.b16 %v1830
        %v1883 = vunpack.c.l.b16 %v1831
        %v1884 = vpack.c.b16 %v1869, %v1868
        %v1885 = vpack.c.b16 %v1871, %v1870
        %v1886 = vpack.c.b16 %v1873, %v1872
        %v1887 = vpack.c.b16 %v1875, %v1874
        %v1888 = vpack.c.b16 %v1877, %v1876
        %v1889 = vpack.c.b16 %v1879, %v1878
        %v1890 = vpack.c.b16 %v1881, %v1880
        %v1891 = vpack.c.b16 %v1883, %v1882
        %v1916 = vunpack.c.l.b16 %v1832
        %v1917 = vunpack.c.l.b16 %v1833
        %v1918 = vunpack.c.l.b16 %v1834
        %v1919 = vunpack.c.l.b16 %v1835
        %v1920 = vunpack.c.l.b16 %v1836
        %v1921 = vunpack.c.l.b16 %v1837
        %v1922 = vunpack.c.l.b16 %v1838
        %v1923 = vunpack.c.l.b16 %v1839
        %v1924 = vunpack.c.l.b16 %v1840
        %v1925 = vunpack.c.l.b16 %v1841
        %v1926 = vunpack.c.l.b16 %v1842
        %v1927 = vunpack.c.l.b16 %v1843
        %v1928 = vunpack.c.l.b16 %v1844
        %v1929 = vunpack.c.l.b16 %v1845
        %v1930 = vunpack.c.l.b16 %v1846
        %v1931 = vunpack.c.l.b16 %v1847
        %v1932 = vpack.c.b16 %v1917, %v1916
        %v1933 = vpack.c.b16 %v1919, %v1918
        %v1934 = vpack.c.b16 %v1921, %v1920
        %v1935 = vpack.c.b16 %v1923, %v1922
        %v1936 = vpack.c.b16 %v1925, %v1924
        %v1937 = vpack.c.b16 %v1927, %v1926
        %v1938 = vpack.c.b16 %v1929, %v1928
        %v1939 = vpack.c.b16 %v1931, %v1930
        %1948 = vmatpush.bf16.msra.mxu0 %v1939
        %1949 = vmatpush.bf16.msra.mxu0 %v1938
        %1950 = vmatpush.bf16.msra.mxu0 %v1937
        %1951 = vmatpush.bf16.msra.mxu0 %v1936
        %1952 = vmatpush.bf16.msra.mxu0 %v1935
        %1953 = vmatpush.bf16.msra.mxu0 %v1934
        %1954 = vmatpush.bf16.msra.mxu0 %v1933
        %1955 = vmatpush.bf16.msra.mxu0 %v1932
        %1956 = vmatmul.bf16.gmra.mxu0 %v1884
        %v1957 = vpop.f32.mrf.mxu0
        %v1958 = vadd.f32 %v1850, %v1957
        %v1959 = vpop.f32.mrf.mxu0
        %v1960 = vadd.f32 %v1850, %v1959
        %1961 = vmatmul.bf16.gmra.mxu0 %v1885
        %v1962 = vpop.f32.mrf.mxu0
        %v1963 = vadd.f32 %v1850, %v1962
        %v1964 = vpop.f32.mrf.mxu0
        %v1965 = vadd.f32 %v1850, %v1964
        %1966 = vmatmul.bf16.gmra.mxu0 %v1886
        %v1967 = vpop.f32.mrf.mxu0
        %v1968 = vadd.f32 %v1850, %v1967
        %v1969 = vpop.f32.mrf.mxu0
        %v1970 = vadd.f32 %v1850, %v1969
        %1971 = vmatmul.bf16.gmra.mxu0 %v1887
        %v1972 = vpop.f32.mrf.mxu0
        %v1973 = vadd.f32 %v1850, %v1972
        %v1974 = vpop.f32.mrf.mxu0
        %v1975 = vadd.f32 %v1850, %v1974
        %1976 = vmatmul.bf16.gmra.mxu0 %v1888
        %v1977 = vpop.f32.mrf.mxu0
        %v1978 = vadd.f32 %v1850, %v1977
        %v1979 = vpop.f32.mrf.mxu0
        %v1980 = vadd.f32 %v1850, %v1979
        %1981 = vmatmul.bf16.gmra.mxu0 %v1889
        %v1982 = vpop.f32.mrf.mxu0
        %v1983 = vadd.f32 %v1850, %v1982
        %v1984 = vpop.f32.mrf.mxu0
        %v1985 = vadd.f32 %v1850, %v1984
        %1986 = vmatmul.bf16.gmra.mxu0 %v1890
        %v1987 = vpop.f32.mrf.mxu0
        %v1988 = vadd.f32 %v1850, %v1987
        %v1989 = vpop.f32.mrf.mxu0
        %v1990 = vadd.f32 %v1850, %v1989
        %1991 = vmatmul.bf16.gmra.mxu0 %v1891
        %v1992 = vpop.f32.mrf.mxu0
        %v1993 = vadd.f32 %v1850, %v1992
        %v1994 = vpop.f32.mrf.mxu0
        %v1995 = vadd.f32 %v1850, %v1994
        %1996 = vdwg.mxu0
        %v1997 = vadd.f32 %v1800, %v1958
        %v1998 = vadd.f32 %v1801, %v1960
        %v1999 = vadd.f32 %v1802, %v1963
        %v2000 = vadd.f32 %v1803, %v1965
        %v2001 = vadd.f32 %v1804, %v1968
        %v2002 = vadd.f32 %v1805, %v1970
        %v2003 = vadd.f32 %v1806, %v1973
        %v2004 = vadd.f32 %v1807, %v1975
        %v2005 = vadd.f32 %v1808, %v1978
        %v2006 = vadd.f32 %v1809, %v1980
        %v2007 = vadd.f32 %v1810, %v1983
        %v2008 = vadd.f32 %v1811, %v1985
        %v2009 = vadd.f32 %v1812, %v1988
        %v2010 = vadd.f32 %v1813, %v1990
        %v2011 = vadd.f32 %v1814, %v1993
        %v2012 = vadd.f32 %v1815, %v1995
        %v2013 = vmax.f32 %v1997, 0.0
        %v2014 = vmax.f32 %v1998, 0.0
        %v2015 = vmax.f32 %v1999, 0.0
        %v2016 = vmax.f32 %v2000, 0.0
        %v2017 = vmax.f32 %v2001, 0.0
        %v2018 = vmax.f32 %v2002, 0.0
        %v2019 = vmax.f32 %v2003, 0.0
        %v2020 = vmax.f32 %v2004, 0.0
        %v2021 = vmax.f32 %v2005, 0.0
        %v2022 = vmax.f32 %v2006, 0.0
        %v2023 = vmax.f32 %v2007, 0.0
        %v2024 = vmax.f32 %v2008, 0.0
        %v2025 = vmax.f32 %v2009, 0.0
        %v2026 = vmax.f32 %v2010, 0.0
        %v2027 = vmax.f32 %v2011, 0.0
        %v2028 = vmax.f32 %v2012, 0.0
        %v2029 = vpack.c.bf16 %v2013, %v2013
        %v2030 = vpack.c.bf16 %v2014, %v2014
        %v2031 = vpack.c.bf16 %v2015, %v2015
        %v2032 = vpack.c.bf16 %v2016, %v2016
        %v2033 = vpack.c.bf16 %v2017, %v2017
        %v2034 = vpack.c.bf16 %v2018, %v2018
        %v2035 = vpack.c.bf16 %v2019, %v2019
        %v2036 = vpack.c.bf16 %v2020, %v2020
        %v2037 = vpack.c.bf16 %v2021, %v2021
        %v2038 = vpack.c.bf16 %v2022, %v2022
        %v2039 = vpack.c.bf16 %v2023, %v2023
        %v2040 = vpack.c.bf16 %v2024, %v2024
        %v2041 = vpack.c.bf16 %v2025, %v2025
        %v2042 = vpack.c.bf16 %v2026, %v2026
        %v2043 = vpack.c.bf16 %v2027, %v2027
        %v2044 = vpack.c.bf16 %v2028, %v2028
        %2045 = vst [vmem:[#allocation2 + $0x4] sm:$0xf] %v2029
        %2046 = vst [vmem:[#allocation2 + $0x8] sm:$0xf] %v2030
        %2047 = vst [vmem:[#allocation2 + $0xc] sm:$0xf] %v2031
        %2048 = vst [vmem:[#allocation2 + $0x10] sm:$0xf] %v2032
        %2049 = vst [vmem:[#allocation2 + $0x14] sm:$0xf] %v2033
        %2050 = vst [vmem:[#allocation2 + $0x18] sm:$0xf] %v2034
        %2051 = vst [vmem:[#allocation2 + $0x1c] sm:$0xf] %v2035
        %2052 = vst [vmem:[#allocation2 + $0x20] sm:$0xf] %v2036
        %2053 = vst [vmem:[#allocation2 + $0x24] sm:$0xf] %v2037
        %2054 = vst [vmem:[#allocation2 + $0x28] sm:$0xf] %v2038
        %2055 = vst [vmem:[#allocation2 + $0x2c] sm:$0xf] %v2039
        %2056 = vst [vmem:[#allocation2 + $0x30] sm:$0xf] %v2040
        %2057 = vst [vmem:[#allocation2 + $0x34] sm:$0xf] %v2041
        %2058 = vst [vmem:[#allocation2 + $0x38] sm:$0xf] %v2042
        %2059 = vst [vmem:[#allocation2 + $0x3c] sm:$0xf] %v2043
        %2060 = vst [vmem:[#allocation2 + $0x40] sm:$0xf] %v2044
        %v2061 = vld [vmem:[#allocation2] sm:$0xc]
        %v2062 = vld [vmem:[#allocation2 + $0x4] sm:$0xf]
        %v2063 = vld [vmem:[#allocation2 + $0x8] sm:$0xf]
        %v2064 = vld [vmem:[#allocation2 + $0xc] sm:$0xf]
        %v2065 = vld [vmem:[#allocation2 + $0x10] sm:$0xf]
        %v2066 = vld [vmem:[#allocation2 + $0x14] sm:$0xf]
        %v2067 = vld [vmem:[#allocation2 + $0x18] sm:$0xf]
        %v2068 = vld [vmem:[#allocation2 + $0x1c] sm:$0xf]
        %v2069 = vld [vmem:[#allocation2 + $0x20] sm:$0xf]
        %v2070 = vld [vmem:[#allocation2 + $0x24] sm:$0xf]
        %v2071 = vld [vmem:[#allocation2 + $0x28] sm:$0xf]
        %v2072 = vld [vmem:[#allocation2 + $0x2c] sm:$0xf]
        %v2073 = vld [vmem:[#allocation2 + $0x30] sm:$0xf]
        %v2074 = vld [vmem:[#allocation2 + $0x34] sm:$0xf]
        %v2075 = vld [vmem:[#allocation2 + $0x38] sm:$0xf]
        %v2076 = vld [vmem:[#allocation2 + $0x3c] sm:$0xf]
        %v2077 = vld [vmem:[#allocation2 + $0x40] sm:$0x3]
        %v2078 = vld [vmem:[#allocation2] sm:$0x8]
        %v2079 = vld [vmem:[#allocation2 + $0x40] sm:$0x7]
        %v2080 = vld [vmem:[#allocation2 + $0x40] sm:$0xf]
        %v2098 = vunpack.c.l.b16 %v2061
        %v2099 = vunpack.c.l.b16 %v2062
        %v2100 = vunpack.c.l.b16 %v2063
        %v2101 = vunpack.c.l.b16 %v2064
        %v2102 = vunpack.c.l.b16 %v2065
        %v2103 = vunpack.c.l.b16 %v2066
        %v2104 = vunpack.c.l.b16 %v2067
        %v2105 = vunpack.c.l.b16 %v2068
        %v2106 = vunpack.c.l.b16 %v2069
        %v2107 = vunpack.c.l.b16 %v2070
        %v2108 = vunpack.c.l.b16 %v2071
        %v2109 = vunpack.c.l.b16 %v2072
        %v2110 = vunpack.c.l.b16 %v2073
        %v2111 = vunpack.c.l.b16 %v2074
        %v2112 = vunpack.c.l.b16 %v2075
        %v2113 = vunpack.c.l.b16 %v2076
        %v2114 = vunpack.c.l.b16 %v2077
        %v2115 = vpack.c.b16 %v2099, %v2098
        %v2116 = vpack.c.b16 %v2101, %v2100
        %v2117 = vpack.c.b16 %v2103, %v2102
        %v2118 = vpack.c.b16 %v2105, %v2104
        %v2119 = vpack.c.b16 %v2107, %v2106
        %v2120 = vpack.c.b16 %v2109, %v2108
        %v2121 = vpack.c.b16 %v2111, %v2110
        %v2122 = vpack.c.b16 %v2113, %v2112
        %v2123 = vpack.c.b16 %v2114, %v2114
        %v2126 = vunpack.c.l.b16 %v2078
        %v2127 = vunpack.c.l.b16 %v2079
        %v2128 = vpack.c.b16 %v2099, %v2126
        %v2129 = vpack.c.b16 %v2127, %v2127
        %vm2130 = vcmask 1046528
        %v2131 = vrot.slane %v2128, 1
        %v2132 = vrot.slane %v2116, 1
        %v2133 = vsel %vm2130, %v2131, %v2132
        %v2134 = vrot.slane %v2117, 1
        %v2135 = vsel %vm2130, %v2132, %v2134
        %v2136 = vrot.slane %v2118, 1
        %v2137 = vsel %vm2130, %v2134, %v2136
        %v2138 = vrot.slane %v2119, 1
        %v2139 = vsel %vm2130, %v2136, %v2138
        %v2140 = vrot.slane %v2120, 1
        %v2141 = vsel %vm2130, %v2138, %v2140
        %v2142 = vrot.slane %v2121, 1
        %v2143 = vsel %vm2130, %v2140, %v2142
        %v2144 = vrot.slane %v2122, 1
        %v2145 = vsel %vm2130, %v2142, %v2144
        %v2146 = vrot.slane %v2129, 1
        %v2147 = vsel %vm2130, %v2144, %v2146
        %v2149 = vunpack.c.l.b16 %v2080
        %v2150 = vpack.c.b16 %v2100, %v2099
        %v2151 = vpack.c.b16 %v2102, %v2101
        %v2152 = vpack.c.b16 %v2104, %v2103
        %v2153 = vpack.c.b16 %v2106, %v2105
        %v2154 = vpack.c.b16 %v2108, %v2107
        %v2155 = vpack.c.b16 %v2110, %v2109
        %v2156 = vpack.c.b16 %v2112, %v2111
        %v2157 = vpack.c.b16 %v2149, %v2113
        %vm2158 = vcmask 1041408
        %v2159 = vrot.slane %v2150, 6
        %v2160 = vrot.slane %v2151, 6
        %v2161 = vsel %vm2158, %v2159, %v2160
        %v2162 = vrot.slane %v2152, 6
        %v2163 = vsel %vm2158, %v2160, %v2162
        %v2164 = vrot.slane %v2153, 6
        %v2165 = vsel %vm2158, %v2162, %v2164
        %v2166 = vrot.slane %v2154, 6
        %v2167 = vsel %vm2158, %v2164, %v2166
        %v2168 = vrot.slane %v2155, 6
        %v2169 = vsel %vm2158, %v2166, %v2168
        %v2170 = vrot.slane %v2156, 6
        %v2171 = vsel %vm2158, %v2168, %v2170
        %v2172 = vrot.slane %v2157, 6
        %v2173 = vsel %vm2158, %v2170, %v2172
        %v2174 = vld [vmem:[#allocation11] sm:$0xf]
        %v2175 = vld [vmem:[#allocation11 + $0x4] sm:$0xf]
        %v2176 = vld [vmem:[#allocation11 + $0x8] sm:$0xf]
        %v2177 = vld [vmem:[#allocation11 + $0xc] sm:$0xf]
        %v2178 = vld [vmem:[#allocation11 + $0x10] sm:$0xf]
        %v2179 = vld [vmem:[#allocation11 + $0x14] sm:$0xf]
        %v2180 = vld [vmem:[#allocation11 + $0x18] sm:$0xf]
        %v2181 = vld [vmem:[#allocation11 + $0x1c] sm:$0xf]
        %v2182 = vld [vmem:[#allocation11 + $0x20] sm:$0xf]
        %v2183 = vld [vmem:[#allocation11 + $0x24] sm:$0xf]
        %v2184 = vld [vmem:[#allocation11 + $0x28] sm:$0xf]
        %v2185 = vld [vmem:[#allocation11 + $0x2c] sm:$0xf]
        %v2186 = vld [vmem:[#allocation11 + $0x30] sm:$0xf]
        %v2187 = vld [vmem:[#allocation11 + $0x34] sm:$0xf]
        %v2188 = vld [vmem:[#allocation11 + $0x38] sm:$0xf]
        %v2189 = vld [vmem:[#allocation11 + $0x3c] sm:$0xf]
        %v2190 = vld [vmem:[#allocation11 + $0x40] sm:$0xf]
        %v2191 = vld [vmem:[#allocation11 + $0x44] sm:$0xf]
        %v2192 = vld [vmem:[#allocation11 + $0x48] sm:$0xf]
        %v2193 = vld [vmem:[#allocation11 + $0x4c] sm:$0xf]
        %v2194 = vld [vmem:[#allocation11 + $0x50] sm:$0xf]
        %v2195 = vld [vmem:[#allocation11 + $0x54] sm:$0xf]
        %v2196 = vld [vmem:[#allocation11 + $0x58] sm:$0xf]
        %v2197 = vld [vmem:[#allocation11 + $0x5c] sm:$0xf]
        %v2198 = vld [vmem:[#allocation11 + $0x60] sm:$0xf]
        %v2199 = vld [vmem:[#allocation11 + $0x64] sm:$0xf]
        %v2200 = vld [vmem:[#allocation11 + $0x68] sm:$0xf]
        %v2201 = vld [vmem:[#allocation11 + $0x6c] sm:$0xf]
        %v2202 = vld [vmem:[#allocation11 + $0x70] sm:$0xf]
        %v2203 = vld [vmem:[#allocation11 + $0x74] sm:$0xf]
        %v2204 = vld [vmem:[#allocation11 + $0x78] sm:$0xf]
        %v2205 = vld [vmem:[#allocation11 + $0x7c] sm:$0xf]
        %v2206 = vld [vmem:[#allocation11 + $0x80] sm:$0xf]
        %v2207 = vld [vmem:[#allocation11 + $0x84] sm:$0xf]
        %v2208 = vld [vmem:[#allocation11 + $0x88] sm:$0xf]
        %v2209 = vld [vmem:[#allocation11 + $0x8c] sm:$0xf]
        %v2210 = vld [vmem:[#allocation11 + $0x90] sm:$0xf]
        %v2211 = vld [vmem:[#allocation11 + $0x94] sm:$0xf]
        %v2212 = vld [vmem:[#allocation11 + $0x98] sm:$0xf]
        %v2213 = vld [vmem:[#allocation11 + $0x9c] sm:$0xf]
        %v2214 = vld [vmem:[#allocation11 + $0xa0] sm:$0xf]
        %v2215 = vld [vmem:[#allocation11 + $0xa4] sm:$0xf]
        %v2216 = vld [vmem:[#allocation11 + $0xa8] sm:$0xf]
        %v2217 = vld [vmem:[#allocation11 + $0xac] sm:$0xf]
        %v2218 = vld [vmem:[#allocation11 + $0xb0] sm:$0xf]
        %v2219 = vld [vmem:[#allocation11 + $0xb4] sm:$0xf]
        %v2220 = vld [vmem:[#allocation11 + $0xb8] sm:$0xf]
        %v2221 = vld [vmem:[#allocation11 + $0xbc] sm:$0xf]
        %v2222 = vld [vmem:[%s8] sm:$0x1]
        %v2224 = vperm.slane %v2222, 0
        %vm2226 = vcmask 1045504
        %v2227 = vrot.slane %v2115, 2
        %v2228 = vrot.slane %v2116, 2
        %v2229 = vsel %vm2226, %v2227, %v2228
        %v2230 = vrot.slane %v2133, 2
        %v2231 = vrot.slane %v2135, 2
        %v2232 = vsel %vm2226, %v2230, %v2231
        %v2233 = vrot.slane %v2159, 2
        %v2234 = vrot.slane %v2161, 2
        %v2235 = vsel %vm2226, %v2233, %v2234
        %v2236 = vrot.slane %v2117, 2
        %v2237 = vsel %vm2226, %v2228, %v2236
        %v2238 = vrot.slane %v2137, 2
        %v2239 = vsel %vm2226, %v2231, %v2238
        %v2240 = vrot.slane %v2163, 2
        %v2241 = vsel %vm2226, %v2234, %v2240
        %v2242 = vrot.slane %v2118, 2
        %v2243 = vsel %vm2226, %v2236, %v2242
        %v2244 = vrot.slane %v2139, 2
        %v2245 = vsel %vm2226, %v2238, %v2244
        %v2246 = vrot.slane %v2165, 2
        %v2247 = vsel %vm2226, %v2240, %v2246
        %v2248 = vrot.slane %v2119, 2
        %v2249 = vsel %vm2226, %v2242, %v2248
        %v2250 = vrot.slane %v2141, 2
        %v2251 = vsel %vm2226, %v2244, %v2250
        %v2252 = vrot.slane %v2167, 2
        %v2253 = vsel %vm2226, %v2246, %v2252
        %v2254 = vrot.slane %v2120, 2
        %v2255 = vsel %vm2226, %v2248, %v2254
        %v2256 = vrot.slane %v2143, 2
        %v2257 = vsel %vm2226, %v2250, %v2256
        %v2258 = vrot.slane %v2169, 2
        %v2259 = vsel %vm2226, %v2252, %v2258
        %v2260 = vrot.slane %v2121, 2
        %v2261 = vsel %vm2226, %v2254, %v2260
        %v2262 = vrot.slane %v2145, 2
        %v2263 = vsel %vm2226, %v2256, %v2262
        %v2264 = vrot.slane %v2171, 2
        %v2265 = vsel %vm2226, %v2258, %v2264
        %v2266 = vrot.slane %v2122, 2
        %v2267 = vsel %vm2226, %v2260, %v2266
        %v2268 = vrot.slane %v2147, 2
        %v2269 = vsel %vm2226, %v2262, %v2268
        %v2270 = vrot.slane %v2173, 2
        %v2271 = vsel %vm2226, %v2264, %v2270
        %v2272 = vrot.slane %v2123, 2
        %v2273 = vsel %vm2226, %v2266, %v2272
        %v2274 = vrot.slane %v2146, 2
        %v2275 = vsel %vm2226, %v2268, %v2274
        %v2276 = vrot.slane %v2172, 2
        %v2277 = vsel %vm2226, %v2270, %v2276
        %v2350 = vunpack.c.l.b16 %v2174
        %v2351 = vunpack.c.l.b16 %v2175
        %v2352 = vunpack.c.l.b16 %v2176
        %v2353 = vunpack.c.l.b16 %v2177
        %v2354 = vunpack.c.l.b16 %v2178
        %v2355 = vunpack.c.l.b16 %v2179
        %v2356 = vunpack.c.l.b16 %v2180
        %v2357 = vunpack.c.l.b16 %v2181
        %v2358 = vunpack.c.l.b16 %v2182
        %v2359 = vunpack.c.l.b16 %v2183
        %v2360 = vunpack.c.l.b16 %v2184
        %v2361 = vunpack.c.l.b16 %v2185
        %v2362 = vunpack.c.l.b16 %v2186
        %v2363 = vunpack.c.l.b16 %v2187
        %v2364 = vunpack.c.l.b16 %v2188
        %v2365 = vunpack.c.l.b16 %v2189
        %v2366 = vunpack.c.l.b16 %v2190
        %v2367 = vunpack.c.l.b16 %v2191
        %v2368 = vunpack.c.l.b16 %v2192
        %v2369 = vunpack.c.l.b16 %v2193
        %v2370 = vunpack.c.l.b16 %v2194
        %v2371 = vunpack.c.l.b16 %v2195
        %v2372 = vunpack.c.l.b16 %v2196
        %v2373 = vunpack.c.l.b16 %v2197
        %v2374 = vunpack.c.l.b16 %v2198
        %v2375 = vunpack.c.l.b16 %v2199
        %v2376 = vunpack.c.l.b16 %v2200
        %v2377 = vunpack.c.l.b16 %v2201
        %v2378 = vunpack.c.l.b16 %v2202
        %v2379 = vunpack.c.l.b16 %v2203
        %v2380 = vunpack.c.l.b16 %v2204
        %v2381 = vunpack.c.l.b16 %v2205
        %v2382 = vunpack.c.l.b16 %v2206
        %v2383 = vunpack.c.l.b16 %v2207
        %v2384 = vunpack.c.l.b16 %v2208
        %v2385 = vunpack.c.l.b16 %v2209
        %v2386 = vunpack.c.l.b16 %v2210
        %v2387 = vunpack.c.l.b16 %v2211
        %v2388 = vunpack.c.l.b16 %v2212
        %v2389 = vunpack.c.l.b16 %v2213
        %v2390 = vunpack.c.l.b16 %v2214
        %v2391 = vunpack.c.l.b16 %v2215
        %v2392 = vunpack.c.l.b16 %v2216
        %v2393 = vunpack.c.l.b16 %v2217
        %v2394 = vunpack.c.l.b16 %v2218
        %v2395 = vunpack.c.l.b16 %v2219
        %v2396 = vunpack.c.l.b16 %v2220
        %v2397 = vunpack.c.l.b16 %v2221
        %v2398 = vpack.c.b16 %v2351, %v2350
        %v2399 = vpack.c.b16 %v2353, %v2352
        %v2400 = vpack.c.b16 %v2355, %v2354
        %v2401 = vpack.c.b16 %v2357, %v2356
        %v2402 = vpack.c.b16 %v2359, %v2358
        %v2403 = vpack.c.b16 %v2361, %v2360
        %v2404 = vpack.c.b16 %v2363, %v2362
        %v2405 = vpack.c.b16 %v2365, %v2364
        %v2406 = vpack.c.b16 %v2367, %v2366
        %v2407 = vpack.c.b16 %v2369, %v2368
        %v2408 = vpack.c.b16 %v2371, %v2370
        %v2409 = vpack.c.b16 %v2373, %v2372
        %v2410 = vpack.c.b16 %v2375, %v2374
        %v2411 = vpack.c.b16 %v2377, %v2376
        %v2412 = vpack.c.b16 %v2379, %v2378
        %v2413 = vpack.c.b16 %v2381, %v2380
        %v2414 = vpack.c.b16 %v2383, %v2382
        %v2415 = vpack.c.b16 %v2385, %v2384
        %v2416 = vpack.c.b16 %v2387, %v2386
        %v2417 = vpack.c.b16 %v2389, %v2388
        %v2418 = vpack.c.b16 %v2391, %v2390
        %v2419 = vpack.c.b16 %v2393, %v2392
        %v2420 = vpack.c.b16 %v2395, %v2394
        %v2421 = vpack.c.b16 %v2397, %v2396
        %2446 = vmatpush.bf16.msra.mxu0 %v2405
        %2447 = vmatpush.bf16.msra.mxu0 %v2404
        %2448 = vmatpush.bf16.msra.mxu0 %v2403
        %2449 = vmatpush.bf16.msra.mxu0 %v2402
        %2450 = vmatpush.bf16.msra.mxu0 %v2401
        %2451 = vmatpush.bf16.msra.mxu0 %v2400
        %2452 = vmatpush.bf16.msra.mxu0 %v2399
        %2453 = vmatpush.bf16.msra.mxu0 %v2398
        %2454 = vmatmul.bf16.gmra.mxu0 %v2229
        %v2455 = vpop.f32.mrf.mxu0
        %v2456 = vadd.f32 %v2224, %v2455
        %v2457 = vpop.f32.mrf.mxu0
        %v2458 = vadd.f32 %v2224, %v2457
        %2459 = vmatmul.bf16.gmra.mxu0 %v2237
        %v2460 = vpop.f32.mrf.mxu0
        %v2461 = vadd.f32 %v2224, %v2460
        %v2462 = vpop.f32.mrf.mxu0
        %v2463 = vadd.f32 %v2224, %v2462
        %2464 = vmatmul.bf16.gmra.mxu0 %v2243
        %v2465 = vpop.f32.mrf.mxu0
        %v2466 = vadd.f32 %v2224, %v2465
        %v2467 = vpop.f32.mrf.mxu0
        %v2468 = vadd.f32 %v2224, %v2467
        %2469 = vmatmul.bf16.gmra.mxu0 %v2249
        %v2470 = vpop.f32.mrf.mxu0
        %v2471 = vadd.f32 %v2224, %v2470
        %v2472 = vpop.f32.mrf.mxu0
        %v2473 = vadd.f32 %v2224, %v2472
        %2474 = vmatmul.bf16.gmra.mxu0 %v2255
        %v2475 = vpop.f32.mrf.mxu0
        %v2476 = vadd.f32 %v2224, %v2475
        %v2477 = vpop.f32.mrf.mxu0
        %v2478 = vadd.f32 %v2224, %v2477
        %2479 = vmatmul.bf16.gmra.mxu0 %v2261
        %v2480 = vpop.f32.mrf.mxu0
        %v2481 = vadd.f32 %v2224, %v2480
        %v2482 = vpop.f32.mrf.mxu0
        %v2483 = vadd.f32 %v2224, %v2482
        %2484 = vmatmul.bf16.gmra.mxu0 %v2267
        %v2485 = vpop.f32.mrf.mxu0
        %v2486 = vadd.f32 %v2224, %v2485
        %v2487 = vpop.f32.mrf.mxu0
        %v2488 = vadd.f32 %v2224, %v2487
        %2489 = vmatmul.bf16.gmra.mxu0 %v2273
        %v2490 = vpop.f32.mrf.mxu0
        %v2491 = vadd.f32 %v2224, %v2490
        %v2492 = vpop.f32.mrf.mxu0
        %v2493 = vadd.f32 %v2224, %v2492
        %2494 = vdwg.mxu0
        %2495 = vmatpush.bf16.msra.mxu0 %v2413
        %2496 = vmatpush.bf16.msra.mxu0 %v2412
        %2497 = vmatpush.bf16.msra.mxu0 %v2411
        %2498 = vmatpush.bf16.msra.mxu0 %v2410
        %2499 = vmatpush.bf16.msra.mxu0 %v2409
        %2500 = vmatpush.bf16.msra.mxu0 %v2408
        %2501 = vmatpush.bf16.msra.mxu0 %v2407
        %2502 = vmatpush.bf16.msra.mxu0 %v2406
        %2503 = vmatmul.bf16.gmra.mxu0 %v2232
        %v2504 = vpop.f32.mrf.mxu0
        %v2505 = vadd.f32 %v2456, %v2504
        %v2506 = vpop.f32.mrf.mxu0
        %v2507 = vadd.f32 %v2458, %v2506
        %2508 = vmatmul.bf16.gmra.mxu0 %v2239
        %v2509 = vpop.f32.mrf.mxu0
        %v2510 = vadd.f32 %v2461, %v2509
        %v2511 = vpop.f32.mrf.mxu0
        %v2512 = vadd.f32 %v2463, %v2511
        %2513 = vmatmul.bf16.gmra.mxu0 %v2245
        %v2514 = vpop.f32.mrf.mxu0
        %v2515 = vadd.f32 %v2466, %v2514
        %v2516 = vpop.f32.mrf.mxu0
        %v2517 = vadd.f32 %v2468, %v2516
        %2518 = vmatmul.bf16.gmra.mxu0 %v2251
        %v2519 = vpop.f32.mrf.mxu0
        %v2520 = vadd.f32 %v2471, %v2519
        %v2521 = vpop.f32.mrf.mxu0
        %v2522 = vadd.f32 %v2473, %v2521
        %2523 = vmatmul.bf16.gmra.mxu0 %v2257
        %v2524 = vpop.f32.mrf.mxu0
        %v2525 = vadd.f32 %v2476, %v2524
        %v2526 = vpop.f32.mrf.mxu0
        %v2527 = vadd.f32 %v2478, %v2526
        %2528 = vmatmul.bf16.gmra.mxu0 %v2263
        %v2529 = vpop.f32.mrf.mxu0
        %v2530 = vadd.f32 %v2481, %v2529
        %v2531 = vpop.f32.mrf.mxu0
        %v2532 = vadd.f32 %v2483, %v2531
        %2533 = vmatmul.bf16.gmra.mxu0 %v2269
        %v2534 = vpop.f32.mrf.mxu0
        %v2535 = vadd.f32 %v2486, %v2534
        %v2536 = vpop.f32.mrf.mxu0
        %v2537 = vadd.f32 %v2488, %v2536
        %2538 = vmatmul.bf16.gmra.mxu0 %v2275
        %v2539 = vpop.f32.mrf.mxu0
        %v2540 = vadd.f32 %v2491, %v2539
        %v2541 = vpop.f32.mrf.mxu0
        %v2542 = vadd.f32 %v2493, %v2541
        %2543 = vdwg.mxu0
        %2544 = vmatpush.bf16.msra.mxu0 %v2421
        %2545 = vmatpush.bf16.msra.mxu0 %v2420
        %2546 = vmatpush.bf16.msra.mxu0 %v2419
        %2547 = vmatpush.bf16.msra.mxu0 %v2418
        %2548 = vmatpush.bf16.msra.mxu0 %v2417
        %2549 = vmatpush.bf16.msra.mxu0 %v2416
        %2550 = vmatpush.bf16.msra.mxu0 %v2415
        %2551 = vmatpush.bf16.msra.mxu0 %v2414
        %2552 = vmatmul.bf16.gmra.mxu0 %v2235
        %v2553 = vpop.f32.mrf.mxu0
        %v2554 = vadd.f32 %v2505, %v2553
        %v2555 = vpop.f32.mrf.mxu0
        %v2556 = vadd.f32 %v2507, %v2555
        %2557 = vmatmul.bf16.gmra.mxu0 %v2241
        %v2558 = vpop.f32.mrf.mxu0
        %v2559 = vadd.f32 %v2510, %v2558
        %v2560 = vpop.f32.mrf.mxu0
        %v2561 = vadd.f32 %v2512, %v2560
        %2562 = vmatmul.bf16.gmra.mxu0 %v2247
        %v2563 = vpop.f32.mrf.mxu0
        %v2564 = vadd.f32 %v2515, %v2563
        %v2565 = vpop.f32.mrf.mxu0
        %v2566 = vadd.f32 %v2517, %v2565
        %2567 = vmatmul.bf16.gmra.mxu0 %v2253
        %v2568 = vpop.f32.mrf.mxu0
        %v2569 = vadd.f32 %v2520, %v2568
        %v2570 = vpop.f32.mrf.mxu0
        %v2571 = vadd.f32 %v2522, %v2570
        %2572 = vmatmul.bf16.gmra.mxu0 %v2259
        %v2573 = vpop.f32.mrf.mxu0
        %v2574 = vadd.f32 %v2525, %v2573
        %v2575 = vpop.f32.mrf.mxu0
        %v2576 = vadd.f32 %v2527, %v2575
        %2577 = vmatmul.bf16.gmra.mxu0 %v2265
        %v2578 = vpop.f32.mrf.mxu0
        %v2579 = vadd.f32 %v2530, %v2578
        %v2580 = vpop.f32.mrf.mxu0
        %v2581 = vadd.f32 %v2532, %v2580
        %2582 = vmatmul.bf16.gmra.mxu0 %v2271
        %v2583 = vpop.f32.mrf.mxu0
        %v2584 = vadd.f32 %v2535, %v2583
        %v2585 = vpop.f32.mrf.mxu0
        %v2586 = vadd.f32 %v2537, %v2585
        %2587 = vmatmul.bf16.gmra.mxu0 %v2277
        %v2588 = vpop.f32.mrf.mxu0
        %v2589 = vadd.f32 %v2540, %v2588
        %v2590 = vpop.f32.mrf.mxu0
        %v2591 = vadd.f32 %v2542, %v2590
        %2592 = vdwg.mxu0
        %v2593 = vmax.f32 %v2554, 0.0
        %v2594 = vmax.f32 %v2556, 0.0
        %v2595 = vmax.f32 %v2559, 0.0
        %v2596 = vmax.f32 %v2561, 0.0
        %v2597 = vmax.f32 %v2564, 0.0
        %v2598 = vmax.f32 %v2566, 0.0
        %v2599 = vmax.f32 %v2569, 0.0
        %v2600 = vmax.f32 %v2571, 0.0
        %v2601 = vmax.f32 %v2574, 0.0
        %v2602 = vmax.f32 %v2576, 0.0
        %v2603 = vmax.f32 %v2579, 0.0
        %v2604 = vmax.f32 %v2581, 0.0
        %v2605 = vmax.f32 %v2584, 0.0
        %v2606 = vmax.f32 %v2586, 0.0
        %v2607 = vmax.f32 %v2589, 0.0
        %v2608 = vmax.f32 %v2591, 0.0
        %v2609 = vpack.c.bf16 %v2593, %v2593
        %v2610 = vpack.c.bf16 %v2594, %v2594
        %v2611 = vpack.c.bf16 %v2595, %v2595
        %v2612 = vpack.c.bf16 %v2596, %v2596
        %v2613 = vpack.c.bf16 %v2597, %v2597
        %v2614 = vpack.c.bf16 %v2598, %v2598
        %v2615 = vpack.c.bf16 %v2599, %v2599
        %v2616 = vpack.c.bf16 %v2600, %v2600
        %v2617 = vpack.c.bf16 %v2601, %v2601
        %v2618 = vpack.c.bf16 %v2602, %v2602
        %v2619 = vpack.c.bf16 %v2603, %v2603
        %v2620 = vpack.c.bf16 %v2604, %v2604
        %v2621 = vpack.c.bf16 %v2605, %v2605
        %v2622 = vpack.c.bf16 %v2606, %v2606
        %v2623 = vpack.c.bf16 %v2607, %v2607
        %v2624 = vpack.c.bf16 %v2608, %v2608
        %2625 = vst [vmem:[#allocation3 + $0x4] sm:$0xf] %v2609
        %2626 = vst [vmem:[#allocation3 + $0x8] sm:$0xf] %v2610
        %2627 = vst [vmem:[#allocation3 + $0xc] sm:$0xf] %v2611
        %2628 = vst [vmem:[#allocation3 + $0x10] sm:$0xf] %v2612
        %2629 = vst [vmem:[#allocation3 + $0x14] sm:$0xf] %v2613
        %2630 = vst [vmem:[#allocation3 + $0x18] sm:$0xf] %v2614
        %2631 = vst [vmem:[#allocation3 + $0x1c] sm:$0xf] %v2615
        %2632 = vst [vmem:[#allocation3 + $0x20] sm:$0xf] %v2616
        %2633 = vst [vmem:[#allocation3 + $0x24] sm:$0xf] %v2617
        %2634 = vst [vmem:[#allocation3 + $0x28] sm:$0xf] %v2618
        %2635 = vst [vmem:[#allocation3 + $0x2c] sm:$0xf] %v2619
        %2636 = vst [vmem:[#allocation3 + $0x30] sm:$0xf] %v2620
        %2637 = vst [vmem:[#allocation3 + $0x34] sm:$0xf] %v2621
        %2638 = vst [vmem:[#allocation3 + $0x38] sm:$0xf] %v2622
        %2639 = vst [vmem:[#allocation3 + $0x3c] sm:$0xf] %v2623
        %2640 = vst [vmem:[#allocation3 + $0x40] sm:$0xf] %v2624
        %v2641 = vld [vmem:[#allocation3] sm:$0xc]
        %v2642 = vld [vmem:[#allocation3 + $0x4] sm:$0xf]
        %v2643 = vld [vmem:[#allocation3 + $0x8] sm:$0xf]
        %v2644 = vld [vmem:[#allocation3 + $0xc] sm:$0xf]
        %v2645 = vld [vmem:[#allocation3 + $0x10] sm:$0xf]
        %v2646 = vld [vmem:[#allocation3 + $0x14] sm:$0xf]
        %v2647 = vld [vmem:[#allocation3 + $0x18] sm:$0xf]
        %v2648 = vld [vmem:[#allocation3 + $0x1c] sm:$0xf]
        %v2649 = vld [vmem:[#allocation3 + $0x20] sm:$0xf]
        %v2650 = vld [vmem:[#allocation3 + $0x24] sm:$0xf]
        %v2651 = vld [vmem:[#allocation3 + $0x28] sm:$0xf]
        %v2652 = vld [vmem:[#allocation3 + $0x2c] sm:$0xf]
        %v2653 = vld [vmem:[#allocation3 + $0x30] sm:$0xf]
        %v2654 = vld [vmem:[#allocation3 + $0x34] sm:$0xf]
        %v2655 = vld [vmem:[#allocation3 + $0x38] sm:$0xf]
        %v2656 = vld [vmem:[#allocation3 + $0x3c] sm:$0xf]
        %v2657 = vld [vmem:[#allocation3 + $0x40] sm:$0x3]
        %v2658 = vld [vmem:[#allocation3] sm:$0x8]
        %v2659 = vld [vmem:[#allocation3 + $0x40] sm:$0x7]
        %v2660 = vld [vmem:[#allocation3 + $0x40] sm:$0xf]
        %v2678 = vunpack.c.l.b16 %v2641
        %v2679 = vunpack.c.l.b16 %v2642
        %v2680 = vunpack.c.l.b16 %v2643
        %v2681 = vunpack.c.l.b16 %v2644
        %v2682 = vunpack.c.l.b16 %v2645
        %v2683 = vunpack.c.l.b16 %v2646
        %v2684 = vunpack.c.l.b16 %v2647
        %v2685 = vunpack.c.l.b16 %v2648
        %v2686 = vunpack.c.l.b16 %v2649
        %v2687 = vunpack.c.l.b16 %v2650
        %v2688 = vunpack.c.l.b16 %v2651
        %v2689 = vunpack.c.l.b16 %v2652
        %v2690 = vunpack.c.l.b16 %v2653
        %v2691 = vunpack.c.l.b16 %v2654
        %v2692 = vunpack.c.l.b16 %v2655
        %v2693 = vunpack.c.l.b16 %v2656
        %v2694 = vunpack.c.l.b16 %v2657
        %v2695 = vpack.c.b16 %v2679, %v2678
        %v2696 = vpack.c.b16 %v2681, %v2680
        %v2697 = vpack.c.b16 %v2683, %v2682
        %v2698 = vpack.c.b16 %v2685, %v2684
        %v2699 = vpack.c.b16 %v2687, %v2686
        %v2700 = vpack.c.b16 %v2689, %v2688
        %v2701 = vpack.c.b16 %v2691, %v2690
        %v2702 = vpack.c.b16 %v2693, %v2692
        %v2703 = vpack.c.b16 %v2694, %v2694
        %v2706 = vunpack.c.l.b16 %v2658
        %v2707 = vunpack.c.l.b16 %v2659
        %v2708 = vpack.c.b16 %v2679, %v2706
        %v2709 = vpack.c.b16 %v2707, %v2707
        %v2710 = vrot.slane %v2708, 1
        %v2711 = vrot.slane %v2696, 1
        %v2712 = vsel %vm2130, %v2710, %v2711
        %v2713 = vrot.slane %v2697, 1
        %v2714 = vsel %vm2130, %v2711, %v2713
        %v2715 = vrot.slane %v2698, 1
        %v2716 = vsel %vm2130, %v2713, %v2715
        %v2717 = vrot.slane %v2699, 1
        %v2718 = vsel %vm2130, %v2715, %v2717
        %v2719 = vrot.slane %v2700, 1
        %v2720 = vsel %vm2130, %v2717, %v2719
        %v2721 = vrot.slane %v2701, 1
        %v2722 = vsel %vm2130, %v2719, %v2721
        %v2723 = vrot.slane %v2702, 1
        %v2724 = vsel %vm2130, %v2721, %v2723
        %v2725 = vrot.slane %v2709, 1
        %v2726 = vsel %vm2130, %v2723, %v2725
        %v2728 = vunpack.c.l.b16 %v2660
        %v2729 = vpack.c.b16 %v2680, %v2679
        %v2730 = vpack.c.b16 %v2682, %v2681
        %v2731 = vpack.c.b16 %v2684, %v2683
        %v2732 = vpack.c.b16 %v2686, %v2685
        %v2733 = vpack.c.b16 %v2688, %v2687
        %v2734 = vpack.c.b16 %v2690, %v2689
        %v2735 = vpack.c.b16 %v2692, %v2691
        %v2736 = vpack.c.b16 %v2728, %v2693
        %v2737 = vrot.slane %v2729, 6
        %v2738 = vrot.slane %v2730, 6
        %v2739 = vsel %vm2158, %v2737, %v2738
        %v2740 = vrot.slane %v2731, 6
        %v2741 = vsel %vm2158, %v2738, %v2740
        %v2742 = vrot.slane %v2732, 6
        %v2743 = vsel %vm2158, %v2740, %v2742
        %v2744 = vrot.slane %v2733, 6
        %v2745 = vsel %vm2158, %v2742, %v2744
        %v2746 = vrot.slane %v2734, 6
        %v2747 = vsel %vm2158, %v2744, %v2746
        %v2748 = vrot.slane %v2735, 6
        %v2749 = vsel %vm2158, %v2746, %v2748
        %v2750 = vrot.slane %v2736, 6
        %v2751 = vsel %vm2158, %v2748, %v2750
        %v2752 = vld [vmem:[#allocation12] sm:$0xf]
        %v2753 = vld [vmem:[#allocation12 + $0x4] sm:$0xf]
        %v2754 = vld [vmem:[#allocation12 + $0x8] sm:$0xf]
        %v2755 = vld [vmem:[#allocation12 + $0xc] sm:$0xf]
        %v2756 = vld [vmem:[#allocation12 + $0x10] sm:$0xf]
        %v2757 = vld [vmem:[#allocation12 + $0x14] sm:$0xf]
        %v2758 = vld [vmem:[#allocation12 + $0x18] sm:$0xf]
        %v2759 = vld [vmem:[#allocation12 + $0x1c] sm:$0xf]
        %v2760 = vld [vmem:[#allocation12 + $0x20] sm:$0xf]
        %v2761 = vld [vmem:[#allocation12 + $0x24] sm:$0xf]
        %v2762 = vld [vmem:[#allocation12 + $0x28] sm:$0xf]
        %v2763 = vld [vmem:[#allocation12 + $0x2c] sm:$0xf]
        %v2764 = vld [vmem:[#allocation12 + $0x30] sm:$0xf]
        %v2765 = vld [vmem:[#allocation12 + $0x34] sm:$0xf]
        %v2766 = vld [vmem:[#allocation12 + $0x38] sm:$0xf]
        %v2767 = vld [vmem:[#allocation12 + $0x3c] sm:$0xf]
        %v2768 = vld [vmem:[#allocation12 + $0x40] sm:$0xf]
        %v2769 = vld [vmem:[#allocation12 + $0x44] sm:$0xf]
        %v2770 = vld [vmem:[#allocation12 + $0x48] sm:$0xf]
        %v2771 = vld [vmem:[#allocation12 + $0x4c] sm:$0xf]
        %v2772 = vld [vmem:[#allocation12 + $0x50] sm:$0xf]
        %v2773 = vld [vmem:[#allocation12 + $0x54] sm:$0xf]
        %v2774 = vld [vmem:[#allocation12 + $0x58] sm:$0xf]
        %v2775 = vld [vmem:[#allocation12 + $0x5c] sm:$0xf]
        %v2776 = vld [vmem:[#allocation12 + $0x60] sm:$0xf]
        %v2777 = vld [vmem:[#allocation12 + $0x64] sm:$0xf]
        %v2778 = vld [vmem:[#allocation12 + $0x68] sm:$0xf]
        %v2779 = vld [vmem:[#allocation12 + $0x6c] sm:$0xf]
        %v2780 = vld [vmem:[#allocation12 + $0x70] sm:$0xf]
        %v2781 = vld [vmem:[#allocation12 + $0x74] sm:$0xf]
        %v2782 = vld [vmem:[#allocation12 + $0x78] sm:$0xf]
        %v2783 = vld [vmem:[#allocation12 + $0x7c] sm:$0xf]
        %v2784 = vld [vmem:[#allocation12 + $0x80] sm:$0xf]
        %v2785 = vld [vmem:[#allocation12 + $0x84] sm:$0xf]
        %v2786 = vld [vmem:[#allocation12 + $0x88] sm:$0xf]
        %v2787 = vld [vmem:[#allocation12 + $0x8c] sm:$0xf]
        %v2788 = vld [vmem:[#allocation12 + $0x90] sm:$0xf]
        %v2789 = vld [vmem:[#allocation12 + $0x94] sm:$0xf]
        %v2790 = vld [vmem:[#allocation12 + $0x98] sm:$0xf]
        %v2791 = vld [vmem:[#allocation12 + $0x9c] sm:$0xf]
        %v2792 = vld [vmem:[#allocation12 + $0xa0] sm:$0xf]
        %v2793 = vld [vmem:[#allocation12 + $0xa4] sm:$0xf]
        %v2794 = vld [vmem:[#allocation12 + $0xa8] sm:$0xf]
        %v2795 = vld [vmem:[#allocation12 + $0xac] sm:$0xf]
        %v2796 = vld [vmem:[#allocation12 + $0xb0] sm:$0xf]
        %v2797 = vld [vmem:[#allocation12 + $0xb4] sm:$0xf]
        %v2798 = vld [vmem:[#allocation12 + $0xb8] sm:$0xf]
        %v2799 = vld [vmem:[#allocation12 + $0xbc] sm:$0xf]
        %v2800 = vld [vmem:[%s10] sm:$0x1]
        %v2802 = vperm.slane %v2800, 0
        %v2804 = vrot.slane %v2695, 2
        %v2805 = vrot.slane %v2696, 2
        %v2806 = vsel %vm2226, %v2804, %v2805
        %v2807 = vrot.slane %v2712, 2
        %v2808 = vrot.slane %v2714, 2
        %v2809 = vsel %vm2226, %v2807, %v2808
        %v2810 = vrot.slane %v2737, 2
        %v2811 = vrot.slane %v2739, 2
        %v2812 = vsel %vm2226, %v2810, %v2811
        %v2813 = vrot.slane %v2697, 2
        %v2814 = vsel %vm2226, %v2805, %v2813
        %v2815 = vrot.slane %v2716, 2
        %v2816 = vsel %vm2226, %v2808, %v2815
        %v2817 = vrot.slane %v2741, 2
        %v2818 = vsel %vm2226, %v2811, %v2817
        %v2819 = vrot.slane %v2698, 2
        %v2820 = vsel %vm2226, %v2813, %v2819
        %v2821 = vrot.slane %v2718, 2
        %v2822 = vsel %vm2226, %v2815, %v2821
        %v2823 = vrot.slane %v2743, 2
        %v2824 = vsel %vm2226, %v2817, %v2823
        %v2825 = vrot.slane %v2699, 2
        %v2826 = vsel %vm2226, %v2819, %v2825
        %v2827 = vrot.slane %v2720, 2
        %v2828 = vsel %vm2226, %v2821, %v2827
        %v2829 = vrot.slane %v2745, 2
        %v2830 = vsel %vm2226, %v2823, %v2829
        %v2831 = vrot.slane %v2700, 2
        %v2832 = vsel %vm2226, %v2825, %v2831
        %v2833 = vrot.slane %v2722, 2
        %v2834 = vsel %vm2226, %v2827, %v2833
        %v2835 = vrot.slane %v2747, 2
        %v2836 = vsel %vm2226, %v2829, %v2835
        %v2837 = vrot.slane %v2701, 2
        %v2838 = vsel %vm2226, %v2831, %v2837
        %v2839 = vrot.slane %v2724, 2
        %v2840 = vsel %vm2226, %v2833, %v2839
        %v2841 = vrot.slane %v2749, 2
        %v2842 = vsel %vm2226, %v2835, %v2841
        %v2843 = vrot.slane %v2702, 2
        %v2844 = vsel %vm2226, %v2837, %v2843
        %v2845 = vrot.slane %v2726, 2
        %v2846 = vsel %vm2226, %v2839, %v2845
        %v2847 = vrot.slane %v2751, 2
        %v2848 = vsel %vm2226, %v2841, %v2847
        %v2849 = vrot.slane %v2703, 2
        %v2850 = vsel %vm2226, %v2843, %v2849
        %v2851 = vrot.slane %v2725, 2
        %v2852 = vsel %vm2226, %v2845, %v2851
        %v2853 = vrot.slane %v2750, 2
        %v2854 = vsel %vm2226, %v2847, %v2853
        %v2927 = vunpack.c.l.b16 %v2752
        %v2928 = vunpack.c.l.b16 %v2753
        %v2929 = vunpack.c.l.b16 %v2754
        %v2930 = vunpack.c.l.b16 %v2755
        %v2931 = vunpack.c.l.b16 %v2756
        %v2932 = vunpack.c.l.b16 %v2757
        %v2933 = vunpack.c.l.b16 %v2758
        %v2934 = vunpack.c.l.b16 %v2759
        %v2935 = vunpack.c.l.b16 %v2760
        %v2936 = vunpack.c.l.b16 %v2761
        %v2937 = vunpack.c.l.b16 %v2762
        %v2938 = vunpack.c.l.b16 %v2763
        %v2939 = vunpack.c.l.b16 %v2764
        %v2940 = vunpack.c.l.b16 %v2765
        %v2941 = vunpack.c.l.b16 %v2766
        %v2942 = vunpack.c.l.b16 %v2767
        %v2943 = vunpack.c.l.b16 %v2768
        %v2944 = vunpack.c.l.b16 %v2769
        %v2945 = vunpack.c.l.b16 %v2770
        %v2946 = vunpack.c.l.b16 %v2771
        %v2947 = vunpack.c.l.b16 %v2772
        %v2948 = vunpack.c.l.b16 %v2773
        %v2949 = vunpack.c.l.b16 %v2774
        %v2950 = vunpack.c.l.b16 %v2775
        %v2951 = vunpack.c.l.b16 %v2776
        %v2952 = vunpack.c.l.b16 %v2777
        %v2953 = vunpack.c.l.b16 %v2778
        %v2954 = vunpack.c.l.b16 %v2779
        %v2955 = vunpack.c.l.b16 %v2780
        %v2956 = vunpack.c.l.b16 %v2781
        %v2957 = vunpack.c.l.b16 %v2782
        %v2958 = vunpack.c.l.b16 %v2783
        %v2959 = vunpack.c.l.b16 %v2784
        %v2960 = vunpack.c.l.b16 %v2785
        %v2961 = vunpack.c.l.b16 %v2786
        %v2962 = vunpack.c.l.b16 %v2787
        %v2963 = vunpack.c.l.b16 %v2788
        %v2964 = vunpack.c.l.b16 %v2789
        %v2965 = vunpack.c.l.b16 %v2790
        %v2966 = vunpack.c.l.b16 %v2791
        %v2967 = vunpack.c.l.b16 %v2792
        %v2968 = vunpack.c.l.b16 %v2793
        %v2969 = vunpack.c.l.b16 %v2794
        %v2970 = vunpack.c.l.b16 %v2795
        %v2971 = vunpack.c.l.b16 %v2796
        %v2972 = vunpack.c.l.b16 %v2797
        %v2973 = vunpack.c.l.b16 %v2798
        %v2974 = vunpack.c.l.b16 %v2799
        %v2975 = vpack.c.b16 %v2928, %v2927
        %v2976 = vpack.c.b16 %v2930, %v2929
        %v2977 = vpack.c.b16 %v2932, %v2931
        %v2978 = vpack.c.b16 %v2934, %v2933
        %v2979 = vpack.c.b16 %v2936, %v2935
        %v2980 = vpack.c.b16 %v2938, %v2937
        %v2981 = vpack.c.b16 %v2940, %v2939
        %v2982 = vpack.c.b16 %v2942, %v2941
        %v2983 = vpack.c.b16 %v2944, %v2943
        %v2984 = vpack.c.b16 %v2946, %v2945
        %v2985 = vpack.c.b16 %v2948, %v2947
        %v2986 = vpack.c.b16 %v2950, %v2949
        %v2987 = vpack.c.b16 %v2952, %v2951
        %v2988 = vpack.c.b16 %v2954, %v2953
        %v2989 = vpack.c.b16 %v2956, %v2955
        %v2990 = vpack.c.b16 %v2958, %v2957
        %v2991 = vpack.c.b16 %v2960, %v2959
        %v2992 = vpack.c.b16 %v2962, %v2961
        %v2993 = vpack.c.b16 %v2964, %v2963
        %v2994 = vpack.c.b16 %v2966, %v2965
        %v2995 = vpack.c.b16 %v2968, %v2967
        %v2996 = vpack.c.b16 %v2970, %v2969
        %v2997 = vpack.c.b16 %v2972, %v2971
        %v2998 = vpack.c.b16 %v2974, %v2973
        %3023 = vmatpush.bf16.msra.mxu0 %v2982
        %3024 = vmatpush.bf16.msra.mxu0 %v2981
        %3025 = vmatpush.bf16.msra.mxu0 %v2980
        %3026 = vmatpush.bf16.msra.mxu0 %v2979
        %3027 = vmatpush.bf16.msra.mxu0 %v2978
        %3028 = vmatpush.bf16.msra.mxu0 %v2977
        %3029 = vmatpush.bf16.msra.mxu0 %v2976
        %3030 = vmatpush.bf16.msra.mxu0 %v2975
        %3031 = vmatmul.bf16.gmra.mxu0 %v2806
        %v3032 = vpop.f32.mrf.mxu0
        %v3033 = vadd.f32 %v2802, %v3032
        %v3034 = vpop.f32.mrf.mxu0
        %v3035 = vadd.f32 %v2802, %v3034
        %3036 = vmatmul.bf16.gmra.mxu0 %v2814
        %v3037 = vpop.f32.mrf.mxu0
        %v3038 = vadd.f32 %v2802, %v3037
        %v3039 = vpop.f32.mrf.mxu0
        %v3040 = vadd.f32 %v2802, %v3039
        %3041 = vmatmul.bf16.gmra.mxu0 %v2820
        %v3042 = vpop.f32.mrf.mxu0
        %v3043 = vadd.f32 %v2802, %v3042
        %v3044 = vpop.f32.mrf.mxu0
        %v3045 = vadd.f32 %v2802, %v3044
        %3046 = vmatmul.bf16.gmra.mxu0 %v2826
        %v3047 = vpop.f32.mrf.mxu0
        %v3048 = vadd.f32 %v2802, %v3047
        %v3049 = vpop.f32.mrf.mxu0
        %v3050 = vadd.f32 %v2802, %v3049
        %3051 = vmatmul.bf16.gmra.mxu0 %v2832
        %v3052 = vpop.f32.mrf.mxu0
        %v3053 = vadd.f32 %v2802, %v3052
        %v3054 = vpop.f32.mrf.mxu0
        %v3055 = vadd.f32 %v2802, %v3054
        %3056 = vmatmul.bf16.gmra.mxu0 %v2838
        %v3057 = vpop.f32.mrf.mxu0
        %v3058 = vadd.f32 %v2802, %v3057
        %v3059 = vpop.f32.mrf.mxu0
        %v3060 = vadd.f32 %v2802, %v3059
        %3061 = vmatmul.bf16.gmra.mxu0 %v2844
        %v3062 = vpop.f32.mrf.mxu0
        %v3063 = vadd.f32 %v2802, %v3062
        %v3064 = vpop.f32.mrf.mxu0
        %v3065 = vadd.f32 %v2802, %v3064
        %3066 = vmatmul.bf16.gmra.mxu0 %v2850
        %v3067 = vpop.f32.mrf.mxu0
        %v3068 = vadd.f32 %v2802, %v3067
        %v3069 = vpop.f32.mrf.mxu0
        %v3070 = vadd.f32 %v2802, %v3069
        %3071 = vdwg.mxu0
        %3072 = vmatpush.bf16.msra.mxu0 %v2990
        %3073 = vmatpush.bf16.msra.mxu0 %v2989
        %3074 = vmatpush.bf16.msra.mxu0 %v2988
        %3075 = vmatpush.bf16.msra.mxu0 %v2987
        %3076 = vmatpush.bf16.msra.mxu0 %v2986
        %3077 = vmatpush.bf16.msra.mxu0 %v2985
        %3078 = vmatpush.bf16.msra.mxu0 %v2984
        %3079 = vmatpush.bf16.msra.mxu0 %v2983
        %3080 = vmatmul.bf16.gmra.mxu0 %v2809
        %v3081 = vpop.f32.mrf.mxu0
        %v3082 = vadd.f32 %v3033, %v3081
        %v3083 = vpop.f32.mrf.mxu0
        %v3084 = vadd.f32 %v3035, %v3083
        %3085 = vmatmul.bf16.gmra.mxu0 %v2816
        %v3086 = vpop.f32.mrf.mxu0
        %v3087 = vadd.f32 %v3038, %v3086
        %v3088 = vpop.f32.mrf.mxu0
        %v3089 = vadd.f32 %v3040, %v3088
        %3090 = vmatmul.bf16.gmra.mxu0 %v2822
        %v3091 = vpop.f32.mrf.mxu0
        %v3092 = vadd.f32 %v3043, %v3091
        %v3093 = vpop.f32.mrf.mxu0
        %v3094 = vadd.f32 %v3045, %v3093
        %3095 = vmatmul.bf16.gmra.mxu0 %v2828
        %v3096 = vpop.f32.mrf.mxu0
        %v3097 = vadd.f32 %v3048, %v3096
        %v3098 = vpop.f32.mrf.mxu0
        %v3099 = vadd.f32 %v3050, %v3098
        %3100 = vmatmul.bf16.gmra.mxu0 %v2834
        %v3101 = vpop.f32.mrf.mxu0
        %v3102 = vadd.f32 %v3053, %v3101
        %v3103 = vpop.f32.mrf.mxu0
        %v3104 = vadd.f32 %v3055, %v3103
        %3105 = vmatmul.bf16.gmra.mxu0 %v2840
        %v3106 = vpop.f32.mrf.mxu0
        %v3107 = vadd.f32 %v3058, %v3106
        %v3108 = vpop.f32.mrf.mxu0
        %v3109 = vadd.f32 %v3060, %v3108
        %3110 = vmatmul.bf16.gmra.mxu0 %v2846
        %v3111 = vpop.f32.mrf.mxu0
        %v3112 = vadd.f32 %v3063, %v3111
        %v3113 = vpop.f32.mrf.mxu0
        %v3114 = vadd.f32 %v3065, %v3113
        %3115 = vmatmul.bf16.gmra.mxu0 %v2852
        %v3116 = vpop.f32.mrf.mxu0
        %v3117 = vadd.f32 %v3068, %v3116
        %v3118 = vpop.f32.mrf.mxu0
        %v3119 = vadd.f32 %v3070, %v3118
        %3120 = vdwg.mxu0
        %3121 = vmatpush.bf16.msra.mxu0 %v2998
        %3122 = vmatpush.bf16.msra.mxu0 %v2997
        %3123 = vmatpush.bf16.msra.mxu0 %v2996
        %3124 = vmatpush.bf16.msra.mxu0 %v2995
        %3125 = vmatpush.bf16.msra.mxu0 %v2994
        %3126 = vmatpush.bf16.msra.mxu0 %v2993
        %3127 = vmatpush.bf16.msra.mxu0 %v2992
        %3128 = vmatpush.bf16.msra.mxu0 %v2991
        %3129 = vmatmul.bf16.gmra.mxu0 %v2812
        %v3130 = vpop.f32.mrf.mxu0
        %v3131 = vadd.f32 %v3082, %v3130
        %v3132 = vpop.f32.mrf.mxu0
        %v3133 = vadd.f32 %v3084, %v3132
        %3134 = vmatmul.bf16.gmra.mxu0 %v2818
        %v3135 = vpop.f32.mrf.mxu0
        %v3136 = vadd.f32 %v3087, %v3135
        %v3137 = vpop.f32.mrf.mxu0
        %v3138 = vadd.f32 %v3089, %v3137
        %3139 = vmatmul.bf16.gmra.mxu0 %v2824
        %v3140 = vpop.f32.mrf.mxu0
        %v3141 = vadd.f32 %v3092, %v3140
        %v3142 = vpop.f32.mrf.mxu0
        %v3143 = vadd.f32 %v3094, %v3142
        %3144 = vmatmul.bf16.gmra.mxu0 %v2830
        %v3145 = vpop.f32.mrf.mxu0
        %v3146 = vadd.f32 %v3097, %v3145
        %v3147 = vpop.f32.mrf.mxu0
        %v3148 = vadd.f32 %v3099, %v3147
        %3149 = vmatmul.bf16.gmra.mxu0 %v2836
        %v3150 = vpop.f32.mrf.mxu0
        %v3151 = vadd.f32 %v3102, %v3150
        %v3152 = vpop.f32.mrf.mxu0
        %v3153 = vadd.f32 %v3104, %v3152
        %3154 = vmatmul.bf16.gmra.mxu0 %v2842
        %v3155 = vpop.f32.mrf.mxu0
        %v3156 = vadd.f32 %v3107, %v3155
        %v3157 = vpop.f32.mrf.mxu0
        %v3158 = vadd.f32 %v3109, %v3157
        %3159 = vmatmul.bf16.gmra.mxu0 %v2848
        %v3160 = vpop.f32.mrf.mxu0
        %v3161 = vadd.f32 %v3112, %v3160
        %v3162 = vpop.f32.mrf.mxu0
        %v3163 = vadd.f32 %v3114, %v3162
        %3164 = vmatmul.bf16.gmra.mxu0 %v2854
        %v3165 = vpop.f32.mrf.mxu0
        %v3166 = vadd.f32 %v3117, %v3165
        %v3167 = vpop.f32.mrf.mxu0
        %v3168 = vadd.f32 %v3119, %v3167
        %3169 = vdwg.mxu0
        %v3170 = vmax.f32 %v3131, 0.0
        %v3171 = vmax.f32 %v3133, 0.0
        %v3172 = vmax.f32 %v3136, 0.0
        %v3173 = vmax.f32 %v3138, 0.0
        %v3174 = vmax.f32 %v3141, 0.0
        %v3175 = vmax.f32 %v3143, 0.0
        %v3176 = vmax.f32 %v3146, 0.0
        %v3177 = vmax.f32 %v3148, 0.0
        %v3178 = vmax.f32 %v3151, 0.0
        %v3179 = vmax.f32 %v3153, 0.0
        %v3180 = vmax.f32 %v3156, 0.0
        %v3181 = vmax.f32 %v3158, 0.0
        %v3182 = vmax.f32 %v3161, 0.0
        %v3183 = vmax.f32 %v3163, 0.0
        %v3184 = vmax.f32 %v3166, 0.0
        %v3185 = vmax.f32 %v3168, 0.0
        %v3186 = vld [vmem:[#allocation2 + $0x4] sm:$0xf]
        %v3187 = vld [vmem:[#allocation2 + $0x8] sm:$0xf]
        %v3188 = vld [vmem:[#allocation2 + $0xc] sm:$0xf]
        %v3189 = vld [vmem:[#allocation2 + $0x10] sm:$0xf]
        %v3190 = vld [vmem:[#allocation2 + $0x14] sm:$0xf]
        %v3191 = vld [vmem:[#allocation2 + $0x18] sm:$0xf]
        %v3192 = vld [vmem:[#allocation2 + $0x1c] sm:$0xf]
        %v3193 = vld [vmem:[#allocation2 + $0x20] sm:$0xf]
        %v3194 = vld [vmem:[#allocation2 + $0x24] sm:$0xf]
        %v3195 = vld [vmem:[#allocation2 + $0x28] sm:$0xf]
        %v3196 = vld [vmem:[#allocation2 + $0x2c] sm:$0xf]
        %v3197 = vld [vmem:[#allocation2 + $0x30] sm:$0xf]
        %v3198 = vld [vmem:[#allocation2 + $0x34] sm:$0xf]
        %v3199 = vld [vmem:[#allocation2 + $0x38] sm:$0xf]
        %v3200 = vld [vmem:[#allocation2 + $0x3c] sm:$0xf]
        %v3201 = vld [vmem:[#allocation2 + $0x40] sm:$0xf]
        %v3202 = vunpack.c.l.bf16 %v3186
        %v3203 = vunpack.c.l.bf16 %v3187
        %v3204 = vunpack.c.l.bf16 %v3188
        %v3205 = vunpack.c.l.bf16 %v3189
        %v3206 = vunpack.c.l.bf16 %v3190
        %v3207 = vunpack.c.l.bf16 %v3191
        %v3208 = vunpack.c.l.bf16 %v3192
        %v3209 = vunpack.c.l.bf16 %v3193
        %v3210 = vunpack.c.l.bf16 %v3194
        %v3211 = vunpack.c.l.bf16 %v3195
        %v3212 = vunpack.c.l.bf16 %v3196
        %v3213 = vunpack.c.l.bf16 %v3197
        %v3214 = vunpack.c.l.bf16 %v3198
        %v3215 = vunpack.c.l.bf16 %v3199
        %v3216 = vunpack.c.l.bf16 %v3200
        %v3217 = vunpack.c.l.bf16 %v3201
        %v3218 = vadd.f32 %v3170, %v3202
        %v3219 = vadd.f32 %v3171, %v3203
        %v3220 = vadd.f32 %v3172, %v3204
        %v3221 = vadd.f32 %v3173, %v3205
        %v3222 = vadd.f32 %v3174, %v3206
        %v3223 = vadd.f32 %v3175, %v3207
        %v3224 = vadd.f32 %v3176, %v3208
        %v3225 = vadd.f32 %v3177, %v3209
        %v3226 = vadd.f32 %v3178, %v3210
        %v3227 = vadd.f32 %v3179, %v3211
        %v3228 = vadd.f32 %v3180, %v3212
        %v3229 = vadd.f32 %v3181, %v3213
        %v3230 = vadd.f32 %v3182, %v3214
        %v3231 = vadd.f32 %v3183, %v3215
        %v3232 = vadd.f32 %v3184, %v3216
        %v3233 = vadd.f32 %v3185, %v3217
        %v3234 = vmax.f32 %v3218, 0.0
        %v3235 = vmax.f32 %v3219, 0.0
        %v3236 = vmax.f32 %v3220, 0.0
        %v3237 = vmax.f32 %v3221, 0.0
        %v3238 = vmax.f32 %v3222, 0.0
        %v3239 = vmax.f32 %v3223, 0.0
        %v3240 = vmax.f32 %v3224, 0.0
        %v3241 = vmax.f32 %v3225, 0.0
        %v3242 = vmax.f32 %v3226, 0.0
        %v3243 = vmax.f32 %v3227, 0.0
        %v3244 = vmax.f32 %v3228, 0.0
        %v3245 = vmax.f32 %v3229, 0.0
        %v3246 = vmax.f32 %v3230, 0.0
        %v3247 = vmax.f32 %v3231, 0.0
        %v3248 = vmax.f32 %v3232, 0.0
        %v3249 = vmax.f32 %v3233, 0.0
        %v3250 = vpack.c.bf16 %v3234, %v3234
        %v3251 = vpack.c.bf16 %v3235, %v3235
        %v3252 = vpack.c.bf16 %v3236, %v3236
        %v3253 = vpack.c.bf16 %v3237, %v3237
        %v3254 = vpack.c.bf16 %v3238, %v3238
        %v3255 = vpack.c.bf16 %v3239, %v3239
        %v3256 = vpack.c.bf16 %v3240, %v3240
        %v3257 = vpack.c.bf16 %v3241, %v3241
        %v3258 = vpack.c.bf16 %v3242, %v3242
        %v3259 = vpack.c.bf16 %v3243, %v3243
        %v3260 = vpack.c.bf16 %v3244, %v3244
        %v3261 = vpack.c.bf16 %v3245, %v3245
        %v3262 = vpack.c.bf16 %v3246, %v3246
        %v3263 = vpack.c.bf16 %v3247, %v3247
        %v3264 = vpack.c.bf16 %v3248, %v3248
        %v3265 = vpack.c.bf16 %v3249, %v3249
        %3266 = vst [vmem:[#allocation2 + $0x4] sm:$0xf] %v3250
        %3267 = vst [vmem:[#allocation2 + $0x8] sm:$0xf] %v3251
        %3268 = vst [vmem:[#allocation2 + $0xc] sm:$0xf] %v3252
        %3269 = vst [vmem:[#allocation2 + $0x10] sm:$0xf] %v3253
        %3270 = vst [vmem:[#allocation2 + $0x14] sm:$0xf] %v3254
        %3271 = vst [vmem:[#allocation2 + $0x18] sm:$0xf] %v3255
        %3272 = vst [vmem:[#allocation2 + $0x1c] sm:$0xf] %v3256
        %3273 = vst [vmem:[#allocation2 + $0x20] sm:$0xf] %v3257
        %3274 = vst [vmem:[#allocation2 + $0x24] sm:$0xf] %v3258
        %3275 = vst [vmem:[#allocation2 + $0x28] sm:$0xf] %v3259
        %3276 = vst [vmem:[#allocation2 + $0x2c] sm:$0xf] %v3260
        %3277 = vst [vmem:[#allocation2 + $0x30] sm:$0xf] %v3261
        %3278 = vst [vmem:[#allocation2 + $0x34] sm:$0xf] %v3262
        %3279 = vst [vmem:[#allocation2 + $0x38] sm:$0xf] %v3263
        %3280 = vst [vmem:[#allocation2 + $0x3c] sm:$0xf] %v3264
        %3281 = vst [vmem:[#allocation2 + $0x40] sm:$0xf] %v3265
        %v3282 = vld [vmem:[#allocation2 + $0x4] sm:$0xf]
        %v3283 = vld [vmem:[#allocation2 + $0x8] sm:$0xf]
        %v3284 = vld [vmem:[#allocation2 + $0xc] sm:$0xf]
        %v3285 = vld [vmem:[#allocation2 + $0x10] sm:$0xf]
        %v3286 = vld [vmem:[#allocation2 + $0x14] sm:$0xf]
        %v3287 = vld [vmem:[#allocation2 + $0x18] sm:$0xf]
        %v3288 = vld [vmem:[#allocation2 + $0x1c] sm:$0xf]
        %v3289 = vld [vmem:[#allocation2 + $0x20] sm:$0xf]
        %v3290 = vld [vmem:[#allocation2 + $0x24] sm:$0xf]
        %v3291 = vld [vmem:[#allocation2 + $0x28] sm:$0xf]
        %v3292 = vld [vmem:[#allocation2 + $0x2c] sm:$0xf]
        %v3293 = vld [vmem:[#allocation2 + $0x30] sm:$0xf]
        %v3294 = vld [vmem:[#allocation2 + $0x34] sm:$0xf]
        %v3295 = vld [vmem:[#allocation2 + $0x38] sm:$0xf]
        %v3296 = vld [vmem:[#allocation2 + $0x3c] sm:$0xf]
        %v3297 = vld [vmem:[#allocation2 + $0x40] sm:$0xf]
        %v3298 = vld [vmem:[#allocation14] sm:$0xf]
        %v3299 = vld [vmem:[#allocation14 + $0x4] sm:$0xf]
        %v3300 = vld [vmem:[#allocation14 + $0x8] sm:$0xf]
        %v3301 = vld [vmem:[#allocation14 + $0xc] sm:$0xf]
        %v3302 = vld [vmem:[#allocation14 + $0x10] sm:$0xf]
        %v3303 = vld [vmem:[#allocation14 + $0x14] sm:$0xf]
        %v3304 = vld [vmem:[#allocation14 + $0x18] sm:$0xf]
        %v3305 = vld [vmem:[#allocation14 + $0x1c] sm:$0xf]
        %v3306 = vld [vmem:[#allocation14 + $0x20] sm:$0xf]
        %v3307 = vld [vmem:[#allocation14 + $0x24] sm:$0xf]
        %v3308 = vld [vmem:[#allocation14 + $0x28] sm:$0xf]
        %v3309 = vld [vmem:[#allocation14 + $0x2c] sm:$0xf]
        %v3310 = vld [vmem:[#allocation14 + $0x30] sm:$0xf]
        %v3311 = vld [vmem:[#allocation14 + $0x34] sm:$0xf]
        %v3312 = vld [vmem:[#allocation14 + $0x38] sm:$0xf]
        %v3313 = vld [vmem:[#allocation14 + $0x3c] sm:$0xf]
        %v3314 = vld [vmem:[%s12] sm:$0x1]
        %v3316 = vperm.slane %v3314, 0
        %v3334 = vunpack.c.l.b16 %v3282
        %v3335 = vunpack.c.l.b16 %v3283
        %v3336 = vunpack.c.l.b16 %v3284
        %v3337 = vunpack.c.l.b16 %v3285
        %v3338 = vunpack.c.l.b16 %v3286
        %v3339 = vunpack.c.l.b16 %v3287
        %v3340 = vunpack.c.l.b16 %v3288
        %v3341 = vunpack.c.l.b16 %v3289
        %v3342 = vunpack.c.l.b16 %v3290
        %v3343 = vunpack.c.l.b16 %v3291
        %v3344 = vunpack.c.l.b16 %v3292
        %v3345 = vunpack.c.l.b16 %v3293
        %v3346 = vunpack.c.l.b16 %v3294
        %v3347 = vunpack.c.l.b16 %v3295
        %v3348 = vunpack.c.l.b16 %v3296
        %v3349 = vunpack.c.l.b16 %v3297
        %v3350 = vpack.c.b16 %v3335, %v3334
        %v3351 = vpack.c.b16 %v3337, %v3336
        %v3352 = vpack.c.b16 %v3339, %v3338
        %v3353 = vpack.c.b16 %v3341, %v3340
        %v3354 = vpack.c.b16 %v3343, %v3342
        %v3355 = vpack.c.b16 %v3345, %v3344
        %v3356 = vpack.c.b16 %v3347, %v3346
        %v3357 = vpack.c.b16 %v3349, %v3348
        %v3382 = vunpack.c.l.b16 %v3298
        %v3383 = vunpack.c.l.b16 %v3299
        %v3384 = vunpack.c.l.b16 %v3300
        %v3385 = vunpack.c.l.b16 %v3301
        %v3386 = vunpack.c.l.b16 %v3302
        %v3387 = vunpack.c.l.b16 %v3303
        %v3388 = vunpack.c.l.b16 %v3304
        %v3389 = vunpack.c.l.b16 %v3305
        %v3390 = vunpack.c.l.b16 %v3306
        %v3391 = vunpack.c.l.b16 %v3307
        %v3392 = vunpack.c.l.b16 %v3308
        %v3393 = vunpack.c.l.b16 %v3309
        %v3394 = vunpack.c.l.b16 %v3310
        %v3395 = vunpack.c.l.b16 %v3311
        %v3396 = vunpack.c.l.b16 %v3312
        %v3397 = vunpack.c.l.b16 %v3313
        %v3398 = vpack.c.b16 %v3383, %v3382
        %v3399 = vpack.c.b16 %v3385, %v3384
        %v3400 = vpack.c.b16 %v3387, %v3386
        %v3401 = vpack.c.b16 %v3389, %v3388
        %v3402 = vpack.c.b16 %v3391, %v3390
        %v3403 = vpack.c.b16 %v3393, %v3392
        %v3404 = vpack.c.b16 %v3395, %v3394
        %v3405 = vpack.c.b16 %v3397, %v3396
        %3414 = vmatpush.bf16.msra.mxu0 %v3405
        %3415 = vmatpush.bf16.msra.mxu0 %v3404
        %3416 = vmatpush.bf16.msra.mxu0 %v3403
        %3417 = vmatpush.bf16.msra.mxu0 %v3402
        %3418 = vmatpush.bf16.msra.mxu0 %v3401
        %3419 = vmatpush.bf16.msra.mxu0 %v3400
        %3420 = vmatpush.bf16.msra.mxu0 %v3399
        %3421 = vmatpush.bf16.msra.mxu0 %v3398
        %3422 = vmatmul.bf16.gmra.mxu0 %v3350
        %v3423 = vpop.f32.mrf.mxu0
        %v3424 = vadd.f32 %v3316, %v3423
        %v3425 = vpop.f32.mrf.mxu0
        %v3426 = vadd.f32 %v3316, %v3425
        %3427 = vmatmul.bf16.gmra.mxu0 %v3351
        %v3428 = vpop.f32.mrf.mxu0
        %v3429 = vadd.f32 %v3316, %v3428
        %v3430 = vpop.f32.mrf.mxu0
        %v3431 = vadd.f32 %v3316, %v3430
        %3432 = vmatmul.bf16.gmra.mxu0 %v3352
        %v3433 = vpop.f32.mrf.mxu0
        %v3434 = vadd.f32 %v3316, %v3433
        %v3435 = vpop.f32.mrf.mxu0
        %v3436 = vadd.f32 %v3316, %v3435
        %3437 = vmatmul.bf16.gmra.mxu0 %v3353
        %v3438 = vpop.f32.mrf.mxu0
        %v3439 = vadd.f32 %v3316, %v3438
        %v3440 = vpop.f32.mrf.mxu0
        %v3441 = vadd.f32 %v3316, %v3440
        %3442 = vmatmul.bf16.gmra.mxu0 %v3354
        %v3443 = vpop.f32.mrf.mxu0
        %v3444 = vadd.f32 %v3316, %v3443
        %v3445 = vpop.f32.mrf.mxu0
        %v3446 = vadd.f32 %v3316, %v3445
        %3447 = vmatmul.bf16.gmra.mxu0 %v3355
        %v3448 = vpop.f32.mrf.mxu0
        %v3449 = vadd.f32 %v3316, %v3448
        %v3450 = vpop.f32.mrf.mxu0
        %v3451 = vadd.f32 %v3316, %v3450
        %3452 = vmatmul.bf16.gmra.mxu0 %v3356
        %v3453 = vpop.f32.mrf.mxu0
        %v3454 = vadd.f32 %v3316, %v3453
        %v3455 = vpop.f32.mrf.mxu0
        %v3456 = vadd.f32 %v3316, %v3455
        %3457 = vmatmul.bf16.gmra.mxu0 %v3357
        %v3458 = vpop.f32.mrf.mxu0
        %v3459 = vadd.f32 %v3316, %v3458
        %v3460 = vpop.f32.mrf.mxu0
        %v3461 = vadd.f32 %v3316, %v3460
        %3462 = vdwg.mxu0
        %vm3463 = vcmask 261120
        %3464 = vst.msk [vmem:[%s561] sm:$0xff] %vm3463, %v3424
        %3465 = vst.msk [vmem:[%s561 + $0x8] sm:$0xff] %vm3463, %v3426
        %3466 = vst.msk [vmem:[%s561 + $0x10] sm:$0xff] %vm3463, %v3429
        %3467 = vst.msk [vmem:[%s561 + $0x18] sm:$0xff] %vm3463, %v3431
        %3468 = vst.msk [vmem:[%s561 + $0x20] sm:$0xff] %vm3463, %v3434
        %3469 = vst.msk [vmem:[%s561 + $0x28] sm:$0xff] %vm3463, %v3436
        %3470 = vst.msk [vmem:[%s561 + $0x30] sm:$0xff] %vm3463, %v3439
        %3471 = vst.msk [vmem:[%s561 + $0x38] sm:$0xff] %vm3463, %v3441
        %3472 = vst.msk [vmem:[%s561 + $0x40] sm:$0xff] %vm3463, %v3444
        %3473 = vst.msk [vmem:[%s561 + $0x48] sm:$0xff] %vm3463, %v3446
        %3474 = vst.msk [vmem:[%s561 + $0x50] sm:$0xff] %vm3463, %v3449
        %3475 = vst.msk [vmem:[%s561 + $0x58] sm:$0xff] %vm3463, %v3451
        %3476 = vst.msk [vmem:[%s561 + $0x60] sm:$0xff] %vm3463, %v3454
        %3477 = vst.msk [vmem:[%s561 + $0x68] sm:$0xff] %vm3463, %v3456
        %3478 = vst.msk [vmem:[%s561 + $0x70] sm:$0xff] %vm3463, %v3459
        %3479 = vst.msk [vmem:[%s561 + $0x78] sm:$0xff] %vm3463, %v3461
        %p3480 = scmp.lt.s32.totalorder %s30, 1
        %s3481 = scalar_select %p3480, %s30, 1
        %s3482 = smul.addr %s3481, 16
        %s3483 = smul.addr %s3482, 8
        %s3484 = scalar_lea.vmem %s13, %s3483
        // Predicated region
        $region101: #{tpu_custom_call.1} parent=71 // pred_check
          %p3485 = pneg %p326
        $region102: #{tpu_custom_call.1} parent=71 // pred_check_branch
          %3487 = sbr.rel (%p3485) target = $region104
        $region103: #{tpu_custom_call.1} parent=71 // pred_region
          _
        $region104: #{tpu_custom_call.1} parent=71 // pred_fallthru
          _
      $region72: #{tpu_custom_call.1} parent=5 // pred_fallthru
        _
      %p3488 = scmp.le.s32.totalorder 2, %s25
      // Predicated region
      $region105: #{tpu_custom_call.1} parent=5 // pred_check
        %p3489 = pneg %p3488
      $region106: #{tpu_custom_call.1} parent=5 // pred_check_branch
        %3491 = sbr.rel (%p3489) target = $region108
      $region107: #{tpu_custom_call.1} parent=5 // pred_region
        %s3492 = ssub.s32 %s25, 2
        // Predicated region
        $region109: #{tpu_custom_call.1} parent=107 // pred_check
          %p3493 = pneg %p332
        $region110: #{tpu_custom_call.1} parent=107 // pred_check_branch
          %3495 = sbr.rel (%p3493) target = $region112
        $region111: #{tpu_custom_call.1} parent=107 // pred_region
          %p3496 = scmp.lt.s32.totalorder %s31, 1
          %s3497 = scalar_select %p3496, %s31, 1
          %s3498 = smul.addr %s3497, 16
          %s3499 = smul.addr %s3498, 8
          %s3500 = scalar_lea.vmem %s13, %s3499
        $region112: #{tpu_custom_call.1} parent=107 // pred_fallthru
          _
      $region108: #{tpu_custom_call.1} parent=5 // pred_fallthru
        _
    $region6: #{tpu_custom_call.1} parent=1 // loop_footer
      %s29 = sadd.s32 1, %s25
    $region7: #{tpu_custom_call.1} parent=1 // loop_footer_branch
      %24 = sbr.rel target = $region3
    $region8: #{tpu_custom_call.1} parent=1 // loop_exit
      _
    %3501 = vsyncpa [#allocation5], 1
    %s3502 = scalar_lea.sflag [#allocation5], 1
    %3503 = vsyncpa %s3502, 1
    %3504 = vsyncpa [#allocation7], 1
    %3505 = vsyncpa [#allocation10], 1
    %3506 = vsyncpa [#allocation13], 1

</llo_original>
